<compile_context>
chip_gen: v5e
topology: v5e:2x2
jax: 0.10.0
libtpu: 0.0.40
codegen_flags: <defaults>
</compile_context>

<pallas_src>
import jax
import jax.numpy as jnp
from jax.experimental import pallas as pl
from jax.experimental.pallas import tpu as pltpu

_BN_EPS = 1e-5


# ----------------------------------------------------------------------------
# small static tiling helpers
# ----------------------------------------------------------------------------
def _row_tile(rows, cap=512):
    """Largest multiple-of-8 divisor of `rows` (<= cap) that leaves >= 2 grid
    steps (pipelining / megacore); falls back to one full-size block."""
    best = None
    t = 8
    limit = min(rows // 2, cap)
    while t <= limit:
        if rows % t == 0:
            best = t
        t += 8
    return best if best is not None else rows


def _fold_factor(rows, width, target_lanes=256):
    """Fold `f` consecutive rows into the lane dim so f*width approaches
    128-256 lanes (lane-dense loads/stores); f must divide rows."""
    f = 1
    for cand in (2, 4, 8, 16):
        if rows % cand == 0 and cand * width <= target_lanes:
            f = cand
    return f


def _conv_row_tile(ho):
    """Output-row strip height for the 3x3 conv kernel (>= 2 strips if possible)."""
    for t in (64, 32, 16, 8):
        if ho % t == 0 and ho // t >= 2:
            return t
    return ho


# ----------------------------------------------------------------------------
# Pallas kernels
# ----------------------------------------------------------------------------
def _deconv_mm_kernel(x_ref, w_ref, b_ref, y_ref, s_ref):
    """Fused k=2/s=2 ConvTranspose for BOTH branches (res + up1) as one matmul.

    x_ref: (tm, Cin)        flattened input pixels
    w_ref: (Cin, 8*Cout)    columns ordered (i, j, branch, c)
    b_ref: (1, 8*Cout)
    y_ref: (tm, 8*Cout)     raw deconv outputs (pre-BN)
    s_ref: (1, 2, 8*Cout)   per-tile [col-sum, col-sum-of-squares]  (BN phase 1)
    """
    y = (jnp.dot(x_ref[...], w_ref[...], preferred_element_type=jnp.float32)
         + b_ref[...])
    y_ref[...] = y
    s0 = jnp.sum(y, axis=0, keepdims=True)
    s1 = jnp.sum(y * y, axis=0, keepdims=True)
    s_ref[0] = jnp.concatenate([s0, s1], axis=0)


def _affine_elu_mask_kernel(x_ref, sc_ref, sh_ref, mk_ref, o_ref):
    """a = x*scale + shift; out = ELU(a) where mask==1, else a (lane-dense)."""
    a = x_ref[...] * sc_ref[...] + sh_ref[...]
    e = jnp.exp(jnp.minimum(a, 0.0)) - 1.0          # safe ELU: no overflow
    o_ref[...] = jnp.where((a > 0.0) | (mk_ref[...] == 0.0), a, e)


def _affine_elu_add_kernel(x_ref, sc_ref, sh_ref, r_ref, o_ref):
    """out = ELU(x*scale + shift) + residual (lane-dense)."""
    a = x_ref[...] * sc_ref[...] + sh_ref[...]
    e = jnp.exp(jnp.minimum(a, 0.0)) - 1.0
    o_ref[...] = jnp.where(a > 0.0, a, e) + r_ref[...]


def _conv3x3_kernel(xp_ref, w_ref, b_ref, o_ref, s_ref):
    """3x3 'same' conv (flipped ConvTranspose kernel) on one output-row strip.

    xp_ref: (1, Hp, Wp, Cin)   full zero-padded image (resident across strips)
    w_ref : (9*Cin, Cout)      im2col-packed weights, tap order (di, dj, ci)
    b_ref : (1, Cout)
    o_ref : (1, Ht, Wo, Cout)  output row strip
    s_ref : (1, 1, 2, Cout)    per-strip [sum, sum-of-squares] (BN phase 1)
    """
    _, Ht, Wo, Cout = o_ref.shape
    _, Hp, Wp, Cin = xp_ref.shape
    row0 = pl.program_id(1) * Ht
    if Ht % 8 == 0:
        row0 = pl.multiple_of(row0, 8)
    x = xp_ref[0, pl.ds(row0, Ht + 2), :, :]                  # (Ht+2, Wp, Cin)
    taps = []
    for di in range(3):
        for dj in range(3):
            taps.append(x[di:di + Ht, dj:dj + Wo, :])         # (Ht, Wo, Cin)
    # im2col: one K = 9*Cin contraction instead of 9 tiny K = Cin matmuls.
    patch = jnp.concatenate(taps, axis=-1).reshape(Ht * Wo, 9 * Cin)
    acc = (jnp.dot(patch, w_ref[...], preferred_element_type=jnp.float32)
           + b_ref[...])
    o_ref[0] = acc.reshape(Ht, Wo, Cout)
    s0 = jnp.sum(acc, axis=0, keepdims=True)
    s1 = jnp.sum(acc * acc, axis=0, keepdims=True)
    s_ref[0, 0] = jnp.concatenate([s0, s1], axis=0)


# ----------------------------------------------------------------------------
# pallas_call wrappers
# ----------------------------------------------------------------------------
def fused_deconv(xflat, wf, bf):
    M, Cin = xflat.shape
    L = wf.shape[1]
    tm = _row_tile(M)
    G = M // tm
    return pl.pallas_call(
        _deconv_mm_kernel,
        out_shape=(jax.ShapeDtypeStruct((M, L), jnp.float32),
                   jax.ShapeDtypeStruct((G, 2, L), jnp.float32)),
        grid_spec=pltpu.PrefetchScalarGridSpec(
            num_scalar_prefetch=0,
            grid=(G,),
            in_specs=[
                pl.BlockSpec((tm, Cin), lambda i: (i, 0)),
                pl.BlockSpec((Cin, L), lambda i: (0, 0)),
                pl.BlockSpec((1, L), lambda i: (0, 0)),
            ],
            out_specs=[
                pl.BlockSpec((tm, L), lambda i: (i, 0)),
                pl.BlockSpec((1, 2, L), lambda i: (i, 0, 0)),
            ],
        ),
        compiler_params=pltpu.CompilerParams(dimension_semantics=("parallel",)),
    )(xflat, wf, bf)


def affine_elu_masked(x2d, scale, shift, mask):
    R, L = x2d.shape
    tr = _row_tile(R)
    return pl.pallas_call(
        _affine_elu_mask_kernel,
        out_shape=jax.ShapeDtypeStruct((R, L), jnp.float32),
        grid_spec=pltpu.PrefetchScalarGridSpec(
            num_scalar_prefetch=0,
            grid=(R // tr,),
            in_specs=[
                pl.BlockSpec((tr, L), lambda i: (i, 0)),
                pl.BlockSpec((1, L), lambda i: (0, 0)),
                pl.BlockSpec((1, L), lambda i: (0, 0)),
                pl.BlockSpec((1, L), lambda i: (0, 0)),
            ],
            out_specs=pl.BlockSpec((tr, L), lambda i: (i, 0)),
        ),
        compiler_params=pltpu.CompilerParams(dimension_semantics=("parallel",)),
    )(x2d, scale, shift, mask)


def affine_elu_add(x2d, scale, shift, res2d):
    R, L = x2d.shape
    tr = _row_tile(R)
    return pl.pallas_call(
        _affine_elu_add_kernel,
        out_shape=jax.ShapeDtypeStruct((R, L), jnp.float32),
        grid_spec=pltpu.PrefetchScalarGridSpec(
            num_scalar_prefetch=0,
            grid=(R // tr,),
            in_specs=[
                pl.BlockSpec((tr, L), lambda i: (i, 0)),
                pl.BlockSpec((1, L), lambda i: (0, 0)),
                pl.BlockSpec((1, L), lambda i: (0, 0)),
                pl.BlockSpec((tr, L), lambda i: (i, 0)),
            ],
            out_specs=pl.BlockSpec((tr, L), lambda i: (i, 0)),
        ),
        compiler_params=pltpu.CompilerParams(dimension_semantics=("parallel",)),
    )(x2d, scale, shift, res2d)


def conv3x3_bn_stats(catp, wpk, b2):
    N, Hp, Wp, Cin = catp.shape
    Cout = wpk.shape[-1]
    Ho, Wo = Hp - 2, Wp - 2
    Ht = _conv_row_tile(Ho)
    n_rt = Ho // Ht
    return pl.pallas_call(
        _conv3x3_kernel,
        out_shape=(jax.ShapeDtypeStruct((N, Ho, Wo, Cout), jnp.float32),
                   jax.ShapeDtypeStruct((N, n_rt, 2, Cout), jnp.float32)),
        grid_spec=pltpu.PrefetchScalarGridSpec(
            num_scalar_prefetch=0,
            grid=(N, n_rt),
            in_specs=[
                # Full padded image; index constant along the strip axis so it
                # stays resident in VMEM across row strips of the same image.
                # TODO(synk): for large feature maps switch to halo'd row
                # strips via manual DMA so VMEM holds only two strip buffers
                # (needed to stay within v7x's 64 MiB VMEM).
                pl.BlockSpec((1, Hp, Wp, Cin), lambda n, r: (n, 0, 0, 0)),
                pl.BlockSpec((9 * Cin, Cout), lambda n, r: (0, 0)),
                pl.BlockSpec((1, Cout), lambda n, r: (0, 0)),
            ],
            out_specs=[
                pl.BlockSpec((1, Ht, Wo, Cout), lambda n, r: (n, r, 0, 0)),
                pl.BlockSpec((1, 1, 2, Cout), lambda n, r: (n, r, 0, 0)),
            ],
        ),
        compiler_params=pltpu.CompilerParams(
            dimension_semantics=("parallel", "parallel")),
    )(catp, wpk, b2)


# ----------------------------------------------------------------------------
# UpBlock forward (wrapper / glue)
# ----------------------------------------------------------------------------
def up_block_forward(x_current_nchw, x_previous_nchw, params):
    xc = jnp.transpose(x_current_nchw, (0, 2, 3, 1))    # NHWC
    xp = jnp.transpose(x_previous_nchw, (0, 2, 3, 1))   # NHWC
    N, H, W, Cin = xc.shape
    Cout = params["b1"].shape[0]
    C2 = 2 * Cout                                       # res + up1 channels
    M = N * H * W
    Ho, Wo = 2 * H, 2 * W
    cnt = float(N * Ho * Wo)                            # BN sample count

    # --- stage 1: both k=2/s=2 deconvs fused into one matmul (+ BN1 stats) ---
    # y[row=(n,h,w), col=(i,j,b,c)] = ConvT output at (n, 2h+i, 2w+j) of branch
    # b (0 = res, 1 = up1), channel c.
    xflat = xc.reshape(M, Cin)
    Wr = jnp.transpose(params["Wres"], (0, 2, 3, 1))    # (Cin, 2, 2, Cout)
    W1 = jnp.transpose(params["W1"], (0, 2, 3, 1))      # (Cin, 2, 2, Cout)
    Wf = jnp.stack([Wr, W1], axis=3).reshape(Cin, 4 * C2)
    bf = jnp.tile(jnp.stack([params["bres"], params["b1"]], axis=0).reshape(-1),
                  4).reshape(1, 4 * C2)
    y, stats1 = fused_deconv(xflat, Wf, bf)

    # --- BN1 statistics finalize (tiny per-channel math) ---
    tot1 = jnp.sum(stats1, axis=0).reshape(2, 4, 2, Cout)   # (stat, ij, branch, c)
    up = jnp.sum(tot1[:, :, 1, :], axis=1)                  # (2, Cout), up1 branch
    mean1 = up[0] / cnt
    var1 = up[1] / cnt - mean1 * mean1                      # biased variance
    s1 = params["g1"] * jax.lax.rsqrt(var1 + _BN_EPS)
    t1 = params["be1"] - mean1 * s1

    ones = jnp.ones((Cout,), jnp.float32)
    zeros = jnp.zeros((Cout,), jnp.float32)
    sc_col = jnp.tile(jnp.concatenate([ones, s1]), 4)       # identity on res cols
    sh_col = jnp.tile(jnp.concatenate([zeros, t1]), 4)
    mk_col = jnp.tile(jnp.concatenate([zeros, ones]), 4)    # ELU only on up1 cols

    # --- stage 2: BN1 affine + ELU on up1 columns (res passes through) ---
    F = _fold_factor(M, 4 * C2)                             # lane-dense folding
    Lf = F * 4 * C2
    z = affine_elu_masked(y.reshape(M // F, Lf),
                          jnp.tile(sc_col, F).reshape(1, Lf),
                          jnp.tile(sh_col, F).reshape(1, Lf),
                          jnp.tile(mk_col, F).reshape(1, Lf))

    # Depth-to-space interleave (pure layout), concat and zero-pad stay in XLA.
    # TODO(synk): emit the interleaved layout directly from the deconv kernel
    # (strided stores) to remove these extra HBM round trips.
    z = (z.reshape(N, H, W, 2, 2, C2)
           .transpose(0, 1, 3, 2, 4, 5)
           .reshape(N, Ho, Wo, C2))
    out_res = z[..., :Cout]                                 # raw residual branch
    up1 = z[..., Cout:]                                     # ELU(BN(up_conv1))

    # --- stage 3: ConvTranspose(k=3, s=1, p=1) on cat == flipped 3x3 conv ---
    cat = jnp.concatenate([xp, up1], axis=-1)               # (N, Ho, Wo, Cin)
    catp = jnp.pad(cat, ((0, 0), (1, 1), (1, 1), (0, 0)))
    Wc = jnp.transpose(params["W2"][:, :, ::-1, ::-1], (2, 3, 0, 1))  # (3,3,Cin,Cout)
    conv2, stats2 = conv3x3_bn_stats(catp, Wc.reshape(9 * Cin, Cout),
                                     params["b2"].reshape(1, Cout))

    # --- BN2 statistics finalize ---
    tot2 = jnp.sum(stats2, axis=(0, 1))                     # (2, Cout)
    mean2 = tot2[0] / cnt
    var2 = tot2[1] / cnt - mean2 * mean2
    s2 = params["g2"] * jax.lax.rsqrt(var2 + _BN_EPS)
    t2 = params["be2"] - mean2 * s2

    # --- stage 4: BN2 affine + ELU + residual add on lane-dense slabs ---
    L2 = Wo * Cout
    out = affine_elu_add(conv2.reshape(N * Ho, L2),
                         jnp.tile(s2, Wo).reshape(1, L2),
                         jnp.tile(t2, Wo).reshape(1, L2),
                         out_res.reshape(N * Ho, L2))
    out = out.reshape(N, Ho, Wo, Cout)
    return jnp.transpose(out, (0, 3, 1, 2))                 # back to NCHW


# ----------------------------------------------------------------------------
# Deterministic synthetic parameters (shapes from the PyTorch __init__)
# ----------------------------------------------------------------------------
def init_params(key, in_ch, out_ch):
    ks = jax.random.split(key, 8)

    def nrm(k, shape, std=0.02, mean=0.0):
        return (mean + std * jax.random.normal(k, shape)).astype(jnp.float32)

    return dict(
        # ConvTranspose2d weights: (in_channels, out_channels, kH, kW)
        W1=nrm(ks[0], (in_ch, out_ch, 2, 2)),
        b1=nrm(ks[1], (out_ch,), std=0.05),
        g1=nrm(ks[2], (out_ch,), std=0.02, mean=1.0),     # BatchNorm weight ~N(1,.02)
        be1=jnp.zeros((out_ch,), jnp.float32),            # BatchNorm bias = 0
        W2=nrm(ks[3], (in_ch, out_ch, 3, 3)),
        b2=nrm(ks[4], (out_ch,), std=0.05),
        g2=nrm(ks[5], (out_ch,), std=0.02, mean=1.0),
        be2=jnp.zeros((out_ch,), jnp.float32),
        Wres=nrm(ks[6], (in_ch, out_ch, 2, 2)),
        bres=nrm(ks[7], (out_ch,), std=0.05),
    )


# ----------------------------------------------------------------------------
# Pure-JAX reference (same math, XLA path) for validation
# ----------------------------------------------------------------------------
def ref_forward(x_current_nchw, x_previous_nchw, params):
    xc = jnp.transpose(x_current_nchw, (0, 2, 3, 1))
    xp = jnp.transpose(x_previous_nchw, (0, 2, 3, 1))
    N, H, W, Cin = xc.shape
    Cout = params["b1"].shape[0]

    def deconv2x2(x, W_, b_):
        y = jnp.zeros((N, 2 * H, 2 * W, Cout), jnp.float32)
        for i in range(2):
            for j in range(2):
                sub = jnp.einsum('nhwc,cd->nhwd', x, W_[:, :, i, j]) + b_
                y = y.at[:, i::2, j::2, :].set(sub)
        return y

    def bn_train(y, g, b):
        mean = jnp.mean(y, axis=(0, 1, 2), keepdims=True)
        var = jnp.var(y, axis=(0, 1, 2), keepdims=True)    # biased
        return (y - mean) / jnp.sqrt(var + _BN_EPS) * g + b

    def elu(z):
        return jnp.where(z > 0, z, jnp.exp(jnp.minimum(z, 0.0)) - 1.0)

    out_res = deconv2x2(xc, params["Wres"], params["bres"])
    up1 = elu(bn_train(deconv2x2(xc, params["W1"], params["b1"]),
                       params["g1"], params["be1"]))
    cat = jnp.concatenate([xp, up1], axis=-1)
    catp = jnp.pad(cat, ((0, 0), (1, 1), (1, 1), (0, 0)))
    Wc = jnp.transpose(params["W2"][:, :, ::-1, ::-1], (2, 3, 0, 1))
    Ho, Wo = 2 * H, 2 * W
    conv2 = jnp.zeros((N, Ho, Wo, Cout), jnp.float32)
    for di in range(3):
        for dj in range(3):
            conv2 = conv2 + jnp.einsum(
                'nhwc,cd->nhwd', catp[:, di:di + Ho, dj:dj + Wo, :], Wc[di, dj])
    conv2 = conv2 + params["b2"]
    out = elu(bn_train(conv2, params["g2"], params["be2"])) + out_res
    return jnp.transpose(out, (0, 3, 1, 2))


# ----------------------------------------------------------------------------
if __name__ == "__main__":
    key = jax.random.PRNGKey(0)
    kx, kp, kw = jax.random.split(key, 3)

    N, Cin, H, W = 2, 8, 16, 16
    Cout = 4  # UpBlock(in_channels=8, out_channels=4); x_previous has Cin - Cout ch.

    x_current = jax.random.normal(kx, (N, Cin, H, W), jnp.float32)           # NCHW
    x_previous = jax.random.normal(kp, (N, Cin - Cout, 2 * H, 2 * W),
                                   jnp.float32)                               # NCHW
    params = init_params(kw, Cin, Cout)

    out = jax.jit(up_block_forward)(x_current, x_previous, params)
    out = jax.block_until_ready(out)

    assert out.shape == (N, Cout, 2 * H, 2 * W), out.shape
    ref = ref_forward(x_current, x_previous, params)
    err = float(jnp.max(jnp.abs(out - ref)))
    if not (err == err) or err > 2e-2:  # NaN check + tolerance
        raise AssertionError(f"Pallas output mismatch, max abs err = {err}")

    print("KERNEL_OK")
</pallas_src>

<mosaic_0001>
module attributes {stable_mosaic.version = 11 : i64} {
  func.func @_deconv_mm_kernel(%arg0: i32, %arg1: memref<256x8xf32, #tpu.memory_space<vmem>>, %arg2: memref<8x32xf32, #tpu.memory_space<vmem>>, %arg3: memref<1x32xf32, #tpu.memory_space<vmem>>, %arg4: memref<256x32xf32, #tpu.memory_space<vmem>>, %arg5: memref<1x2x32xf32, #tpu.memory_space<vmem>>) attributes {dimension_semantics = [#tpu.dimension_semantics<parallel>], iteration_bounds = array<i64: 2>, scalar_prefetch = 0 : i64, scratch_operands = 0 : i64, tpu.core_type = #tpu.core_type<tc>, window_params = [{transform_indices = @transform_0, window_bounds = array<i64: 256, 8>}, {pipeline_mode = #tpu.pipeline_mode<synchronous>, transform_indices = @transform_1, window_bounds = array<i64: 8, 32>}, {pipeline_mode = #tpu.pipeline_mode<synchronous>, transform_indices = @transform_2, window_bounds = array<i64: 1, 32>}, {transform_indices = @transform_3, window_bounds = array<i64: 256, 32>}, {transform_indices = @transform_4, window_bounds = array<i64: 1, 2, 32>}]} {
    %c0 = arith.constant 0 : index
    %c0_0 = arith.constant 0 : index
    %0 = vector.load %arg1[%c0, %c0_0] : memref<256x8xf32, #tpu.memory_space<vmem>>, vector<256x8xf32>
    %c0_1 = arith.constant 0 : index
    %c0_2 = arith.constant 0 : index
    %1 = vector.load %arg2[%c0_1, %c0_2] : memref<8x32xf32, #tpu.memory_space<vmem>>, vector<8x32xf32>
    %cst = arith.constant dense<0.000000e+00> : vector<256x32xf32>
    %2 = tpu.matmul %0, %1, %cst {dimension_numbers = #tpu.dot_dimension_numbers<[1], [0], [0], [1], [0, 0, 1, 1], [], []>} : vector<256x8xf32>, vector<8x32xf32>, vector<256x32xf32> -> vector<256x32xf32>
    %c0_3 = arith.constant 0 : index
    %c0_4 = arith.constant 0 : index
    %3 = vector.load %arg3[%c0_3, %c0_4] : memref<1x32xf32, #tpu.memory_space<vmem>>, vector<1x32xf32>
    %4 = vector.broadcast %3 : vector<1x32xf32> to vector<256x32xf32>
    %5 = arith.addf %2, %4 : vector<256x32xf32>
    %c0_5 = arith.constant 0 : index
    %c0_6 = arith.constant 0 : index
    %6 = vector.load %arg4[%c0_5, %c0_6] : memref<256x32xf32, #tpu.memory_space<vmem>>, vector<256x32xf32>
    tpu.vector_store %arg4[%c0_5, %c0_6], %5 {strides = array<i32>} : memref<256x32xf32, #tpu.memory_space<vmem>>, vector<256x32xf32>,
    %cst_7 = arith.constant dense<0.000000e+00> : vector<32xf32>
    %7 = vector.multi_reduction <add>, %5, %cst_7 [0] : vector<256x32xf32> to vector<32xf32>
    %8 = vector.shape_cast %7 : vector<32xf32> to vector<1x32xf32>
    %9 = arith.mulf %5, %5 : vector<256x32xf32>
    %cst_8 = arith.constant dense<0.000000e+00> : vector<32xf32>
    %10 = vector.multi_reduction <add>, %9, %cst_8 [0] : vector<256x32xf32> to vector<32xf32>
    %11 = vector.shape_cast %10 : vector<32xf32> to vector<1x32xf32>
    %12 = tpu.concatenate %8, %11 in 0 : vector<1x32xf32>, vector<1x32xf32> -> vector<2x32xf32>
    %c0_9 = arith.constant 0 : index
    %c0_10 = arith.constant 0 : index
    %c0_11 = arith.constant 0 : index
    %13 = vector.load %arg5[%c0_9, %c0_10, %c0_11] : memref<1x2x32xf32, #tpu.memory_space<vmem>>, vector<1x2x32xf32>
    %14 = vector.shape_cast %13 : vector<1x2x32xf32> to vector<2x32xf32>
    %15 = vector.shape_cast %12 : vector<2x32xf32> to vector<1x2x32xf32>
    tpu.vector_store %arg5[%c0_9, %c0_10, %c0_11], %15 {strides = array<i32>} : memref<1x2x32xf32, #tpu.memory_space<vmem>>, vector<1x2x32xf32>,
    return
  }
  func.func @transform_0(%arg0: i32) -> (i32, i32) {
    %c0_i32 = arith.constant 0 : i32
    %c0_i32_0 = arith.constant 0 : i32
    return %arg0, %c0_i32 : i32, i32
  }
  func.func @transform_1(%arg0: i32) -> (i32, i32) {
    %c0_i32 = arith.constant 0 : i32
    %c0_i32_0 = arith.constant 0 : i32
    %c0_i32_1 = arith.constant 0 : i32
    return %c0_i32, %c0_i32_0 : i32, i32
  }
  func.func @transform_2(%arg0: i32) -> (i32, i32) {
    %c0_i32 = arith.constant 0 : i32
    %c0_i32_0 = arith.constant 0 : i32
    %c0_i32_1 = arith.constant 0 : i32
    return %c0_i32, %c0_i32_0 : i32, i32
  }
  func.func @transform_3(%arg0: i32) -> (i32, i32) {
    %c0_i32 = arith.constant 0 : i32
    %c0_i32_0 = arith.constant 0 : i32
    return %arg0, %c0_i32 : i32, i32
  }
  func.func @transform_4(%arg0: i32) -> (i32, i32, i32) {
    %c0_i32 = arith.constant 0 : i32
    %c0_i32_0 = arith.constant 0 : i32
    %c0_i32_1 = arith.constant 0 : i32
    return %arg0, %c0_i32, %c0_i32_0 : i32, i32, i32
  }
}

module attributes {stable_mosaic.version = 11 : i64} {
  func.func @_affine_elu_mask_kernel(%arg0: i32, %arg1: memref<32x256xf32, #tpu.memory_space<vmem>>, %arg2: memref<1x256xf32, #tpu.memory_space<vmem>>, %arg3: memref<1x256xf32, #tpu.memory_space<vmem>>, %arg4: memref<1x256xf32, #tpu.memory_space<vmem>>, %arg5: memref<32x256xf32, #tpu.memory_space<vmem>>) attributes {dimension_semantics = [#tpu.dimension_semantics<parallel>], iteration_bounds = array<i64: 2>, scalar_prefetch = 0 : i64, scratch_operands = 0 : i64, tpu.core_type = #tpu.core_type<tc>, window_params = [{transform_indices = @transform_0, window_bounds = array<i64: 32, 256>}, {pipeline_mode = #tpu.pipeline_mode<synchronous>, transform_indices = @transform_1, window_bounds = array<i64: 1, 256>}, {pipeline_mode = #tpu.pipeline_mode<synchronous>, transform_indices = @transform_2, window_bounds = array<i64: 1, 256>}, {pipeline_mode = #tpu.pipeline_mode<synchronous>, transform_indices = @transform_3, window_bounds = array<i64: 1, 256>}, {transform_indices = @transform_4, window_bounds = array<i64: 32, 256>}]} {
    %c0 = arith.constant 0 : index
    %c0_0 = arith.constant 0 : index
    %0 = vector.load %arg1[%c0, %c0_0] : memref<32x256xf32, #tpu.memory_space<vmem>>, vector<32x256xf32>
    %c0_1 = arith.constant 0 : index
    %c0_2 = arith.constant 0 : index
    %1 = vector.load %arg2[%c0_1, %c0_2] : memref<1x256xf32, #tpu.memory_space<vmem>>, vector<1x256xf32>
    %2 = vector.broadcast %1 : vector<1x256xf32> to vector<32x256xf32>
    %3 = arith.mulf %0, %2 : vector<32x256xf32>
    %c0_3 = arith.constant 0 : index
    %c0_4 = arith.constant 0 : index
    %4 = vector.load %arg3[%c0_3, %c0_4] : memref<1x256xf32, #tpu.memory_space<vmem>>, vector<1x256xf32>
    %5 = vector.broadcast %4 : vector<1x256xf32> to vector<32x256xf32>
    %6 = arith.addf %3, %5 : vector<32x256xf32>
    %cst = arith.constant 0.000000e+00 : f32
    %7 = vector.broadcast %cst : f32 to vector<32x256xf32>
    %8 = arith.minimumf %6, %7 : vector<32x256xf32>
    %9 = math.exp %8 : vector<32x256xf32>
    %cst_5 = arith.constant 1.000000e+00 : f32
    %10 = vector.broadcast %cst_5 : f32 to vector<32x256xf32>
    %11 = arith.subf %9, %10 : vector<32x256xf32>
    %cst_6 = arith.constant 0.000000e+00 : f32
    %12 = vector.broadcast %cst_6 : f32 to vector<32x256xf32>
    %13 = arith.cmpf ogt, %6, %12 : vector<32x256xf32>
    %c0_7 = arith.constant 0 : index
    %c0_8 = arith.constant 0 : index
    %14 = vector.load %arg4[%c0_7, %c0_8] : memref<1x256xf32, #tpu.memory_space<vmem>>, vector<1x256xf32>
    %cst_9 = arith.constant 0.000000e+00 : f32
    %15 = vector.broadcast %cst_9 : f32 to vector<1x256xf32>
    %16 = arith.cmpf oeq, %14, %15 : vector<1x256xf32>
    %17 = vector.broadcast %16 : vector<1x256xi1> to vector<32x256xi1>
    %18 = arith.ori %13, %17 : vector<32x256xi1>
    %19 = arith.select %18, %6, %11 : vector<32x256xi1>, vector<32x256xf32>
    %c0_10 = arith.constant 0 : index
    %c0_11 = arith.constant 0 : index
    %20 = vector.load %arg5[%c0_10, %c0_11] : memref<32x256xf32, #tpu.memory_space<vmem>>, vector<32x256xf32>
    tpu.vector_store %arg5[%c0_10, %c0_11], %19 {strides = array<i32>} : memref<32x256xf32, #tpu.memory_space<vmem>>, vector<32x256xf32>,
    return
  }
  func.func @transform_0(%arg0: i32) -> (i32, i32) {
    %c0_i32 = arith.constant 0 : i32
    %c0_i32_0 = arith.constant 0 : i32
    return %arg0, %c0_i32 : i32, i32
  }
  func.func @transform_1(%arg0: i32) -> (i32, i32) {
    %c0_i32 = arith.constant 0 : i32
    %c0_i32_0 = arith.constant 0 : i32
    %c0_i32_1 = arith.constant 0 : i32
    return %c0_i32, %c0_i32_0 : i32, i32
  }
  func.func @transform_2(%arg0: i32) -> (i32, i32) {
    %c0_i32 = arith.constant 0 : i32
    %c0_i32_0 = arith.constant 0 : i32
    %c0_i32_1 = arith.constant 0 : i32
    return %c0_i32, %c0_i32_0 : i32, i32
  }
  func.func @transform_3(%arg0: i32) -> (i32, i32) {
    %c0_i32 = arith.constant 0 : i32
    %c0_i32_0 = arith.constant 0 : i32
    %c0_i32_1 = arith.constant 0 : i32
    return %c0_i32, %c0_i32_0 : i32, i32
  }
  func.func @transform_4(%arg0: i32) -> (i32, i32) {
    %c0_i32 = arith.constant 0 : i32
    %c0_i32_0 = arith.constant 0 : i32
    return %arg0, %c0_i32 : i32, i32
  }
}

module attributes {stable_mosaic.version = 11 : i64} {
  func.func @_conv3x3_kernel(%arg0: i32, %arg1: i32, %arg2: memref<1x34x34x8xf32, #tpu.memory_space<vmem>>, %arg3: memref<72x4xf32, #tpu.memory_space<vmem>>, %arg4: memref<1x4xf32, #tpu.memory_space<vmem>>, %arg5: memref<1x16x32x4xf32, #tpu.memory_space<vmem>>, %arg6: memref<1x1x2x4xf32, #tpu.memory_space<vmem>>) attributes {dimension_semantics = [#tpu.dimension_semantics<parallel>, #tpu.dimension_semantics<parallel>], iteration_bounds = array<i64: 2, 2>, scalar_prefetch = 0 : i64, scratch_operands = 0 : i64, tpu.core_type = #tpu.core_type<tc>, window_params = [{transform_indices = @transform_0, window_bounds = array<i64: 1, 34, 34, 8>}, {pipeline_mode = #tpu.pipeline_mode<synchronous>, transform_indices = @transform_1, window_bounds = array<i64: 72, 4>}, {pipeline_mode = #tpu.pipeline_mode<synchronous>, transform_indices = @transform_2, window_bounds = array<i64: 1, 4>}, {transform_indices = @transform_3, window_bounds = array<i64: 1, 16, 32, 4>}, {transform_indices = @transform_4, window_bounds = array<i64: 1, 1, 2, 4>}]} {
    %c16_i32 = arith.constant 16 : i32
    %0 = arith.muli %arg1, %c16_i32 : i32
    %1 = tpu.assume_multiple %0, 8 : i32
    %c0 = arith.constant 0 : index
    %2 = arith.index_cast %1 : i32 to index
    %c0_0 = arith.constant 0 : index
    %c0_1 = arith.constant 0 : index
    %3 = vector.load %arg2[%c0, %2, %c0_0, %c0_1] : memref<1x34x34x8xf32, #tpu.memory_space<vmem>>, vector<1x18x34x8xf32>
    %4 = vector.shape_cast %3 : vector<1x18x34x8xf32> to vector<18x34x8xf32>
    %5 = vector.extract_strided_slice %4 {offsets = [0, 0, 0], sizes = [16, 32, 8], strides = [1, 1, 1]} : vector<18x34x8xf32> to vector<16x32x8xf32>
    %6 = vector.extract_strided_slice %4 {offsets = [0, 1, 0], sizes = [16, 32, 8], strides = [1, 1, 1]} : vector<18x34x8xf32> to vector<16x32x8xf32>
    %7 = vector.extract_strided_slice %4 {offsets = [0, 2, 0], sizes = [16, 32, 8], strides = [1, 1, 1]} : vector<18x34x8xf32> to vector<16x32x8xf32>
    %8 = vector.extract_strided_slice %4 {offsets = [1, 0, 0], sizes = [16, 32, 8], strides = [1, 1, 1]} : vector<18x34x8xf32> to vector<16x32x8xf32>
    %9 = vector.extract_strided_slice %4 {offsets = [1, 1, 0], sizes = [16, 32, 8], strides = [1, 1, 1]} : vector<18x34x8xf32> to vector<16x32x8xf32>
    %10 = vector.extract_strided_slice %4 {offsets = [1, 2, 0], sizes = [16, 32, 8], strides = [1, 1, 1]} : vector<18x34x8xf32> to vector<16x32x8xf32>
    %11 = vector.extract_strided_slice %4 {offsets = [2, 0, 0], sizes = [16, 32, 8], strides = [1, 1, 1]} : vector<18x34x8xf32> to vector<16x32x8xf32>
    %12 = vector.extract_strided_slice %4 {offsets = [2, 1, 0], sizes = [16, 32, 8], strides = [1, 1, 1]} : vector<18x34x8xf32> to vector<16x32x8xf32>
    %13 = vector.extract_strided_slice %4 {offsets = [2, 2, 0], sizes = [16, 32, 8], strides = [1, 1, 1]} : vector<18x34x8xf32> to vector<16x32x8xf32>
    %14 = tpu.concatenate %5, %6, %7, %8, %9, %10, %11, %12, %13 in 2 : vector<16x32x8xf32>, vector<16x32x8xf32>, vector<16x32x8xf32>, vector<16x32x8xf32>, vector<16x32x8xf32>, vector<16x32x8xf32>, vector<16x32x8xf32>, vector<16x32x8xf32>, vector<16x32x8xf32> -> vector<16x32x72xf32>
    %15 = vector.shape_cast %14 : vector<16x32x72xf32> to vector<512x72xf32>
    %c0_2 = arith.constant 0 : index
    %c0_3 = arith.constant 0 : index
    %16 = vector.load %arg3[%c0_2, %c0_3] : memref<72x4xf32, #tpu.memory_space<vmem>>, vector<72x4xf32>
    %cst = arith.constant dense<0.000000e+00> : vector<512x4xf32>
    %17 = tpu.matmul %15, %16, %cst {dimension_numbers = #tpu.dot_dimension_numbers<[1], [0], [0], [1], [0, 0, 1, 1], [], []>} : vector<512x72xf32>, vector<72x4xf32>, vector<512x4xf32> -> vector<512x4xf32>
    %c0_4 = arith.constant 0 : index
    %c0_5 = arith.constant 0 : index
    %18 = vector.load %arg4[%c0_4, %c0_5] : memref<1x4xf32, #tpu.memory_space<vmem>>, vector<1x4xf32>
    %19 = vector.broadcast %18 : vector<1x4xf32> to vector<512x4xf32>
    %20 = arith.addf %17, %19 : vector<512x4xf32>
    %21 = vector.shape_cast %20 : vector<512x4xf32> to vector<16x32x4xf32>
    %c0_6 = arith.constant 0 : index
    %c0_7 = arith.constant 0 : index
    %c0_8 = arith.constant 0 : index
    %c0_9 = arith.constant 0 : index
    %22 = vector.load %arg5[%c0_6, %c0_7, %c0_8, %c0_9] : memref<1x16x32x4xf32, #tpu.memory_space<vmem>>, vector<1x16x32x4xf32>
    %23 = vector.shape_cast %22 : vector<1x16x32x4xf32> to vector<16x32x4xf32>
    %24 = vector.shape_cast %21 : vector<16x32x4xf32> to vector<1x16x32x4xf32>
    tpu.vector_store %arg5[%c0_6, %c0_7, %c0_8, %c0_9], %24 {strides = array<i32>} : memref<1x16x32x4xf32, #tpu.memory_space<vmem>>, vector<1x16x32x4xf32>,
    %cst_10 = arith.constant dense<0.000000e+00> : vector<4xf32>
    %25 = vector.multi_reduction <add>, %20, %cst_10 [0] : vector<512x4xf32> to vector<4xf32>
    %26 = vector.shape_cast %25 : vector<4xf32> to vector<1x4xf32>
    %27 = arith.mulf %20, %20 : vector<512x4xf32>
    %cst_11 = arith.constant dense<0.000000e+00> : vector<4xf32>
    %28 = vector.multi_reduction <add>, %27, %cst_11 [0] : vector<512x4xf32> to vector<4xf32>
    %29 = vector.shape_cast %28 : vector<4xf32> to vector<1x4xf32>
    %30 = tpu.concatenate %26, %29 in 0 : vector<1x4xf32>, vector<1x4xf32> -> vector<2x4xf32>
    %c0_12 = arith.constant 0 : index
    %c0_13 = arith.constant 0 : index
    %c0_14 = arith.constant 0 : index
    %c0_15 = arith.constant 0 : index
    %31 = vector.load %arg6[%c0_12, %c0_13, %c0_14, %c0_15] : memref<1x1x2x4xf32, #tpu.memory_space<vmem>>, vector<1x1x2x4xf32>
    %32 = vector.shape_cast %31 : vector<1x1x2x4xf32> to vector<2x4xf32>
    %33 = vector.shape_cast %30 : vector<2x4xf32> to vector<1x1x2x4xf32>
    tpu.vector_store %arg6[%c0_12, %c0_13, %c0_14, %c0_15], %33 {strides = array<i32>} : memref<1x1x2x4xf32, #tpu.memory_space<vmem>>, vector<1x1x2x4xf32>,
    return
  }
  func.func @transform_0(%arg0: i32, %arg1: i32) -> (i32, i32, i32, i32) {
    %c0_i32 = arith.constant 0 : i32
    %c0_i32_0 = arith.constant 0 : i32
    %c0_i32_1 = arith.constant 0 : i32
    %c0_i32_2 = arith.constant 0 : i32
    return %arg0, %c0_i32, %c0_i32_0, %c0_i32_1 : i32, i32, i32, i32
  }
  func.func @transform_1(%arg0: i32, %arg1: i32) -> (i32, i32) {
    %c0_i32 = arith.constant 0 : i32
    %c0_i32_0 = arith.constant 0 : i32
    %c0_i32_1 = arith.constant 0 : i32
    return %c0_i32, %c0_i32_0 : i32, i32
  }
  func.func @transform_2(%arg0: i32, %arg1: i32) -> (i32, i32) {
    %c0_i32 = arith.constant 0 : i32
    %c0_i32_0 = arith.constant 0 : i32
    %c0_i32_1 = arith.constant 0 : i32
    return %c0_i32, %c0_i32_0 : i32, i32
  }
  func.func @transform_3(%arg0: i32, %arg1: i32) -> (i32, i32, i32, i32) {
    %c0_i32 = arith.constant 0 : i32
    %c0_i32_0 = arith.constant 0 : i32
    %c0_i32_1 = arith.constant 0 : i32
    return %arg0, %arg1, %c0_i32, %c0_i32_0 : i32, i32, i32, i32
  }
  func.func @transform_4(%arg0: i32, %arg1: i32) -> (i32, i32, i32, i32) {
    %c0_i32 = arith.constant 0 : i32
    %c0_i32_0 = arith.constant 0 : i32
    %c0_i32_1 = arith.constant 0 : i32
    return %arg0, %arg1, %c0_i32, %c0_i32_0 : i32, i32, i32, i32
  }
}

module attributes {stable_mosaic.version = 11 : i64} {
  func.func @_affine_elu_add_kernel(%arg0: i32, %arg1: memref<32x128xf32, #tpu.memory_space<vmem>>, %arg2: memref<1x128xf32, #tpu.memory_space<vmem>>, %arg3: memref<1x128xf32, #tpu.memory_space<vmem>>, %arg4: memref<32x128xf32, #tpu.memory_space<vmem>>, %arg5: memref<32x128xf32, #tpu.memory_space<vmem>>) attributes {dimension_semantics = [#tpu.dimension_semantics<parallel>], iteration_bounds = array<i64: 2>, scalar_prefetch = 0 : i64, scratch_operands = 0 : i64, tpu.core_type = #tpu.core_type<tc>, window_params = [{transform_indices = @transform_0, window_bounds = array<i64: 32, 128>}, {pipeline_mode = #tpu.pipeline_mode<synchronous>, transform_indices = @transform_1, window_bounds = array<i64: 1, 128>}, {pipeline_mode = #tpu.pipeline_mode<synchronous>, transform_indices = @transform_2, window_bounds = array<i64: 1, 128>}, {transform_indices = @transform_3, window_bounds = array<i64: 32, 128>}, {transform_indices = @transform_4, window_bounds = array<i64: 32, 128>}]} {
    %c0 = arith.constant 0 : index
    %c0_0 = arith.constant 0 : index
    %0 = vector.load %arg1[%c0, %c0_0] : memref<32x128xf32, #tpu.memory_space<vmem>>, vector<32x128xf32>
    %c0_1 = arith.constant 0 : index
    %c0_2 = arith.constant 0 : index
    %1 = vector.load %arg2[%c0_1, %c0_2] : memref<1x128xf32, #tpu.memory_space<vmem>>, vector<1x128xf32>
    %2 = vector.broadcast %1 : vector<1x128xf32> to vector<32x128xf32>
    %3 = arith.mulf %0, %2 : vector<32x128xf32>
    %c0_3 = arith.constant 0 : index
    %c0_4 = arith.constant 0 : index
    %4 = vector.load %arg3[%c0_3, %c0_4] : memref<1x128xf32, #tpu.memory_space<vmem>>, vector<1x128xf32>
    %5 = vector.broadcast %4 : vector<1x128xf32> to vector<32x128xf32>
    %6 = arith.addf %3, %5 : vector<32x128xf32>
    %cst = arith.constant 0.000000e+00 : f32
    %7 = vector.broadcast %cst : f32 to vector<32x128xf32>
    %8 = arith.minimumf %6, %7 : vector<32x128xf32>
    %9 = math.exp %8 : vector<32x128xf32>
    %cst_5 = arith.constant 1.000000e+00 : f32
    %10 = vector.broadcast %cst_5 : f32 to vector<32x128xf32>
    %11 = arith.subf %9, %10 : vector<32x128xf32>
    %cst_6 = arith.constant 0.000000e+00 : f32
    %12 = vector.broadcast %cst_6 : f32 to vector<32x128xf32>
    %13 = arith.cmpf ogt, %6, %12 : vector<32x128xf32>
    %14 = arith.select %13, %6, %11 : vector<32x128xi1>, vector<32x128xf32>
    %c0_7 = arith.constant 0 : index
    %c0_8 = arith.constant 0 : index
    %15 = vector.load %arg4[%c0_7, %c0_8] : memref<32x128xf32, #tpu.memory_space<vmem>>, vector<32x128xf32>
    %16 = arith.addf %14, %15 : vector<32x128xf32>
    %c0_9 = arith.constant 0 : index
    %c0_10 = arith.constant 0 : index
    %17 = vector.load %arg5[%c0_9, %c0_10] : memref<32x128xf32, #tpu.memory_space<vmem>>, vector<32x128xf32>
    tpu.vector_store %arg5[%c0_9, %c0_10], %16 {strides = array<i32>} : memref<32x128xf32, #tpu.memory_space<vmem>>, vector<32x128xf32>,
    return
  }
  func.func @transform_0(%arg0: i32) -> (i32, i32) {
    %c0_i32 = arith.constant 0 : i32
    %c0_i32_0 = arith.constant 0 : i32
    return %arg0, %c0_i32 : i32, i32
  }
  func.func @transform_1(%arg0: i32) -> (i32, i32) {
    %c0_i32 = arith.constant 0 : i32
    %c0_i32_0 = arith.constant 0 : i32
    %c0_i32_1 = arith.constant 0 : i32
    return %c0_i32, %c0_i32_0 : i32, i32
  }
  func.func @transform_2(%arg0: i32) -> (i32, i32) {
    %c0_i32 = arith.constant 0 : i32
    %c0_i32_0 = arith.constant 0 : i32
    %c0_i32_1 = arith.constant 0 : i32
    return %c0_i32, %c0_i32_0 : i32, i32
  }
  func.func @transform_3(%arg0: i32) -> (i32, i32) {
    %c0_i32 = arith.constant 0 : i32
    %c0_i32_0 = arith.constant 0 : i32
    return %arg0, %c0_i32 : i32, i32
  }
  func.func @transform_4(%arg0: i32) -> (i32, i32) {
    %c0_i32 = arith.constant 0 : i32
    %c0_i32_0 = arith.constant 0 : i32
    return %arg0, %c0_i32 : i32, i32
  }
}

</mosaic_0001>

<llo_original>
// kernel: tile.43
$region0: #{tile.43}
  %s0 = inlined_call_operand.vmem [shape: f32[4,8], index: 0, kind: input, shape index: {}]
  %s1 = inlined_call_operand.vmem [shape: f32[1,32], index: 1, kind: output, shape index: {}]
  $region1: #{tile.43} parent=0
    #allocation0 [shape = 'u8[4096]{0}', space=vmem, size = 0x1000, scoped, tag = 'scoped mem for output reshape']
    #allocation1 [shape = 'u8[4096]{0}', space=vmem, size = 0x1000, scoped, tag = 'scoped mem for input reshape']
    %s3 = ssub.s32 16, 1
    %v4 = vld [vmem:[%s0] sm:%s3]
    %5 = vst [vmem:[#allocation1] sm:%s3] %v4
    %v6 = vld [vmem:[#allocation1] sm:$0x1]
    %vm7 = vcmask 64512
    %8 = vst.msk [vmem:[#allocation0] sm:$0x1] %vm7, %v6
    %s9 = scalar_lea.vmem [#allocation1], 3
    %v10 = vld [vmem:[%s9] sm:$0x1]
    %11 = vrot.lane.b32.xlu0 %v10, 24
    %v12 = vpop.permute.xlu0 %11
    %vm13 = vcmask 261312
    %14 = vst.msk [vmem:[#allocation0] sm:$0x1] %vm13, %v12
    %s15 = scalar_lea.vmem [#allocation1], 2
    %v16 = vld [vmem:[%s15] sm:$0x1]
    %17 = vrot.lane.b32.xlu0 %v16, 16
    %v18 = vpop.permute.xlu0 %17
    %vm19 = vcmask 195712
    %20 = vst.msk [vmem:[#allocation0] sm:$0x1] %vm19, %v18
    %s21 = scalar_lea.vmem [#allocation1], 1
    %v22 = vld [vmem:[%s21] sm:$0x1]
    %23 = vrot.lane.b32.xlu0 %v22, 8
    %v24 = vpop.permute.xlu0 %23
    %vm25 = vcmask 130112
    %26 = vst.msk [vmem:[#allocation0] sm:$0x1] %vm25, %v24
    %s28 = ssub.s32 2, 1
    %v29 = vld [vmem:[#allocation0] sm:%s28]
    %s31 = ssub.s32 2, 1
    %32 = vst [vmem:[%s1] sm:%s31] %v29

// kernel: tile.41
$region0: #{tile.41}
  %s0 = inlined_call_operand.vmem [shape: f32[2,4], index: 0, kind: input, shape index: {}]
  %s1 = inlined_call_operand.vmem [shape: f32[8], index: 1, kind: output, shape index: {}]
  $region1: #{tile.41} parent=0
    #allocation0 [shape = 'u8[4096]{0}', space=vmem, size = 0x1000, scoped, tag = 'scoped mem for output reshape']
    #allocation1 [shape = 'u8[4096]{0}', space=vmem, size = 0x1000, scoped, tag = 'scoped mem for input reshape']
    %s3 = ssub.s32 4, 1
    %v4 = vld [vmem:[%s0] sm:%s3]
    %5 = vst [vmem:[#allocation1] sm:%s3] %v4
    %v6 = vld [vmem:[#allocation1] sm:$0x1]
    %vm7 = vcmask 31744
    %8 = vst.msk [vmem:[#allocation0] sm:$0x1] %vm7, %v6
    %s9 = scalar_lea.vmem [#allocation1], 1
    %v10 = vld [vmem:[%s9] sm:$0x1]
    %11 = vrot.lane.b32.xlu0 %v10, 4
    %v12 = vpop.permute.xlu0 %11
    %vm13 = vcmask 64544
    %14 = vst.msk [vmem:[#allocation0] sm:$0x1] %vm13, %v12
    %s16 = ssub.s32 2, 1
    %v17 = vld [vmem:[#allocation0] sm:%s16]
    %s19 = ssub.s32 2, 1
    %20 = vst [vmem:[%s1] sm:%s19] %v17

// kernel: tile.42
$region0: #{tile.42}
  #allocation0 [shape = 's32[1]{0}', space=sflag, size = 0x4, scoped, tag = 'scoped memory for tile.42']
  %s0 = inlined_call_operand.vmem [shape: f32[8], index: 0, kind: input, shape index: {}]
  %s1 = inlined_call_operand.vmem [shape: f32[4,8], index: 1, kind: output, shape index: {}]
  // Predicated region
  $region2: #{tile.42} parent=0 // pred_check
    _
  $region3: #{tile.42} parent=0 // pred_check_branch
    %3 = sbr.rel (0) target = $region5
  $region4: #{tile.42} parent=0 // pred_region
    _
  $region5: #{tile.42} parent=0 // pred_fallthru
    _
  %v4 = vld [vmem:[%s0] ss:$0 sm:$0xff]
  %5 = vst [vmem:[%s1] sm:$0xf] %v4

// kernel: tile.54
$region0: #{tile.54}
  #allocation2 [shape = 's32[1]{0}', space=sflag, size = 0x4, scoped, tag = 'scoped memory for tile.54']
  %s0 = inlined_call_operand.hbm [shape: f32[8], index: 0, kind: input, shape index: {}]
  %s1 = inlined_call_operand.vmem [shape: f32[4,8], index: 1, kind: output, shape index: {}]
  $region1: #{tile.54} parent=0
    #allocation0 [shape = 'u8[512]{0}', space=vmem, size = 0x400, scoped, tag = 'operand span for operand 0']
    #allocation1 [shape = 's32[1]{0}', space=sflag, size = 0x4, scoped, tag = 'scoped memory for tile.54']
    %2 = vsyncpa [#allocation1], 0
    // Predicated region
    $region2: #{tile.54} parent=1 // pred_check
      _
    $region3: #{tile.54} parent=1 // pred_check_branch
      %4 = sbr.rel (0) target = $region5
    $region4: #{tile.54} parent=1 // pred_region
      %6 = vsyncadd [#allocation1], 0
      %s8 = sshll.u32 %s0, 4
      %s9 = int_to_ptr.hbm [resolvable:$true] %s8
      %s10 = sshll.u32 [#allocation0], 4
      %s11 = int_to_ptr.vmem [resolvable:$true] %s10
      %13 = dma.hbm_to_vmem [thread:$0]  %s9, 16, %s11, [#allocation1]
    $region5: #{tile.54} parent=1 // pred_fallthru
      _
    // Predicated region
    $region6: #{tile.54} parent=1 // pred_check
      _
    $region7: #{tile.54} parent=1 // pred_check_branch
      %15 = sbr.rel (0) target = $region9
    $region8: #{tile.54} parent=1 // pred_region
      %17 = dma.done [#allocation1], 16
    $region9: #{tile.54} parent=1 // pred_fallthru
      _
    %v18 = vld [vmem:[#allocation0] ss:$0 sm:$0xff]
    %19 = vst [vmem:[%s1] sm:$0xf] %v18
    %20 = vsyncpa [#allocation1], 1

// kernel: tile.67
$region0: #{tile.67}
  %s0 = inlined_call_operand.vmem [shape: f32[4,8], index: 0, kind: input, shape index: {}]
  %s1 = inlined_call_operand.vmem [shape: f32[32], index: 1, kind: output, shape index: {}]
  $region1: #{tile.67} parent=0
    #allocation0 [shape = 'u8[4096]{0}', space=vmem, size = 0x1000, scoped, tag = 'scoped mem for output reshape']
    #allocation1 [shape = 'u8[4096]{0}', space=vmem, size = 0x1000, scoped, tag = 'scoped mem for input reshape']
    %s3 = ssub.s32 16, 1
    %v4 = vld [vmem:[%s0] sm:%s3]
    %5 = vst [vmem:[#allocation1] sm:%s3] %v4
    %v6 = vld [vmem:[#allocation1] sm:$0x1]
    %vm7 = vcmask 64512
    %8 = vst.msk [vmem:[#allocation0] sm:$0x1] %vm7, %v6
    %s9 = scalar_lea.vmem [#allocation1], 3
    %v10 = vld [vmem:[%s9] sm:$0x1]
    %11 = vrot.lane.b32.xlu0 %v10, 24
    %v12 = vpop.permute.xlu0 %11
    %vm13 = vcmask 261312
    %14 = vst.msk [vmem:[#allocation0] sm:$0x1] %vm13, %v12
    %s15 = scalar_lea.vmem [#allocation1], 2
    %v16 = vld [vmem:[%s15] sm:$0x1]
    %17 = vrot.lane.b32.xlu0 %v16, 16
    %v18 = vpop.permute.xlu0 %17
    %vm19 = vcmask 195712
    %20 = vst.msk [vmem:[#allocation0] sm:$0x1] %vm19, %v18
    %s21 = scalar_lea.vmem [#allocation1], 1
    %v22 = vld [vmem:[%s21] sm:$0x1]
    %23 = vrot.lane.b32.xlu0 %v22, 8
    %v24 = vpop.permute.xlu0 %23
    %vm25 = vcmask 130112
    %26 = vst.msk [vmem:[#allocation0] sm:$0x1] %vm25, %v24
    %s28 = ssub.s32 2, 1
    %v29 = vld [vmem:[#allocation0] sm:%s28]
    %s31 = ssub.s32 2, 1
    %32 = vst [vmem:[%s1] sm:%s31] %v29

// kernel: tile.69
$region0: #{tile.69}
  %s0 = inlined_call_operand.vmem [shape: f32[8,32], index: 0, kind: input, shape index: {}]
  %s1 = inlined_call_operand.vmem [shape: f32[1,256], index: 1, kind: output, shape index: {}]
  $region1: #{tile.69} parent=0
    #allocation0 [shape = 'u8[8192]{0}', space=vmem, size = 0x2000, scoped, tag = 'scoped mem for output reshape']
    %s2 = smov 3
    %v3 = vld [vmem:[%s0] ss:$4 sm:%s2]
    %vm4 = vcmask 261120
    %5 = vst.msk [vmem:[#allocation0] ss:$8 sm:$0x3] %vm4, %v3
    %s6 = scalar_lea.vmem %s0, 3
    %s7 = smov 3
    %v8 = vld [vmem:[%s6] ss:$4 sm:%s7]
    %9 = vrot.lane.b32.xlu0 %v8, 96
    %v10 = vpop.permute.xlu0 %9
    %vm11 = vcmask 1048320
    %12 = vst.msk [vmem:[#allocation0] ss:$8 sm:$0x3] %vm11, %v10
    %s13 = scalar_lea.vmem %s0, 2
    %s14 = smov 3
    %v15 = vld [vmem:[%s13] ss:$4 sm:%s14]
    %16 = vrot.lane.b32.xlu0 %v15, 64
    %v17 = vpop.permute.xlu0 %16
    %vm18 = vcmask 785920
    %19 = vst.msk [vmem:[#allocation0] ss:$8 sm:$0x3] %vm18, %v17
    %s20 = scalar_lea.vmem %s0, 1
    %s21 = smov 3
    %v22 = vld [vmem:[%s20] ss:$4 sm:%s21]
    %23 = vrot.lane.b32.xlu0 %v22, 32
    %v24 = vpop.permute.xlu0 %23
    %vm25 = vcmask 523520
    %26 = vst.msk [vmem:[#allocation0] ss:$8 sm:$0x3] %vm25, %v24
    %s28 = ssub.s32 2, 1
    %v29 = vld [vmem:[#allocation0] sm:%s28]
    %s31 = ssub.s32 2, 1
    %32 = vst [vmem:[%s1] sm:%s31] %v29
    %s33 = scalar_lea.vmem [#allocation0], 8
    %v34 = vld [vmem:[%s33] sm:%s28]
    %s36 = ssub.s32 2, 1
    %s37 = scalar_lea.vmem %s1, 1
    %38 = vst [vmem:[%s37] sm:%s36] %v34

// kernel: tile.68
$region0: #{tile.68}
  #allocation0 [shape = 's32[1]{0}', space=sflag, size = 0x4, scoped, tag = 'scoped memory for tile.68']
  %s0 = inlined_call_operand.vmem [shape: f32[32], index: 0, kind: input, shape index: {}]
  %s1 = inlined_call_operand.vmem [shape: f32[8,32], index: 1, kind: output, shape index: {}]
  // Predicated region
  $region2: #{tile.68} parent=0 // pred_check
    _
  $region3: #{tile.68} parent=0 // pred_check_branch
    %3 = sbr.rel (0) target = $region5
  $region4: #{tile.68} parent=0 // pred_region
    _
  $region5: #{tile.68} parent=0 // pred_fallthru
    _
  %v4 = vld [vmem:[%s0] ss:$0 sm:$0xff]
  %5 = vst [vmem:[%s1] sm:$0xff] %v4

// kernel: up_block_forward.5
$region0: #{up_block_forward.5}
  #allocation0 [shape = 'u32[]', space=smem, size = 0x4, offset = 0x4, fixed_abs, tag = 'smem constant byte address 0x4 - core index']
  #allocation1 [shape = 'u32[72,128]{1,0:T(1,128)}', space=vmem, size = 0x9000, scoped, tag = 'internal scratch']
  %s0 = inlined_call_operand.vmem [shape: f32[64,256], index: 0, kind: input, shape index: {}]
  %s1 = inlined_call_operand.vmem [shape: f32[1,256], index: 1, kind: input, shape index: {}]
  %s2 = inlined_call_operand.vmem [shape: f32[1,256], index: 2, kind: input, shape index: {}]
  %s3 = inlined_call_operand.vmem [shape: f32[1,256], index: 3, kind: input, shape index: {}]
  %s4 = inlined_call_operand.vmem [shape: f32[64,256], index: 4, kind: output, shape index: {}]
  %s5 = sld [smem:[#allocation0]]
  $region49: #{up_block_forward.5} parent=0
    _
  %s7 = ssub.s32 1, %s5
  %s8 = scalar_select 0, %s7, %s5
  loop: start=0, step=1, limit=4
  $region2: #{up_block_forward.5} parent=0 // loop_pre_header
    _
  $region3: #{up_block_forward.5} parent=0 // loop_header
    %s10 = sphi 0, %s14
    %p11 = scmp.ge.s32.totalorder %s10, 4
    %s20 = sphi 0, %s22
    %s23 = sphi 0, %s20
    %s24 = sphi 0, %s23
    %s40 = sphi 0, %s24
    %s44 = sphi 0, %s44
    %s46 = sphi 0, %s44
    %s47 = sphi 0, %s46
    %s61 = sphi 0, %s47
    %s65 = sphi 0, %s65
    %s67 = sphi 0, %s65
    %s68 = sphi 0, %s67
    %s82 = sphi 0, %s68
    %s86 = sphi 0, %s86
    %s88 = sphi 0, %s86
    %s89 = sphi 0, %s88
    %s103 = sphi 0, %s89
    %s109 = sphi 0, %s111
    %s112 = sphi 0, %s109
    %s113 = sphi 0, %s112
    %s129 = sphi 0, %s113
  $region4: #{up_block_forward.5} parent=0 // loop_header_branch
    %13 = sbr.rel (%p11) target = $region8
  $region5: #{up_block_forward.5} parent=0 // loop_body
    %s15 = ssub.s32 %s10, 1
    %s16 = ssub.s32 %s10, 2
    %s17 = sadd.s32 %s10, 1
    %s18 = ssub.s32 %s10, %s17
    %p19 = scmp.eq.s32.totalorder %s18, 0
    %s21 = sadd.s32 %s20, 1
    %s22 = scalar_select %p19, %s20, %s21
    %p25 = pneg %p19
    %p26 = scmp.eq.s32.totalorder %s10, 1
    %p27 = por %p25, %p26
    %p28 = scmp.ne.s32.totalorder %s20, %s23
    %p29 = scmp.eq.s32.totalorder %s10, 0
    %p30 = por %p28, %p29
    %p31 = scmp.ne.s32.totalorder %s20, %s23
    %p32 = scmp.eq.s32.totalorder %s15, 1
    %p33 = por %p31, %p32
    %p34 = scmp.ne.s32.totalorder %s23, %s24
    %p35 = scmp.eq.s32.totalorder %s15, 0
    %p36 = por %p34, %p35
    %p37 = scmp.ne.s32.totalorder %s23, %s24
    %p38 = scmp.eq.s32.totalorder %s16, 1
    %p39 = por %p37, %p38
    %p41 = scmp.ne.s32.totalorder %s24, %s40
    %p42 = scmp.eq.s32.totalorder %s16, 0
    %p43 = por %p41, %p42
    %s45 = sadd.s32 %s44, 1
    %p48 = scmp.eq.s32.totalorder %s10, 1
    %p49 = scmp.ne.s32.totalorder %s44, %s46
    %p50 = scmp.eq.s32.totalorder %s10, 0
    %p51 = por %p49, %p50
    %p52 = scmp.ne.s32.totalorder %s44, %s46
    %p53 = scmp.eq.s32.totalorder %s15, 1
    %p54 = por %p52, %p53
    %p55 = scmp.ne.s32.totalorder %s46, %s47
    %p56 = scmp.eq.s32.totalorder %s15, 0
    %p57 = por %p55, %p56
    %p58 = scmp.ne.s32.totalorder %s46, %s47
    %p59 = scmp.eq.s32.totalorder %s16, 1
    %p60 = por %p58, %p59
    %p62 = scmp.ne.s32.totalorder %s47, %s61
    %p63 = scmp.eq.s32.totalorder %s16, 0
    %p64 = por %p62, %p63
    %s66 = sadd.s32 %s65, 1
    %p69 = scmp.eq.s32.totalorder %s10, 1
    %p70 = scmp.ne.s32.totalorder %s65, %s67
    %p71 = scmp.eq.s32.totalorder %s10, 0
    %p72 = por %p70, %p71
    %p73 = scmp.ne.s32.totalorder %s65, %s67
    %p74 = scmp.eq.s32.totalorder %s15, 1
    %p75 = por %p73, %p74
    %p76 = scmp.ne.s32.totalorder %s67, %s68
    %p77 = scmp.eq.s32.totalorder %s15, 0
    %p78 = por %p76, %p77
    %p79 = scmp.ne.s32.totalorder %s67, %s68
    %p80 = scmp.eq.s32.totalorder %s16, 1
    %p81 = por %p79, %p80
    %p83 = scmp.ne.s32.totalorder %s68, %s82
    %p84 = scmp.eq.s32.totalorder %s16, 0
    %p85 = por %p83, %p84
    %s87 = sadd.s32 %s86, 1
    %p90 = scmp.eq.s32.totalorder %s10, 1
    %p91 = scmp.ne.s32.totalorder %s86, %s88
    %p92 = scmp.eq.s32.totalorder %s10, 0
    %p93 = por %p91, %p92
    %p94 = scmp.ne.s32.totalorder %s86, %s88
    %p95 = scmp.eq.s32.totalorder %s15, 1
    %p96 = por %p94, %p95
    %p97 = scmp.ne.s32.totalorder %s88, %s89
    %p98 = scmp.eq.s32.totalorder %s15, 0
    %p99 = por %p97, %p98
    %p100 = scmp.ne.s32.totalorder %s88, %s89
    %p101 = scmp.eq.s32.totalorder %s16, 1
    %p102 = por %p100, %p101
    %p104 = scmp.ne.s32.totalorder %s89, %s103
    %p105 = scmp.eq.s32.totalorder %s16, 0
    %p106 = por %p104, %p105
    %s107 = ssub.s32 %s10, %s17
    %p108 = scmp.eq.s32.totalorder %s107, 0
    %s110 = sadd.s32 %s109, 1
    %s111 = scalar_select %p108, %s109, %s110
    %p114 = pneg %p108
    %p115 = scmp.eq.s32.totalorder %s10, 1
    %p116 = por %p114, %p115
    %p117 = scmp.ne.s32.totalorder %s109, %s112
    %p118 = scmp.eq.s32.totalorder %s10, 0
    %p119 = por %p117, %p118
    %p120 = scmp.ne.s32.totalorder %s109, %s112
    %p121 = scmp.eq.s32.totalorder %s15, 1
    %p122 = por %p120, %p121
    %p123 = scmp.ne.s32.totalorder %s112, %s113
    %p124 = scmp.eq.s32.totalorder %s15, 0
    %p125 = por %p123, %p124
    %p126 = scmp.ne.s32.totalorder %s112, %s113
    %p127 = scmp.eq.s32.totalorder %s16, 1
    %p128 = por %p126, %p127
    %p130 = scmp.ne.s32.totalorder %s113, %s129
    %p131 = scmp.eq.s32.totalorder %s16, 0
    %p132 = por %p130, %p131
    %p133 = scmp.le.s32.totalorder 1, %s10
    %p134 = scmp.lt.s32.totalorder %s10, 3
    %p135 = pnand %p133, %p134
    %p136 = pneg %p135
    // Predicated region
    $region9: #{up_block_forward.5} parent=5 // pred_check
      _
    $region10: #{up_block_forward.5} parent=5 // pred_check_branch
      %138 = sbr.rel (%p135) target = $region12
    $region11: #{up_block_forward.5} parent=5 // pred_region
      %s139 = ssub.s32 %s10, 1
      // Predicated region
      $region13: #{up_block_forward.5} parent=11 // pred_check
        %p140 = pneg %p57
      $region14: #{up_block_forward.5} parent=11 // pred_check_branch
        %142 = sbr.rel (%p140) target = $region16
      $region15: #{up_block_forward.5} parent=11 // pred_region
        _
      $region16: #{up_block_forward.5} parent=11 // pred_fallthru
        _
      // Predicated region
      $region17: #{up_block_forward.5} parent=11 // pred_check
        %p143 = pneg %p78
      $region18: #{up_block_forward.5} parent=11 // pred_check_branch
        %145 = sbr.rel (%p143) target = $region20
      $region19: #{up_block_forward.5} parent=11 // pred_region
        _
      $region20: #{up_block_forward.5} parent=11 // pred_fallthru
        _
      // Predicated region
      $region21: #{up_block_forward.5} parent=11 // pred_check
        %p146 = pneg %p99
      $region22: #{up_block_forward.5} parent=11 // pred_check_branch
        %148 = sbr.rel (%p146) target = $region24
      $region23: #{up_block_forward.5} parent=11 // pred_region
        _
      $region24: #{up_block_forward.5} parent=11 // pred_fallthru
        _
    $region12: #{up_block_forward.5} parent=5 // pred_fallthru
      _
    %p149 = scmp.lt.s32.totalorder %s10, 2
    // Predicated region
    $region25: #{up_block_forward.5} parent=5 // pred_check
      %p150 = pneg %p149
    $region26: #{up_block_forward.5} parent=5 // pred_check_branch
      %152 = sbr.rel (%p150) target = $region28
    $region27: #{up_block_forward.5} parent=5 // pred_region
      // Predicated region
      $region29: #{up_block_forward.5} parent=27 // pred_check
        %p153 = pneg %p30
      $region30: #{up_block_forward.5} parent=27 // pred_check_branch
        %155 = sbr.rel (%p153) target = $region32
      $region31: #{up_block_forward.5} parent=27 // pred_region
        %s156 = smul.u32 4, %s10
        %p157 = scmp.lt.s32.totalorder %s156, 7
        %s158 = scalar_select %p157, %s156, 7
        %s159 = smul.addr %s158, 2
        %s160 = smul.addr %s159, 8
        %s161 = scalar_lea.vmem %s0, %s160
        %s162 = smul.u32 4, %s10
      $region32: #{up_block_forward.5} parent=27 // pred_fallthru
        _
    $region28: #{up_block_forward.5} parent=5 // pred_fallthru
      _
    %p163 = scmp.le.s32.totalorder 1, %s10
    %p164 = scmp.lt.s32.totalorder %s10, 3
    %p165 = pnand %p163, %p164
    %p166 = pneg %p165
    // Predicated region
    $region33: #{up_block_forward.5} parent=5 // pred_check
      _
    $region34: #{up_block_forward.5} parent=5 // pred_check_branch
      %168 = sbr.rel (%p165) target = $region36
    $region35: #{up_block_forward.5} parent=5 // pred_region
      %s169 = ssub.s32 %s10, 1
      %s170 = smul.u32 4, %s15
      %p171 = scmp.lt.s32.totalorder %s170, 7
      %s172 = scalar_select %p171, %s170, 7
      %s173 = smul.addr %s172, 2
      %s174 = smul.addr %s173, 8
      %s175 = scalar_lea.vmem %s0, %s174
      %p176 = pneg %p36
      %p177 = pneg %p33
      %p178 = pneg %p57
      %p179 = pneg %p54
      %p180 = pneg %p78
      %p181 = pneg %p75
      %p182 = pneg %p99
      %p183 = pneg %p96
      %p184 = pneg %p125
      %p185 = pneg %p122
      %s186 = smul.u32 4, %s15
      %p187 = scmp.lt.s32.totalorder %s186, 7
      %s188 = scalar_select %p187, %s186, 7
      %s189 = smul.addr %s188, 2
      %s190 = smul.addr %s189, 8
      %s191 = scalar_lea.vmem %s4, %s190
      %s192 = smul.u32 4, %s15
      %p193 = scmp.lt.s32.totalorder %s192, 7
      %s194 = scalar_select %p193, %s192, 7
      %s195 = smul.addr %s194, 2
      %s196 = smul.addr %s195, 8
      %s197 = scalar_lea.vmem %s0, %s196
      %s198 = smul.u32 4, %s15
      %s199 = smul.u32 4, %s15
      %p200 = scmp.lt.s32.totalorder %s199, 7
      %s201 = scalar_select %p200, %s199, 7
      %s202 = smul.addr %s201, 2
      %s203 = smul.addr %s202, 8
      %s204 = scalar_lea.vmem %s4, %s203
      %s205 = smul.u32 4, %s15
      %v206 = vld [vmem:[%s197] sm:$0xff]
      %v207 = vld [vmem:[%s197 + $0x8] sm:$0xff]
      %v208 = vld [vmem:[%s197 + $0x10] sm:$0xff]
      %v209 = vld [vmem:[%s197 + $0x18] sm:$0xff]
      %v210 = vld [vmem:[%s197 + $0x20] sm:$0xff]
      %v211 = vld [vmem:[%s197 + $0x28] sm:$0xff]
      %v212 = vld [vmem:[%s197 + $0x30] sm:$0xff]
      %v213 = vld [vmem:[%s197 + $0x38] sm:$0xff]
      %v214 = vld [vmem:[%s1] sm:$0x3]
      %v216 = vperm.slane %v214, 0
      %v217 = vperm.slane %v214, 1
      %v220 = vmul.f32 %v206, %v216
      %v221 = vmul.f32 %v207, %v217
      %v222 = vmul.f32 %v208, %v216
      %v223 = vmul.f32 %v209, %v217
      %v224 = vmul.f32 %v210, %v216
      %v225 = vmul.f32 %v211, %v217
      %v226 = vmul.f32 %v212, %v216
      %v227 = vmul.f32 %v213, %v217
      %v228 = vld [vmem:[%s2] sm:$0x3]
      %v230 = vperm.slane %v228, 0
      %v231 = vperm.slane %v228, 1
      %v234 = vadd.f32 %v220, %v230
      %v235 = vadd.f32 %v221, %v231
      %v236 = vadd.f32 %v222, %v230
      %v237 = vadd.f32 %v223, %v231
      %v238 = vadd.f32 %v224, %v230
      %v239 = vadd.f32 %v225, %v231
      %v240 = vadd.f32 %v226, %v230
      %v241 = vadd.f32 %v227, %v231
      %v242 = vmin.f32 %v234, 0.0
      %v243 = vmin.f32 %v235, 0.0
      %v244 = vmin.f32 %v236, 0.0
      %v245 = vmin.f32 %v237, 0.0
      %v246 = vmin.f32 %v238, 0.0
      %v247 = vmin.f32 %v239, 0.0
      %v248 = vmin.f32 %v240, 0.0
      %v249 = vmin.f32 %v241, 0.0
      %v250 = vmul.f32 %v242, 1.442695
      %v251 = vpow.pop %v250
      %v252 = vmul.f32 %v243, 1.442695
      %v253 = vpow.pop %v252
      %v254 = vmul.f32 %v244, 1.442695
      %v255 = vpow.pop %v254
      %v256 = vmul.f32 %v245, 1.442695
      %v257 = vpow.pop %v256
      %v258 = vmul.f32 %v246, 1.442695
      %v259 = vpow.pop %v258
      %v260 = vmul.f32 %v247, 1.442695
      %v261 = vpow.pop %v260
      %v262 = vmul.f32 %v248, 1.442695
      %v263 = vpow.pop %v262
      %v264 = vmul.f32 %v249, 1.442695
      %v265 = vpow.pop %v264
      %v266 = vsub.f32 %v251, 1.0
      %v267 = vsub.f32 %v253, 1.0
      %v268 = vsub.f32 %v255, 1.0
      %v269 = vsub.f32 %v257, 1.0
      %v270 = vsub.f32 %v259, 1.0
      %v271 = vsub.f32 %v261, 1.0
      %v272 = vsub.f32 %v263, 1.0
      %v273 = vsub.f32 %v265, 1.0
      %vm274 = vcmp.gt.f32.partialorder %v234, 0.0
      %vm275 = vcmp.gt.f32.partialorder %v235, 0.0
      %vm276 = vcmp.gt.f32.partialorder %v236, 0.0
      %vm277 = vcmp.gt.f32.partialorder %v237, 0.0
      %vm278 = vcmp.gt.f32.partialorder %v238, 0.0
      %vm279 = vcmp.gt.f32.partialorder %v239, 0.0
      %vm280 = vcmp.gt.f32.partialorder %v240, 0.0
      %vm281 = vcmp.gt.f32.partialorder %v241, 0.0
      %v282 = vld [vmem:[%s3] sm:$0x3]
      %vm283 = vcmp.eq.f32.partialorder %v282, 0.0
      %v284 = vsel %vm283, 1, 0
      %v285 = vperm.slane %v284, 0
      %v286 = vperm.slane %v284, 1
      %vm287 = vcmp.eq.s32.totalorder %v285, 1
      %vm288 = vcmp.eq.s32.totalorder %v286, 1
      %vm289 = vmor %vm274, %vm287
      %vm290 = vmor %vm275, %vm288
      %vm291 = vmor %vm276, %vm287
      %vm292 = vmor %vm277, %vm288
      %vm293 = vmor %vm278, %vm287
      %vm294 = vmor %vm279, %vm288
      %vm295 = vmor %vm280, %vm287
      %vm296 = vmor %vm281, %vm288
      %v297 = vsel %vm289, %v234, %v266
      %v298 = vsel %vm290, %v235, %v267
      %v299 = vsel %vm291, %v236, %v268
      %v300 = vsel %vm292, %v237, %v269
      %v301 = vsel %vm293, %v238, %v270
      %v302 = vsel %vm294, %v239, %v271
      %v303 = vsel %vm295, %v240, %v272
      %v304 = vsel %vm296, %v241, %v273
      %305 = vst [vmem:[%s204] sm:$0xff] %v297
      %306 = vst [vmem:[%s204 + $0x8] sm:$0xff] %v298
      %307 = vst [vmem:[%s204 + $0x10] sm:$0xff] %v299
      %308 = vst [vmem:[%s204 + $0x18] sm:$0xff] %v300
      %309 = vst [vmem:[%s204 + $0x20] sm:$0xff] %v301
      %310 = vst [vmem:[%s204 + $0x28] sm:$0xff] %v302
      %311 = vst [vmem:[%s204 + $0x30] sm:$0xff] %v303
      %312 = vst [vmem:[%s204 + $0x38] sm:$0xff] %v304
      %s313 = smul.u32 4, %s15
      %p314 = scmp.lt.s32.totalorder %s313, 7
      %s315 = scalar_select %p314, %s313, 7
      %s316 = smul.addr %s315, 2
      %s317 = smul.addr %s316, 8
      %s318 = scalar_lea.vmem %s4, %s317
      // Predicated region
      $region37: #{up_block_forward.5} parent=35 // pred_check
        %p319 = pneg %p122
      $region38: #{up_block_forward.5} parent=35 // pred_check_branch
        %321 = sbr.rel (%p319) target = $region40
      $region39: #{up_block_forward.5} parent=35 // pred_region
        %s322 = smul.u32 4, %s15
      $region40: #{up_block_forward.5} parent=35 // pred_fallthru
        _
    $region36: #{up_block_forward.5} parent=5 // pred_fallthru
      _
    %p323 = scmp.le.s32.totalorder 2, %s10
    // Predicated region
    $region41: #{up_block_forward.5} parent=5 // pred_check
      %p324 = pneg %p323
    $region42: #{up_block_forward.5} parent=5 // pred_check_branch
      %326 = sbr.rel (%p324) target = $region44
    $region43: #{up_block_forward.5} parent=5 // pred_region
      %s327 = ssub.s32 %s10, 2
      // Predicated region
      $region45: #{up_block_forward.5} parent=43 // pred_check
        %p328 = pneg %p128
      $region46: #{up_block_forward.5} parent=43 // pred_check_branch
        %330 = sbr.rel (%p328) target = $region48
      $region47: #{up_block_forward.5} parent=43 // pred_region
        %s331 = smul.u32 4, %s16
        %p332 = scmp.lt.s32.totalorder %s331, 7
        %s333 = scalar_select %p332, %s331, 7
        %s334 = smul.addr %s333, 2
        %s335 = smul.addr %s334, 8
        %s336 = scalar_lea.vmem %s4, %s335
      $region48: #{up_block_forward.5} parent=43 // pred_fallthru
        _
    $region44: #{up_block_forward.5} parent=5 // pred_fallthru
      _
  $region6: #{up_block_forward.5} parent=0 // loop_footer
    %s14 = sadd.s32 1, %s10
  $region7: #{up_block_forward.5} parent=0 // loop_footer_branch
    %9 = sbr.rel target = $region3
  $region8: #{up_block_forward.5} parent=0 // loop_exit
    _

// kernel: up_block_forward.4
$region0: #{up_block_forward.4}
  #allocation0 [shape = 'u32[]', space=smem, size = 0x4, offset = 0x4, fixed_abs, tag = 'smem constant byte address 0x4 - core index']
  #allocation1 [shape = 'u32[72,128]{1,0:T(1,128)}', space=vmem, size = 0x9000, scoped, tag = 'internal scratch']
  %s0 = inlined_call_operand.vmem [shape: f32[512,8], index: 0, kind: input, shape index: {}]
  %s1 = inlined_call_operand.vmem [shape: f32[8,32], index: 1, kind: input, shape index: {}]
  %s2 = inlined_call_operand.vmem [shape: f32[1,32], index: 2, kind: input, shape index: {}]
  %s3 = inlined_call_operand.vmem [shape: f32[512,32], index: 3, kind: output, shape index: {0}]
  %s4 = inlined_call_operand.vmem [shape: f32[2,2,32], index: 4, kind: output, shape index: {1}]
  %5 = xla_tuple %s3, %s4
  %s6 = sld [smem:[#allocation0]]
  $region53: #{up_block_forward.4} parent=0
    _
  %s8 = ssub.s32 1, %s6
  %s9 = scalar_select 0, %s8, %s6
  loop: start=0, step=1, limit=4
  $region2: #{up_block_forward.4} parent=0 // loop_pre_header
    _
  $region3: #{up_block_forward.4} parent=0 // loop_header
    %s11 = sphi 0, %s15
    %p12 = scmp.ge.s32.totalorder %s11, 4
    %s21 = sphi 0, %s23
    %s24 = sphi 0, %s21
    %s25 = sphi 0, %s24
    %s41 = sphi 0, %s25
    %s45 = sphi 0, %s45
    %s47 = sphi 0, %s45
    %s48 = sphi 0, %s47
    %s62 = sphi 0, %s48
    %s66 = sphi 0, %s66
    %s68 = sphi 0, %s66
    %s69 = sphi 0, %s68
    %s83 = sphi 0, %s69
    %s89 = sphi 0, %s91
    %s92 = sphi 0, %s89
    %s93 = sphi 0, %s92
    %s109 = sphi 0, %s93
    %s115 = sphi 0, %s117
    %s118 = sphi 0, %s115
    %s119 = sphi 0, %s118
    %s135 = sphi 0, %s119
  $region4: #{up_block_forward.4} parent=0 // loop_header_branch
    %14 = sbr.rel (%p12) target = $region8
  $region5: #{up_block_forward.4} parent=0 // loop_body
    %s16 = ssub.s32 %s11, 1
    %s17 = ssub.s32 %s11, 2
    %s18 = sadd.s32 %s11, 1
    %s19 = ssub.s32 %s11, %s18
    %p20 = scmp.eq.s32.totalorder %s19, 0
    %s22 = sadd.s32 %s21, 1
    %s23 = scalar_select %p20, %s21, %s22
    %p26 = pneg %p20
    %p27 = scmp.eq.s32.totalorder %s11, 1
    %p28 = por %p26, %p27
    %p29 = scmp.ne.s32.totalorder %s21, %s24
    %p30 = scmp.eq.s32.totalorder %s11, 0
    %p31 = por %p29, %p30
    %p32 = scmp.ne.s32.totalorder %s21, %s24
    %p33 = scmp.eq.s32.totalorder %s16, 1
    %p34 = por %p32, %p33
    %p35 = scmp.ne.s32.totalorder %s24, %s25
    %p36 = scmp.eq.s32.totalorder %s16, 0
    %p37 = por %p35, %p36
    %p38 = scmp.ne.s32.totalorder %s24, %s25
    %p39 = scmp.eq.s32.totalorder %s17, 1
    %p40 = por %p38, %p39
    %p42 = scmp.ne.s32.totalorder %s25, %s41
    %p43 = scmp.eq.s32.totalorder %s17, 0
    %p44 = por %p42, %p43
    %s46 = sadd.s32 %s45, 1
    %p49 = scmp.eq.s32.totalorder %s11, 1
    %p50 = scmp.ne.s32.totalorder %s45, %s47
    %p51 = scmp.eq.s32.totalorder %s11, 0
    %p52 = por %p50, %p51
    %p53 = scmp.ne.s32.totalorder %s45, %s47
    %p54 = scmp.eq.s32.totalorder %s16, 1
    %p55 = por %p53, %p54
    %p56 = scmp.ne.s32.totalorder %s47, %s48
    %p57 = scmp.eq.s32.totalorder %s16, 0
    %p58 = por %p56, %p57
    %p59 = scmp.ne.s32.totalorder %s47, %s48
    %p60 = scmp.eq.s32.totalorder %s17, 1
    %p61 = por %p59, %p60
    %p63 = scmp.ne.s32.totalorder %s48, %s62
    %p64 = scmp.eq.s32.totalorder %s17, 0
    %p65 = por %p63, %p64
    %s67 = sadd.s32 %s66, 1
    %p70 = scmp.eq.s32.totalorder %s11, 1
    %p71 = scmp.ne.s32.totalorder %s66, %s68
    %p72 = scmp.eq.s32.totalorder %s11, 0
    %p73 = por %p71, %p72
    %p74 = scmp.ne.s32.totalorder %s66, %s68
    %p75 = scmp.eq.s32.totalorder %s16, 1
    %p76 = por %p74, %p75
    %p77 = scmp.ne.s32.totalorder %s68, %s69
    %p78 = scmp.eq.s32.totalorder %s16, 0
    %p79 = por %p77, %p78
    %p80 = scmp.ne.s32.totalorder %s68, %s69
    %p81 = scmp.eq.s32.totalorder %s17, 1
    %p82 = por %p80, %p81
    %p84 = scmp.ne.s32.totalorder %s69, %s83
    %p85 = scmp.eq.s32.totalorder %s17, 0
    %p86 = por %p84, %p85
    %s87 = ssub.s32 %s11, %s18
    %p88 = scmp.eq.s32.totalorder %s87, 0
    %s90 = sadd.s32 %s89, 1
    %s91 = scalar_select %p88, %s89, %s90
    %p94 = pneg %p88
    %p95 = scmp.eq.s32.totalorder %s11, 1
    %p96 = por %p94, %p95
    %p97 = scmp.ne.s32.totalorder %s89, %s92
    %p98 = scmp.eq.s32.totalorder %s11, 0
    %p99 = por %p97, %p98
    %p100 = scmp.ne.s32.totalorder %s89, %s92
    %p101 = scmp.eq.s32.totalorder %s16, 1
    %p102 = por %p100, %p101
    %p103 = scmp.ne.s32.totalorder %s92, %s93
    %p104 = scmp.eq.s32.totalorder %s16, 0
    %p105 = por %p103, %p104
    %p106 = scmp.ne.s32.totalorder %s92, %s93
    %p107 = scmp.eq.s32.totalorder %s17, 1
    %p108 = por %p106, %p107
    %p110 = scmp.ne.s32.totalorder %s93, %s109
    %p111 = scmp.eq.s32.totalorder %s17, 0
    %p112 = por %p110, %p111
    %s113 = ssub.s32 %s11, %s18
    %p114 = scmp.eq.s32.totalorder %s113, 0
    %s116 = sadd.s32 %s115, 1
    %s117 = scalar_select %p114, %s115, %s116
    %p120 = pneg %p114
    %p121 = scmp.eq.s32.totalorder %s11, 1
    %p122 = por %p120, %p121
    %p123 = scmp.ne.s32.totalorder %s115, %s118
    %p124 = scmp.eq.s32.totalorder %s11, 0
    %p125 = por %p123, %p124
    %p126 = scmp.ne.s32.totalorder %s115, %s118
    %p127 = scmp.eq.s32.totalorder %s16, 1
    %p128 = por %p126, %p127
    %p129 = scmp.ne.s32.totalorder %s118, %s119
    %p130 = scmp.eq.s32.totalorder %s16, 0
    %p131 = por %p129, %p130
    %p132 = scmp.ne.s32.totalorder %s118, %s119
    %p133 = scmp.eq.s32.totalorder %s17, 1
    %p134 = por %p132, %p133
    %p136 = scmp.ne.s32.totalorder %s119, %s135
    %p137 = scmp.eq.s32.totalorder %s17, 0
    %p138 = por %p136, %p137
    %p139 = scmp.le.s32.totalorder 1, %s11
    %p140 = scmp.lt.s32.totalorder %s11, 3
    %p141 = pnand %p139, %p140
    %p142 = pneg %p141
    // Predicated region
    $region9: #{up_block_forward.4} parent=5 // pred_check
      _
    $region10: #{up_block_forward.4} parent=5 // pred_check_branch
      %144 = sbr.rel (%p141) target = $region12
    $region11: #{up_block_forward.4} parent=5 // pred_region
      %s145 = ssub.s32 %s11, 1
      // Predicated region
      $region13: #{up_block_forward.4} parent=11 // pred_check
        %p146 = pneg %p58
      $region14: #{up_block_forward.4} parent=11 // pred_check_branch
        %148 = sbr.rel (%p146) target = $region16
      $region15: #{up_block_forward.4} parent=11 // pred_region
        _
      $region16: #{up_block_forward.4} parent=11 // pred_fallthru
        _
      // Predicated region
      $region17: #{up_block_forward.4} parent=11 // pred_check
        %p149 = pneg %p79
      $region18: #{up_block_forward.4} parent=11 // pred_check_branch
        %151 = sbr.rel (%p149) target = $region20
      $region19: #{up_block_forward.4} parent=11 // pred_region
        _
      $region20: #{up_block_forward.4} parent=11 // pred_fallthru
        _
    $region12: #{up_block_forward.4} parent=5 // pred_fallthru
      _
    %p152 = scmp.lt.s32.totalorder %s11, 2
    // Predicated region
    $region21: #{up_block_forward.4} parent=5 // pred_check
      %p153 = pneg %p152
    $region22: #{up_block_forward.4} parent=5 // pred_check_branch
      %155 = sbr.rel (%p153) target = $region24
    $region23: #{up_block_forward.4} parent=5 // pred_region
      // Predicated region
      $region25: #{up_block_forward.4} parent=23 // pred_check
        %p156 = pneg %p31
      $region26: #{up_block_forward.4} parent=23 // pred_check_branch
        %158 = sbr.rel (%p156) target = $region28
      $region27: #{up_block_forward.4} parent=23 // pred_region
        %s159 = smul.u32 32, %s11
        %p160 = scmp.lt.s32.totalorder %s159, 63
        %s161 = scalar_select %p160, %s159, 63
        %s162 = smul.addr %s161, 8
        %s163 = scalar_lea.vmem %s0, %s162
        %s164 = smul.u32 32, %s11
      $region28: #{up_block_forward.4} parent=23 // pred_fallthru
        _
    $region24: #{up_block_forward.4} parent=5 // pred_fallthru
      _
    %p165 = scmp.le.s32.totalorder 1, %s11
    %p166 = scmp.lt.s32.totalorder %s11, 3
    %p167 = pnand %p165, %p166
    %p168 = pneg %p167
    // Predicated region
    $region29: #{up_block_forward.4} parent=5 // pred_check
      _
    $region30: #{up_block_forward.4} parent=5 // pred_check_branch
      %170 = sbr.rel (%p167) target = $region32
    $region31: #{up_block_forward.4} parent=5 // pred_region
      %s171 = ssub.s32 %s11, 1
      %s172 = smul.u32 32, %s16
      %p173 = scmp.lt.s32.totalorder %s172, 63
      %s174 = scalar_select %p173, %s172, 63
      %s175 = smul.addr %s174, 8
      %s176 = scalar_lea.vmem %s0, %s175
      %p177 = pneg %p37
      %p178 = pneg %p34
      %p179 = pneg %p58
      %p180 = pneg %p55
      %p181 = pneg %p79
      %p182 = pneg %p76
      %p183 = pneg %p105
      %p184 = pneg %p102
      %s185 = smul.u32 32, %s16
      %p186 = scmp.lt.s32.totalorder %s185, 63
      %s187 = scalar_select %p186, %s185, 63
      %s188 = smul.addr %s187, 8
      %s189 = scalar_lea.vmem %s3, %s188
      %p190 = pneg %p131
      %p191 = pneg %p128
      %p192 = scmp.lt.s32.totalorder %s16, 1
      %s193 = scalar_select %p192, %s16, 1
      %s194 = smul.addr %s193, 2
      %s195 = scalar_lea.vmem %s4, %s194
      %s196 = smul.u32 32, %s16
      %p197 = scmp.lt.s32.totalorder %s196, 63
      %s198 = scalar_select %p197, %s196, 63
      %s199 = smul.addr %s198, 8
      %s200 = scalar_lea.vmem %s0, %s199
      %s201 = smul.u32 32, %s16
      %s202 = smul.u32 32, %s16
      %p203 = scmp.lt.s32.totalorder %s202, 63
      %s204 = scalar_select %p203, %s202, 63
      %s205 = smul.addr %s204, 8
      %s206 = scalar_lea.vmem %s3, %s205
      %s207 = smul.u32 32, %s16
      %p208 = scmp.lt.s32.totalorder %s16, 1
      %s209 = scalar_select %p208, %s16, 1
      %s210 = smul.addr %s209, 2
      %s211 = scalar_lea.vmem %s4, %s210
      %v212 = vld [vmem:[%s200] sm:$0xff]
      %v213 = vld [vmem:[%s200 + $0x8] sm:$0xff]
      %v214 = vld [vmem:[%s200 + $0x10] sm:$0xff]
      %v215 = vld [vmem:[%s200 + $0x18] sm:$0xff]
      %v216 = vld [vmem:[%s200 + $0x20] sm:$0xff]
      %v217 = vld [vmem:[%s200 + $0x28] sm:$0xff]
      %v218 = vld [vmem:[%s200 + $0x30] sm:$0xff]
      %v219 = vld [vmem:[%s200 + $0x38] sm:$0xff]
      %v220 = vld [vmem:[%s200 + $0x40] sm:$0xff]
      %v221 = vld [vmem:[%s200 + $0x48] sm:$0xff]
      %v222 = vld [vmem:[%s200 + $0x50] sm:$0xff]
      %v223 = vld [vmem:[%s200 + $0x58] sm:$0xff]
      %v224 = vld [vmem:[%s200 + $0x60] sm:$0xff]
      %v225 = vld [vmem:[%s200 + $0x68] sm:$0xff]
      %v226 = vld [vmem:[%s200 + $0x70] sm:$0xff]
      %v227 = vld [vmem:[%s200 + $0x78] sm:$0xff]
      %v228 = vld [vmem:[%s200 + $0x80] sm:$0xff]
      %v229 = vld [vmem:[%s200 + $0x88] sm:$0xff]
      %v230 = vld [vmem:[%s200 + $0x90] sm:$0xff]
      %v231 = vld [vmem:[%s200 + $0x98] sm:$0xff]
      %v232 = vld [vmem:[%s200 + $0xa0] sm:$0xff]
      %v233 = vld [vmem:[%s200 + $0xa8] sm:$0xff]
      %v234 = vld [vmem:[%s200 + $0xb0] sm:$0xff]
      %v235 = vld [vmem:[%s200 + $0xb8] sm:$0xff]
      %v236 = vld [vmem:[%s200 + $0xc0] sm:$0xff]
      %v237 = vld [vmem:[%s200 + $0xc8] sm:$0xff]
      %v238 = vld [vmem:[%s200 + $0xd0] sm:$0xff]
      %v239 = vld [vmem:[%s200 + $0xd8] sm:$0xff]
      %v240 = vld [vmem:[%s200 + $0xe0] sm:$0xff]
      %v241 = vld [vmem:[%s200 + $0xe8] sm:$0xff]
      %v242 = vld [vmem:[%s200 + $0xf0] sm:$0xff]
      %v243 = vld [vmem:[%s200 + $0xf8] sm:$0xff]
      %v244 = vld [vmem:[%s1] sm:$0xff]
      %v245 = vld [vmem:[%s2] sm:$0x1]
      %v247 = vperm.slane %v245, 0
      %vm249 = vcmask 64512
      %v251 = vsel %vm249, %v212, 0
      %v254 = vsel %vm249, %v213, 0
      %v257 = vsel %vm249, %v214, 0
      %v260 = vsel %vm249, %v215, 0
      %v263 = vsel %vm249, %v216, 0
      %v266 = vsel %vm249, %v217, 0
      %v269 = vsel %vm249, %v218, 0
      %v272 = vsel %vm249, %v219, 0
      %v275 = vsel %vm249, %v220, 0
      %v278 = vsel %vm249, %v221, 0
      %v281 = vsel %vm249, %v222, 0
      %v284 = vsel %vm249, %v223, 0
      %v287 = vsel %vm249, %v224, 0
      %v290 = vsel %vm249, %v225, 0
      %v293 = vsel %vm249, %v226, 0
      %v296 = vsel %vm249, %v227, 0
      %v299 = vsel %vm249, %v228, 0
      %v302 = vsel %vm249, %v229, 0
      %v305 = vsel %vm249, %v230, 0
      %v308 = vsel %vm249, %v231, 0
      %v311 = vsel %vm249, %v232, 0
      %v314 = vsel %vm249, %v233, 0
      %v317 = vsel %vm249, %v234, 0
      %v320 = vsel %vm249, %v235, 0
      %v323 = vsel %vm249, %v236, 0
      %v326 = vsel %vm249, %v237, 0
      %v329 = vsel %vm249, %v238, 0
      %v332 = vsel %vm249, %v239, 0
      %v335 = vsel %vm249, %v240, 0
      %v338 = vsel %vm249, %v241, 0
      %v341 = vsel %vm249, %v242, 0
      %v344 = vsel %vm249, %v243, 0
      %346 = vmatpush.msra.mxu0 0.0
      %347 = vmatpush.msra.mxu0 0.0
      %348 = vmatpush.msra.mxu0 0.0
      %349 = vmatpush.msra.mxu0 0.0
      %350 = vmatpush.msra.mxu0 0.0
      %351 = vmatpush.msra.mxu0 0.0
      %352 = vmatpush.msra.mxu0 0.0
      %353 = vmatpush.msra.mxu0 0.0
      %354 = vmatpush.msra.mxu0 0.0
      %355 = vmatpush.msra.mxu0 0.0
      %356 = vmatpush.msra.mxu0 0.0
      %357 = vmatpush.msra.mxu0 0.0
      %358 = vmatpush.msra.mxu0 0.0
      %359 = vmatpush.msra.mxu0 0.0
      %360 = vmatpush.msra.mxu0 0.0
      %361 = vmatpush.msra.mxu0 %v244
      %362 = vmatmul.f32.gmra.mxu0 %v251
      %v363 = vpop.f32.mrf.mxu0
      %v364 = vadd.f32 %v247, %v363
      %365 = vmatmul.f32.gmra.mxu0 %v254
      %v366 = vpop.f32.mrf.mxu0
      %v367 = vadd.f32 %v247, %v366
      %368 = vmatmul.f32.gmra.mxu0 %v257
      %v369 = vpop.f32.mrf.mxu0
      %v370 = vadd.f32 %v247, %v369
      %371 = vmatmul.f32.gmra.mxu0 %v260
      %v372 = vpop.f32.mrf.mxu0
      %v373 = vadd.f32 %v247, %v372
      %374 = vmatmul.f32.gmra.mxu0 %v263
      %v375 = vpop.f32.mrf.mxu0
      %v376 = vadd.f32 %v247, %v375
      %377 = vmatmul.f32.gmra.mxu0 %v266
      %v378 = vpop.f32.mrf.mxu0
      %v379 = vadd.f32 %v247, %v378
      %380 = vmatmul.f32.gmra.mxu0 %v269
      %v381 = vpop.f32.mrf.mxu0
      %v382 = vadd.f32 %v247, %v381
      %383 = vmatmul.f32.gmra.mxu0 %v272
      %v384 = vpop.f32.mrf.mxu0
      %v385 = vadd.f32 %v247, %v384
      %386 = vmatmul.f32.gmra.mxu0 %v275
      %v387 = vpop.f32.mrf.mxu0
      %v388 = vadd.f32 %v247, %v387
      %389 = vmatmul.f32.gmra.mxu0 %v278
      %v390 = vpop.f32.mrf.mxu0
      %v391 = vadd.f32 %v247, %v390
      %392 = vmatmul.f32.gmra.mxu0 %v281
      %v393 = vpop.f32.mrf.mxu0
      %v394 = vadd.f32 %v247, %v393
      %395 = vmatmul.f32.gmra.mxu0 %v284
      %v396 = vpop.f32.mrf.mxu0
      %v397 = vadd.f32 %v247, %v396
      %398 = vmatmul.f32.gmra.mxu0 %v287
      %v399 = vpop.f32.mrf.mxu0
      %v400 = vadd.f32 %v247, %v399
      %401 = vmatmul.f32.gmra.mxu0 %v290
      %v402 = vpop.f32.mrf.mxu0
      %v403 = vadd.f32 %v247, %v402
      %404 = vmatmul.f32.gmra.mxu0 %v293
      %v405 = vpop.f32.mrf.mxu0
      %v406 = vadd.f32 %v247, %v405
      %407 = vmatmul.f32.gmra.mxu0 %v296
      %v408 = vpop.f32.mrf.mxu0
      %v409 = vadd.f32 %v247, %v408
      %410 = vmatmul.f32.gmra.mxu0 %v299
      %v411 = vpop.f32.mrf.mxu0
      %v412 = vadd.f32 %v247, %v411
      %413 = vmatmul.f32.gmra.mxu0 %v302
      %v414 = vpop.f32.mrf.mxu0
      %v415 = vadd.f32 %v247, %v414
      %416 = vmatmul.f32.gmra.mxu0 %v305
      %v417 = vpop.f32.mrf.mxu0
      %v418 = vadd.f32 %v247, %v417
      %419 = vmatmul.f32.gmra.mxu0 %v308
      %v420 = vpop.f32.mrf.mxu0
      %v421 = vadd.f32 %v247, %v420
      %422 = vmatmul.f32.gmra.mxu0 %v311
      %v423 = vpop.f32.mrf.mxu0
      %v424 = vadd.f32 %v247, %v423
      %425 = vmatmul.f32.gmra.mxu0 %v314
      %v426 = vpop.f32.mrf.mxu0
      %v427 = vadd.f32 %v247, %v426
      %428 = vmatmul.f32.gmra.mxu0 %v317
      %v429 = vpop.f32.mrf.mxu0
      %v430 = vadd.f32 %v247, %v429
      %431 = vmatmul.f32.gmra.mxu0 %v320
      %v432 = vpop.f32.mrf.mxu0
      %v433 = vadd.f32 %v247, %v432
      %434 = vmatmul.f32.gmra.mxu0 %v323
      %v435 = vpop.f32.mrf.mxu0
      %v436 = vadd.f32 %v247, %v435
      %437 = vmatmul.f32.gmra.mxu0 %v326
      %v438 = vpop.f32.mrf.mxu0
      %v439 = vadd.f32 %v247, %v438
      %440 = vmatmul.f32.gmra.mxu0 %v329
      %v441 = vpop.f32.mrf.mxu0
      %v442 = vadd.f32 %v247, %v441
      %443 = vmatmul.f32.gmra.mxu0 %v332
      %v444 = vpop.f32.mrf.mxu0
      %v445 = vadd.f32 %v247, %v444
      %446 = vmatmul.f32.gmra.mxu0 %v335
      %v447 = vpop.f32.mrf.mxu0
      %v448 = vadd.f32 %v247, %v447
      %449 = vmatmul.f32.gmra.mxu0 %v338
      %v450 = vpop.f32.mrf.mxu0
      %v451 = vadd.f32 %v247, %v450
      %452 = vmatmul.f32.gmra.mxu0 %v341
      %v453 = vpop.f32.mrf.mxu0
      %v454 = vadd.f32 %v247, %v453
      %455 = vmatmul.f32.gmra.mxu0 %v344
      %v456 = vpop.f32.mrf.mxu0
      %v457 = vadd.f32 %v247, %v456
      %458 = vdwg.mxu0
      %vm459 = vcmask 261120
      %460 = vst.msk [vmem:[%s206] sm:$0xff] %vm459, %v364
      %461 = vst.msk [vmem:[%s206 + $0x8] sm:$0xff] %vm459, %v367
      %462 = vst.msk [vmem:[%s206 + $0x10] sm:$0xff] %vm459, %v370
      %463 = vst.msk [vmem:[%s206 + $0x18] sm:$0xff] %vm459, %v373
      %464 = vst.msk [vmem:[%s206 + $0x20] sm:$0xff] %vm459, %v376
      %465 = vst.msk [vmem:[%s206 + $0x28] sm:$0xff] %vm459, %v379
      %466 = vst.msk [vmem:[%s206 + $0x30] sm:$0xff] %vm459, %v382
      %467 = vst.msk [vmem:[%s206 + $0x38] sm:$0xff] %vm459, %v385
      %468 = vst.msk [vmem:[%s206 + $0x40] sm:$0xff] %vm459, %v388
      %469 = vst.msk [vmem:[%s206 + $0x48] sm:$0xff] %vm459, %v391
      %470 = vst.msk [vmem:[%s206 + $0x50] sm:$0xff] %vm459, %v394
      %471 = vst.msk [vmem:[%s206 + $0x58] sm:$0xff] %vm459, %v397
      %472 = vst.msk [vmem:[%s206 + $0x60] sm:$0xff] %vm459, %v400
      %473 = vst.msk [vmem:[%s206 + $0x68] sm:$0xff] %vm459, %v403
      %474 = vst.msk [vmem:[%s206 + $0x70] sm:$0xff] %vm459, %v406
      %475 = vst.msk [vmem:[%s206 + $0x78] sm:$0xff] %vm459, %v409
      %476 = vst.msk [vmem:[%s206 + $0x80] sm:$0xff] %vm459, %v412
      %477 = vst.msk [vmem:[%s206 + $0x88] sm:$0xff] %vm459, %v415
      %478 = vst.msk [vmem:[%s206 + $0x90] sm:$0xff] %vm459, %v418
      %479 = vst.msk [vmem:[%s206 + $0x98] sm:$0xff] %vm459, %v421
      %480 = vst.msk [vmem:[%s206 + $0xa0] sm:$0xff] %vm459, %v424
      %481 = vst.msk [vmem:[%s206 + $0xa8] sm:$0xff] %vm459, %v427
      %482 = vst.msk [vmem:[%s206 + $0xb0] sm:$0xff] %vm459, %v430
      %483 = vst.msk [vmem:[%s206 + $0xb8] sm:$0xff] %vm459, %v433
      %484 = vst.msk [vmem:[%s206 + $0xc0] sm:$0xff] %vm459, %v436
      %485 = vst.msk [vmem:[%s206 + $0xc8] sm:$0xff] %vm459, %v439
      %486 = vst.msk [vmem:[%s206 + $0xd0] sm:$0xff] %vm459, %v442
      %487 = vst.msk [vmem:[%s206 + $0xd8] sm:$0xff] %vm459, %v445
      %488 = vst.msk [vmem:[%s206 + $0xe0] sm:$0xff] %vm459, %v448
      %489 = vst.msk [vmem:[%s206 + $0xe8] sm:$0xff] %vm459, %v451
      %490 = vst.msk [vmem:[%s206 + $0xf0] sm:$0xff] %vm459, %v454
      %491 = vst.msk [vmem:[%s206 + $0xf8] sm:$0xff] %vm459, %v457
      %v492 = vsel %vm459, %v364, 0.0
      %v493 = vsel %vm459, %v367, 0.0
      %v494 = vadd.f32 %v492, %v493
      %v495 = vsel %vm459, %v370, 0.0
      %v496 = vadd.f32 %v494, %v495
      %v497 = vsel %vm459, %v373, 0.0
      %v498 = vadd.f32 %v496, %v497
      %v499 = vsel %vm459, %v376, 0.0
      %v500 = vadd.f32 %v498, %v499
      %v501 = vsel %vm459, %v379, 0.0
      %v502 = vadd.f32 %v500, %v501
      %v503 = vsel %vm459, %v382, 0.0
      %v504 = vadd.f32 %v502, %v503
      %v505 = vsel %vm459, %v385, 0.0
      %v506 = vadd.f32 %v504, %v505
      %v507 = vsel %vm459, %v388, 0.0
      %v508 = vadd.f32 %v506, %v507
      %v509 = vsel %vm459, %v391, 0.0
      %v510 = vadd.f32 %v508, %v509
      %v511 = vsel %vm459, %v394, 0.0
      %v512 = vadd.f32 %v510, %v511
      %v513 = vsel %vm459, %v397, 0.0
      %v514 = vadd.f32 %v512, %v513
      %v515 = vsel %vm459, %v400, 0.0
      %v516 = vadd.f32 %v514, %v515
      %v517 = vsel %vm459, %v403, 0.0
      %v518 = vadd.f32 %v516, %v517
      %v519 = vsel %vm459, %v406, 0.0
      %v520 = vadd.f32 %v518, %v519
      %v521 = vsel %vm459, %v409, 0.0
      %v522 = vadd.f32 %v520, %v521
      %v523 = vsel %vm459, %v412, 0.0
      %v524 = vadd.f32 %v522, %v523
      %v525 = vsel %vm459, %v415, 0.0
      %v526 = vadd.f32 %v524, %v525
      %v527 = vsel %vm459, %v418, 0.0
      %v528 = vadd.f32 %v526, %v527
      %v529 = vsel %vm459, %v421, 0.0
      %v530 = vadd.f32 %v528, %v529
      %v531 = vsel %vm459, %v424, 0.0
      %v532 = vadd.f32 %v530, %v531
      %v533 = vsel %vm459, %v427, 0.0
      %v534 = vadd.f32 %v532, %v533
      %v535 = vsel %vm459, %v430, 0.0
      %v536 = vadd.f32 %v534, %v535
      %v537 = vsel %vm459, %v433, 0.0
      %v538 = vadd.f32 %v536, %v537
      %v539 = vsel %vm459, %v436, 0.0
      %v540 = vadd.f32 %v538, %v539
      %v541 = vsel %vm459, %v439, 0.0
      %v542 = vadd.f32 %v540, %v541
      %v543 = vsel %vm459, %v442, 0.0
      %v544 = vadd.f32 %v542, %v543
      %v545 = vsel %vm459, %v445, 0.0
      %v546 = vadd.f32 %v544, %v545
      %v547 = vsel %vm459, %v448, 0.0
      %v548 = vadd.f32 %v546, %v547
      %v549 = vsel %vm459, %v451, 0.0
      %v550 = vadd.f32 %v548, %v549
      %v551 = vsel %vm459, %v454, 0.0
      %v552 = vadd.f32 %v550, %v551
      %v553 = vsel %vm459, %v457, 0.0
      %v554 = vadd.f32 %v552, %v553
      %v555 = vrot.slane %v554, 4
      %v556 = vadd.f32 %v554, %v555
      %v557 = vrot.slane %v556, 2
      %v558 = vadd.f32 %v556, %v557
      %v559 = vrot.slane %v558, 1
      %v560 = vadd.f32 %v558, %v559
      %v561 = vmul.f32 %v364, %v364
      %v562 = vmul.f32 %v367, %v367
      %v563 = vmul.f32 %v370, %v370
      %v564 = vmul.f32 %v373, %v373
      %v565 = vmul.f32 %v376, %v376
      %v566 = vmul.f32 %v379, %v379
      %v567 = vmul.f32 %v382, %v382
      %v568 = vmul.f32 %v385, %v385
      %v569 = vmul.f32 %v388, %v388
      %v570 = vmul.f32 %v391, %v391
      %v571 = vmul.f32 %v394, %v394
      %v572 = vmul.f32 %v397, %v397
      %v573 = vmul.f32 %v400, %v400
      %v574 = vmul.f32 %v403, %v403
      %v575 = vmul.f32 %v406, %v406
      %v576 = vmul.f32 %v409, %v409
      %v577 = vmul.f32 %v412, %v412
      %v578 = vmul.f32 %v415, %v415
      %v579 = vmul.f32 %v418, %v418
      %v580 = vmul.f32 %v421, %v421
      %v581 = vmul.f32 %v424, %v424
      %v582 = vmul.f32 %v427, %v427
      %v583 = vmul.f32 %v430, %v430
      %v584 = vmul.f32 %v433, %v433
      %v585 = vmul.f32 %v436, %v436
      %v586 = vmul.f32 %v439, %v439
      %v587 = vmul.f32 %v442, %v442
      %v588 = vmul.f32 %v445, %v445
      %v589 = vmul.f32 %v448, %v448
      %v590 = vmul.f32 %v451, %v451
      %v591 = vmul.f32 %v454, %v454
      %v592 = vmul.f32 %v457, %v457
      %v593 = vsel %vm459, %v561, 0.0
      %v594 = vsel %vm459, %v562, 0.0
      %v595 = vadd.f32 %v593, %v594
      %v596 = vsel %vm459, %v563, 0.0
      %v597 = vadd.f32 %v595, %v596
      %v598 = vsel %vm459, %v564, 0.0
      %v599 = vadd.f32 %v597, %v598
      %v600 = vsel %vm459, %v565, 0.0
      %v601 = vadd.f32 %v599, %v600
      %v602 = vsel %vm459, %v566, 0.0
      %v603 = vadd.f32 %v601, %v602
      %v604 = vsel %vm459, %v567, 0.0
      %v605 = vadd.f32 %v603, %v604
      %v606 = vsel %vm459, %v568, 0.0
      %v607 = vadd.f32 %v605, %v606
      %v608 = vsel %vm459, %v569, 0.0
      %v609 = vadd.f32 %v607, %v608
      %v610 = vsel %vm459, %v570, 0.0
      %v611 = vadd.f32 %v609, %v610
      %v612 = vsel %vm459, %v571, 0.0
      %v613 = vadd.f32 %v611, %v612
      %v614 = vsel %vm459, %v572, 0.0
      %v615 = vadd.f32 %v613, %v614
      %v616 = vsel %vm459, %v573, 0.0
      %v617 = vadd.f32 %v615, %v616
      %v618 = vsel %vm459, %v574, 0.0
      %v619 = vadd.f32 %v617, %v618
      %v620 = vsel %vm459, %v575, 0.0
      %v621 = vadd.f32 %v619, %v620
      %v622 = vsel %vm459, %v576, 0.0
      %v623 = vadd.f32 %v621, %v622
      %v624 = vsel %vm459, %v577, 0.0
      %v625 = vadd.f32 %v623, %v624
      %v626 = vsel %vm459, %v578, 0.0
      %v627 = vadd.f32 %v625, %v626
      %v628 = vsel %vm459, %v579, 0.0
      %v629 = vadd.f32 %v627, %v628
      %v630 = vsel %vm459, %v580, 0.0
      %v631 = vadd.f32 %v629, %v630
      %v632 = vsel %vm459, %v581, 0.0
      %v633 = vadd.f32 %v631, %v632
      %v634 = vsel %vm459, %v582, 0.0
      %v635 = vadd.f32 %v633, %v634
      %v636 = vsel %vm459, %v583, 0.0
      %v637 = vadd.f32 %v635, %v636
      %v638 = vsel %vm459, %v584, 0.0
      %v639 = vadd.f32 %v637, %v638
      %v640 = vsel %vm459, %v585, 0.0
      %v641 = vadd.f32 %v639, %v640
      %v642 = vsel %vm459, %v586, 0.0
      %v643 = vadd.f32 %v641, %v642
      %v644 = vsel %vm459, %v587, 0.0
      %v645 = vadd.f32 %v643, %v644
      %v646 = vsel %vm459, %v588, 0.0
      %v647 = vadd.f32 %v645, %v646
      %v648 = vsel %vm459, %v589, 0.0
      %v649 = vadd.f32 %v647, %v648
      %v650 = vsel %vm459, %v590, 0.0
      %v651 = vadd.f32 %v649, %v650
      %v652 = vsel %vm459, %v591, 0.0
      %v653 = vadd.f32 %v651, %v652
      %v654 = vsel %vm459, %v592, 0.0
      %v655 = vadd.f32 %v653, %v654
      %v656 = vrot.slane %v655, 4
      %v657 = vadd.f32 %v655, %v656
      %v658 = vrot.slane %v657, 2
      %v659 = vadd.f32 %v657, %v658
      %v660 = vrot.slane %v659, 1
      %v661 = vadd.f32 %v659, %v660
      %vm662 = vcmask 1040384
      %v663 = vsel %vm662, %v560, %v661
      %vm664 = vcmask 254976
      %665 = vst.msk [vmem:[%s211] sm:$0x3] %vm664, %v663
      %s666 = smul.u32 32, %s16
      %p667 = scmp.lt.s32.totalorder %s666, 63
      %s668 = scalar_select %p667, %s666, 63
      %s669 = smul.addr %s668, 8
      %s670 = scalar_lea.vmem %s3, %s669
      %p671 = scmp.lt.s32.totalorder %s16, 1
      %s672 = scalar_select %p671, %s16, 1
      %s673 = smul.addr %s672, 2
      %s674 = scalar_lea.vmem %s4, %s673
      // Predicated region
      $region33: #{up_block_forward.4} parent=31 // pred_check
        %p675 = pneg %p102
      $region34: #{up_block_forward.4} parent=31 // pred_check_branch
        %677 = sbr.rel (%p675) target = $region36
      $region35: #{up_block_forward.4} parent=31 // pred_region
        %s678 = smul.u32 32, %s16
      $region36: #{up_block_forward.4} parent=31 // pred_fallthru
        _
      // Predicated region
      $region37: #{up_block_forward.4} parent=31 // pred_check
        %p679 = pneg %p128
      $region38: #{up_block_forward.4} parent=31 // pred_check_branch
        %681 = sbr.rel (%p679) target = $region40
      $region39: #{up_block_forward.4} parent=31 // pred_region
        _
      $region40: #{up_block_forward.4} parent=31 // pred_fallthru
        _
    $region32: #{up_block_forward.4} parent=5 // pred_fallthru
      _
    %p682 = scmp.le.s32.totalorder 2, %s11
    // Predicated region
    $region41: #{up_block_forward.4} parent=5 // pred_check
      %p683 = pneg %p682
    $region42: #{up_block_forward.4} parent=5 // pred_check_branch
      %685 = sbr.rel (%p683) target = $region44
    $region43: #{up_block_forward.4} parent=5 // pred_region
      %s686 = ssub.s32 %s11, 2
      // Predicated region
      $region45: #{up_block_forward.4} parent=43 // pred_check
        %p687 = pneg %p108
      $region46: #{up_block_forward.4} parent=43 // pred_check_branch
        %689 = sbr.rel (%p687) target = $region48
      $region47: #{up_block_forward.4} parent=43 // pred_region
        %s690 = smul.u32 32, %s17
        %p691 = scmp.lt.s32.totalorder %s690, 63
        %s692 = scalar_select %p691, %s690, 63
        %s693 = smul.addr %s692, 8
        %s694 = scalar_lea.vmem %s3, %s693
      $region48: #{up_block_forward.4} parent=43 // pred_fallthru
        _
      // Predicated region
      $region49: #{up_block_forward.4} parent=43 // pred_check
        %p695 = pneg %p134
      $region50: #{up_block_forward.4} parent=43 // pred_check_branch
        %697 = sbr.rel (%p695) target = $region52
      $region51: #{up_block_forward.4} parent=43 // pred_region
        %p698 = scmp.lt.s32.totalorder %s17, 1
        %s699 = scalar_select %p698, %s17, 1
        %s700 = smul.addr %s699, 2
        %s701 = scalar_lea.vmem %s4, %s700
      $region52: #{up_block_forward.4} parent=43 // pred_fallthru
        _
    $region44: #{up_block_forward.4} parent=5 // pred_fallthru
      _
  $region6: #{up_block_forward.4} parent=0 // loop_footer
    %s15 = sadd.s32 1, %s11
  $region7: #{up_block_forward.4} parent=0 // loop_footer_branch
    %10 = sbr.rel target = $region3
  $region8: #{up_block_forward.4} parent=0 // loop_exit
    _

// kernel: tile.78
$region0: #{tile.78}
  #allocation0 [shape = 's32[1]{0}', space=sflag, size = 0x4, scoped, tag = 'scoped memory for tile.78']
  %s0 = inlined_call_operand.vmem [shape: f32[4], index: 0, kind: input, shape index: {}]
  %s1 = inlined_call_operand.vmem [shape: f32[32,4], index: 1, kind: output, shape index: {}]
  // Predicated region
  $region2: #{tile.78} parent=0 // pred_check
    _
  $region3: #{tile.78} parent=0 // pred_check_branch
    %3 = sbr.rel (0) target = $region5
  $region4: #{tile.78} parent=0 // pred_region
    _
  $region5: #{tile.78} parent=0 // pred_fallthru
    _
  %v4 = vld [vmem:[%s0] ss:$0 sm:$0xff]
  %5 = vst [vmem:[%s1] sm:$0xff] %v4
  %s6 = scalar_lea.vmem %s1, 8
  %7 = vst [vmem:[%s6] sm:$0xff] %v4
  %s8 = scalar_lea.vmem %s1, 16
  %9 = vst [vmem:[%s8] sm:$0xff] %v4
  %s10 = scalar_lea.vmem %s1, 24
  %11 = vst [vmem:[%s10] sm:$0xff] %v4

// kernel: tile.79
$region0: #{tile.79}
  %s0 = inlined_call_operand.vmem [shape: f32[32,4], index: 0, kind: input, shape index: {}]
  %s1 = inlined_call_operand.vmem [shape: f32[1,128], index: 1, kind: output, shape index: {}]
  $region1: #{tile.79} parent=0
    #allocation0 [shape = 'u8[4096]{0}', space=vmem, size = 0x1000, scoped, tag = 'scoped mem for output reshape']
    %v2 = vld [vmem:[%s0] sm:$0x1]
    %vm3 = vcmask 31744
    %4 = vst.msk [vmem:[#allocation0] sm:$0x1] %vm3, %v2
    %s5 = scalar_lea.vmem %s0, 31
    %v6 = vld [vmem:[%s5] sm:$0x1]
    %7 = vrot.lane.b32.xlu0 %v6, 124
    %v8 = vpop.permute.xlu0 %7
    %vm9 = vcmask 1048544
    %10 = vst.msk [vmem:[#allocation0] sm:$0x1] %vm9, %v8
    %s11 = scalar_lea.vmem %s0, 30
    %v12 = vld [vmem:[%s11] sm:$0x1]
    %13 = vrot.lane.b32.xlu0 %v12, 120
    %v14 = vpop.permute.xlu0 %13
    %vm15 = vcmask 1015744
    %16 = vst.msk [vmem:[#allocation0] sm:$0x1] %vm15, %v14
    %s17 = scalar_lea.vmem %s0, 29
    %v18 = vld [vmem:[%s17] sm:$0x1]
    %19 = vrot.lane.b32.xlu0 %v18, 116
    %v20 = vpop.permute.xlu0 %19
    %vm21 = vcmask 982944
    %22 = vst.msk [vmem:[#allocation0] sm:$0x1] %vm21, %v20
    %s23 = scalar_lea.vmem %s0, 28
    %v24 = vld [vmem:[%s23] sm:$0x1]
    %25 = vrot.lane.b32.xlu0 %v24, 112
    %v26 = vpop.permute.xlu0 %25
    %vm27 = vcmask 950144
    %28 = vst.msk [vmem:[#allocation0] sm:$0x1] %vm27, %v26
    %s29 = scalar_lea.vmem %s0, 27
    %v30 = vld [vmem:[%s29] sm:$0x1]
    %31 = vrot.lane.b32.xlu0 %v30, 108
    %v32 = vpop.permute.xlu0 %31
    %vm33 = vcmask 917344
    %34 = vst.msk [vmem:[#allocation0] sm:$0x1] %vm33, %v32
    %s35 = scalar_lea.vmem %s0, 26
    %v36 = vld [vmem:[%s35] sm:$0x1]
    %37 = vrot.lane.b32.xlu0 %v36, 104
    %v38 = vpop.permute.xlu0 %37
    %vm39 = vcmask 884544
    %40 = vst.msk [vmem:[#allocation0] sm:$0x1] %vm39, %v38
    %s41 = scalar_lea.vmem %s0, 25
    %v42 = vld [vmem:[%s41] sm:$0x1]
    %43 = vrot.lane.b32.xlu0 %v42, 100
    %v44 = vpop.permute.xlu0 %43
    %vm45 = vcmask 851744
    %46 = vst.msk [vmem:[#allocation0] sm:$0x1] %vm45, %v44
    %s47 = scalar_lea.vmem %s0, 24
    %v48 = vld [vmem:[%s47] sm:$0x1]
    %49 = vrot.lane.b32.xlu0 %v48, 96
    %v50 = vpop.permute.xlu0 %49
    %vm51 = vcmask 818944
    %52 = vst.msk [vmem:[#allocation0] sm:$0x1] %vm51, %v50
    %s53 = scalar_lea.vmem %s0, 23
    %v54 = vld [vmem:[%s53] sm:$0x1]
    %55 = vrot.lane.b32.xlu0 %v54, 92
    %v56 = vpop.permute.xlu0 %55
    %vm57 = vcmask 786144
    %58 = vst.msk [vmem:[#allocation0] sm:$0x1] %vm57, %v56
    %s59 = scalar_lea.vmem %s0, 22
    %v60 = vld [vmem:[%s59] sm:$0x1]
    %61 = vrot.lane.b32.xlu0 %v60, 88
    %v62 = vpop.permute.xlu0 %61
    %vm63 = vcmask 753344
    %64 = vst.msk [vmem:[#allocation0] sm:$0x1] %vm63, %v62
    %s65 = scalar_lea.vmem %s0, 21
    %v66 = vld [vmem:[%s65] sm:$0x1]
    %67 = vrot.lane.b32.xlu0 %v66, 84
    %v68 = vpop.permute.xlu0 %67
    %vm69 = vcmask 720544
    %70 = vst.msk [vmem:[#allocation0] sm:$0x1] %vm69, %v68
    %s71 = scalar_lea.vmem %s0, 20
    %v72 = vld [vmem:[%s71] sm:$0x1]
    %73 = vrot.lane.b32.xlu0 %v72, 80
    %v74 = vpop.permute.xlu0 %73
    %vm75 = vcmask 687744
    %76 = vst.msk [vmem:[#allocation0] sm:$0x1] %vm75, %v74
    %s77 = scalar_lea.vmem %s0, 19
    %v78 = vld [vmem:[%s77] sm:$0x1]
    %79 = vrot.lane.b32.xlu0 %v78, 76
    %v80 = vpop.permute.xlu0 %79
    %vm81 = vcmask 654944
    %82 = vst.msk [vmem:[#allocation0] sm:$0x1] %vm81, %v80
    %s83 = scalar_lea.vmem %s0, 18
    %v84 = vld [vmem:[%s83] sm:$0x1]
    %85 = vrot.lane.b32.xlu0 %v84, 72
    %v86 = vpop.permute.xlu0 %85
    %vm87 = vcmask 622144
    %88 = vst.msk [vmem:[#allocation0] sm:$0x1] %vm87, %v86
    %s89 = scalar_lea.vmem %s0, 17
    %v90 = vld [vmem:[%s89] sm:$0x1]
    %91 = vrot.lane.b32.xlu0 %v90, 68
    %v92 = vpop.permute.xlu0 %91
    %vm93 = vcmask 589344
    %94 = vst.msk [vmem:[#allocation0] sm:$0x1] %vm93, %v92
    %s95 = scalar_lea.vmem %s0, 16
    %v96 = vld [vmem:[%s95] sm:$0x1]
    %97 = vrot.lane.b32.xlu0 %v96, 64
    %v98 = vpop.permute.xlu0 %97
    %vm99 = vcmask 556544
    %100 = vst.msk [vmem:[#allocation0] sm:$0x1] %vm99, %v98
    %s101 = scalar_lea.vmem %s0, 15
    %v102 = vld [vmem:[%s101] sm:$0x1]
    %103 = vrot.lane.b32.xlu0 %v102, 60
    %v104 = vpop.permute.xlu0 %103
    %vm105 = vcmask 523744
    %106 = vst.msk [vmem:[#allocation0] sm:$0x1] %vm105, %v104
    %s107 = scalar_lea.vmem %s0, 14
    %v108 = vld [vmem:[%s107] sm:$0x1]
    %109 = vrot.lane.b32.xlu0 %v108, 56
    %v110 = vpop.permute.xlu0 %109
    %vm111 = vcmask 490944
    %112 = vst.msk [vmem:[#allocation0] sm:$0x1] %vm111, %v110
    %s113 = scalar_lea.vmem %s0, 13
    %v114 = vld [vmem:[%s113] sm:$0x1]
    %115 = vrot.lane.b32.xlu0 %v114, 52
    %v116 = vpop.permute.xlu0 %115
    %vm117 = vcmask 458144
    %118 = vst.msk [vmem:[#allocation0] sm:$0x1] %vm117, %v116
    %s119 = scalar_lea.vmem %s0, 12
    %v120 = vld [vmem:[%s119] sm:$0x1]
    %121 = vrot.lane.b32.xlu0 %v120, 48
    %v122 = vpop.permute.xlu0 %121
    %vm123 = vcmask 425344
    %124 = vst.msk [vmem:[#allocation0] sm:$0x1] %vm123, %v122
    %s125 = scalar_lea.vmem %s0, 11
    %v126 = vld [vmem:[%s125] sm:$0x1]
    %127 = vrot.lane.b32.xlu0 %v126, 44
    %v128 = vpop.permute.xlu0 %127
    %vm129 = vcmask 392544
    %130 = vst.msk [vmem:[#allocation0] sm:$0x1] %vm129, %v128
    %s131 = scalar_lea.vmem %s0, 10
    %v132 = vld [vmem:[%s131] sm:$0x1]
    %133 = vrot.lane.b32.xlu0 %v132, 40
    %v134 = vpop.permute.xlu0 %133
    %vm135 = vcmask 359744
    %136 = vst.msk [vmem:[#allocation0] sm:$0x1] %vm135, %v134
    %s137 = scalar_lea.vmem %s0, 9
    %v138 = vld [vmem:[%s137] sm:$0x1]
    %139 = vrot.lane.b32.xlu0 %v138, 36
    %v140 = vpop.permute.xlu0 %139
    %vm141 = vcmask 326944
    %142 = vst.msk [vmem:[#allocation0] sm:$0x1] %vm141, %v140
    %s143 = scalar_lea.vmem %s0, 8
    %v144 = vld [vmem:[%s143] sm:$0x1]
    %145 = vrot.lane.b32.xlu0 %v144, 32
    %v146 = vpop.permute.xlu0 %145
    %vm147 = vcmask 294144
    %148 = vst.msk [vmem:[#allocation0] sm:$0x1] %vm147, %v146
    %s149 = scalar_lea.vmem %s0, 7
    %v150 = vld [vmem:[%s149] sm:$0x1]
    %151 = vrot.lane.b32.xlu0 %v150, 28
    %v152 = vpop.permute.xlu0 %151
    %vm153 = vcmask 261344
    %154 = vst.msk [vmem:[#allocation0] sm:$0x1] %vm153, %v152
    %s155 = scalar_lea.vmem %s0, 6
    %v156 = vld [vmem:[%s155] sm:$0x1]
    %157 = vrot.lane.b32.xlu0 %v156, 24
    %v158 = vpop.permute.xlu0 %157
    %vm159 = vcmask 228544
    %160 = vst.msk [vmem:[#allocation0] sm:$0x1] %vm159, %v158
    %s161 = scalar_lea.vmem %s0, 5
    %v162 = vld [vmem:[%s161] sm:$0x1]
    %163 = vrot.lane.b32.xlu0 %v162, 20
    %v164 = vpop.permute.xlu0 %163
    %vm165 = vcmask 195744
    %166 = vst.msk [vmem:[#allocation0] sm:$0x1] %vm165, %v164
    %s167 = scalar_lea.vmem %s0, 4
    %v168 = vld [vmem:[%s167] sm:$0x1]
    %169 = vrot.lane.b32.xlu0 %v168, 16
    %v170 = vpop.permute.xlu0 %169
    %vm171 = vcmask 162944
    %172 = vst.msk [vmem:[#allocation0] sm:$0x1] %vm171, %v170
    %s173 = scalar_lea.vmem %s0, 3
    %v174 = vld [vmem:[%s173] sm:$0x1]
    %175 = vrot.lane.b32.xlu0 %v174, 12
    %v176 = vpop.permute.xlu0 %175
    %vm177 = vcmask 130144
    %178 = vst.msk [vmem:[#allocation0] sm:$0x1] %vm177, %v176
    %s179 = scalar_lea.vmem %s0, 2
    %v180 = vld [vmem:[%s179] sm:$0x1]
    %181 = vrot.lane.b32.xlu0 %v180, 8
    %v182 = vpop.permute.xlu0 %181
    %vm183 = vcmask 97344
    %184 = vst.msk [vmem:[#allocation0] sm:$0x1] %vm183, %v182
    %s185 = scalar_lea.vmem %s0, 1
    %v186 = vld [vmem:[%s185] sm:$0x1]
    %187 = vrot.lane.b32.xlu0 %v186, 4
    %v188 = vpop.permute.xlu0 %187
    %vm189 = vcmask 64544
    %190 = vst.msk [vmem:[#allocation0] sm:$0x1] %vm189, %v188
    %s192 = ssub.s32 2, 1
    %v193 = vld [vmem:[#allocation0] sm:%s192]
    %s195 = ssub.s32 2, 1
    %196 = vst [vmem:[%s1] sm:%s195] %v193

// kernel: up_block_forward.6
$region0: #{up_block_forward.6}
  #allocation0 [shape = 'u32[]', space=smem, size = 0x4, offset = 0x4, fixed_abs, tag = 'smem constant byte address 0x4 - core index']
  #allocation1 [shape = 'u32[72,128]{1,0:T(1,128)}', space=vmem, size = 0x9000, scoped, tag = 'internal scratch']
  %s0 = inlined_call_operand.vmem [shape: f32[2,34,34,8], index: 0, kind: input, shape index: {}]
  %s1 = inlined_call_operand.vmem [shape: f32[72,4], index: 1, kind: input, shape index: {}]
  %s2 = inlined_call_operand.vmem [shape: f32[1,4], index: 2, kind: input, shape index: {}]
  %s3 = inlined_call_operand.vmem [shape: f32[2,32,32,4], index: 3, kind: output, shape index: {0}]
  %s4 = inlined_call_operand.vmem [shape: f32[2,2,2,4], index: 4, kind: output, shape index: {1}]
  %5 = xla_tuple %s3, %s4
  %s6 = sld [smem:[#allocation0]]
  $region53: #{up_block_forward.6} parent=0
    _
  %s8 = ssub.s32 1, %s6
  %s9 = scalar_select 0, %s8, %s6
  loop: start=0, step=1, limit=6
  $region2: #{up_block_forward.6} parent=0 // loop_pre_header
    _
  $region3: #{up_block_forward.6} parent=0 // loop_header
    %s11 = sphi 0, %s15
    %p12 = scmp.ge.s32.totalorder %s11, 6
    %s18 = sphi 0, %s30
    %s19 = sphi 0, %s26
    %s20 = sphi 0, %s18
    %s21 = sphi 0, %s19
    %s22 = sphi 0, %s20
    %s23 = sphi 0, %s21
    %s33 = sphi 0, %s35
    %s36 = sphi 0, %s33
    %s37 = sphi 0, %s36
    %s53 = sphi 0, %s37
    %s57 = sphi 0, %s57
    %s59 = sphi 0, %s57
    %s60 = sphi 0, %s59
    %s74 = sphi 0, %s60
    %s78 = sphi 0, %s78
    %s80 = sphi 0, %s78
    %s81 = sphi 0, %s80
    %s95 = sphi 0, %s81
    %s103 = sphi 0, %s105
    %s106 = sphi 0, %s103
    %s107 = sphi 0, %s106
    %s123 = sphi 0, %s107
    %s131 = sphi 0, %s133
    %s134 = sphi 0, %s131
    %s135 = sphi 0, %s134
    %s151 = sphi 0, %s135
  $region4: #{up_block_forward.6} parent=0 // loop_header_branch
    %14 = sbr.rel (%p12) target = $region8
  $region5: #{up_block_forward.6} parent=0 // loop_body
    %s16 = ssub.s32 %s11, 1
    %s17 = ssub.s32 %s11, 2
    %s24 = sadd.s32 1, %s19
    %p25 = scmp.ge.s32.totalorder %s24, 2
    %s26 = scalar_select %p25, 0, %s24
    %s27 = sadd.s32 1, %s18
    %s28 = scalar_select %p25, %s27, %s18
    %p29 = scmp.ge.s32.totalorder %s28, 2
    %s30 = scalar_select %p29, 0, %s28
    %s31 = ssub.s32 %s18, %s30
    %p32 = scmp.eq.s32.totalorder %s31, 0
    %s34 = sadd.s32 %s33, 1
    %s35 = scalar_select %p32, %s33, %s34
    %p38 = pneg %p32
    %p39 = scmp.eq.s32.totalorder %s11, 3
    %p40 = por %p38, %p39
    %p41 = scmp.ne.s32.totalorder %s33, %s36
    %p42 = scmp.eq.s32.totalorder %s11, 0
    %p43 = por %p41, %p42
    %p44 = scmp.ne.s32.totalorder %s33, %s36
    %p45 = scmp.eq.s32.totalorder %s16, 3
    %p46 = por %p44, %p45
    %p47 = scmp.ne.s32.totalorder %s36, %s37
    %p48 = scmp.eq.s32.totalorder %s16, 0
    %p49 = por %p47, %p48
    %p50 = scmp.ne.s32.totalorder %s36, %s37
    %p51 = scmp.eq.s32.totalorder %s17, 3
    %p52 = por %p50, %p51
    %p54 = scmp.ne.s32.totalorder %s37, %s53
    %p55 = scmp.eq.s32.totalorder %s17, 0
    %p56 = por %p54, %p55
    %s58 = sadd.s32 %s57, 1
    %p61 = scmp.eq.s32.totalorder %s11, 3
    %p62 = scmp.ne.s32.totalorder %s57, %s59
    %p63 = scmp.eq.s32.totalorder %s11, 0
    %p64 = por %p62, %p63
    %p65 = scmp.ne.s32.totalorder %s57, %s59
    %p66 = scmp.eq.s32.totalorder %s16, 3
    %p67 = por %p65, %p66
    %p68 = scmp.ne.s32.totalorder %s59, %s60
    %p69 = scmp.eq.s32.totalorder %s16, 0
    %p70 = por %p68, %p69
    %p71 = scmp.ne.s32.totalorder %s59, %s60
    %p72 = scmp.eq.s32.totalorder %s17, 3
    %p73 = por %p71, %p72
    %p75 = scmp.ne.s32.totalorder %s60, %s74
    %p76 = scmp.eq.s32.totalorder %s17, 0
    %p77 = por %p75, %p76
    %s79 = sadd.s32 %s78, 1
    %p82 = scmp.eq.s32.totalorder %s11, 3
    %p83 = scmp.ne.s32.totalorder %s78, %s80
    %p84 = scmp.eq.s32.totalorder %s11, 0
    %p85 = por %p83, %p84
    %p86 = scmp.ne.s32.totalorder %s78, %s80
    %p87 = scmp.eq.s32.totalorder %s16, 3
    %p88 = por %p86, %p87
    %p89 = scmp.ne.s32.totalorder %s80, %s81
    %p90 = scmp.eq.s32.totalorder %s16, 0
    %p91 = por %p89, %p90
    %p92 = scmp.ne.s32.totalorder %s80, %s81
    %p93 = scmp.eq.s32.totalorder %s17, 3
    %p94 = por %p92, %p93
    %p96 = scmp.ne.s32.totalorder %s81, %s95
    %p97 = scmp.eq.s32.totalorder %s17, 0
    %p98 = por %p96, %p97
    %s99 = ssub.s32 %s18, %s30
    %s100 = ssub.s32 %s19, %s26
    %s101 = sor.u32 %s99, %s100
    %p102 = scmp.eq.s32.totalorder %s101, 0
    %s104 = sadd.s32 %s103, 1
    %s105 = scalar_select %p102, %s103, %s104
    %p108 = pneg %p102
    %p109 = scmp.eq.s32.totalorder %s11, 3
    %p110 = por %p108, %p109
    %p111 = scmp.ne.s32.totalorder %s103, %s106
    %p112 = scmp.eq.s32.totalorder %s11, 0
    %p113 = por %p111, %p112
    %p114 = scmp.ne.s32.totalorder %s103, %s106
    %p115 = scmp.eq.s32.totalorder %s16, 3
    %p116 = por %p114, %p115
    %p117 = scmp.ne.s32.totalorder %s106, %s107
    %p118 = scmp.eq.s32.totalorder %s16, 0
    %p119 = por %p117, %p118
    %p120 = scmp.ne.s32.totalorder %s106, %s107
    %p121 = scmp.eq.s32.totalorder %s17, 3
    %p122 = por %p120, %p121
    %p124 = scmp.ne.s32.totalorder %s107, %s123
    %p125 = scmp.eq.s32.totalorder %s17, 0
    %p126 = por %p124, %p125
    %s127 = ssub.s32 %s18, %s30
    %s128 = ssub.s32 %s19, %s26
    %s129 = sor.u32 %s127, %s128
    %p130 = scmp.eq.s32.totalorder %s129, 0
    %s132 = sadd.s32 %s131, 1
    %s133 = scalar_select %p130, %s131, %s132
    %p136 = pneg %p130
    %p137 = scmp.eq.s32.totalorder %s11, 3
    %p138 = por %p136, %p137
    %p139 = scmp.ne.s32.totalorder %s131, %s134
    %p140 = scmp.eq.s32.totalorder %s11, 0
    %p141 = por %p139, %p140
    %p142 = scmp.ne.s32.totalorder %s131, %s134
    %p143 = scmp.eq.s32.totalorder %s16, 3
    %p144 = por %p142, %p143
    %p145 = scmp.ne.s32.totalorder %s134, %s135
    %p146 = scmp.eq.s32.totalorder %s16, 0
    %p147 = por %p145, %p146
    %p148 = scmp.ne.s32.totalorder %s134, %s135
    %p149 = scmp.eq.s32.totalorder %s17, 3
    %p150 = por %p148, %p149
    %p152 = scmp.ne.s32.totalorder %s135, %s151
    %p153 = scmp.eq.s32.totalorder %s17, 0
    %p154 = por %p152, %p153
    %p155 = scmp.le.s32.totalorder 1, %s11
    %p156 = scmp.lt.s32.totalorder %s11, 5
    %p157 = pnand %p155, %p156
    %p158 = pneg %p157
    // Predicated region
    $region9: #{up_block_forward.6} parent=5 // pred_check
      _
    $region10: #{up_block_forward.6} parent=5 // pred_check_branch
      %160 = sbr.rel (%p157) target = $region12
    $region11: #{up_block_forward.6} parent=5 // pred_region
      %s161 = ssub.s32 %s11, 1
      // Predicated region
      $region13: #{up_block_forward.6} parent=11 // pred_check
        %p162 = pneg %p70
      $region14: #{up_block_forward.6} parent=11 // pred_check_branch
        %164 = sbr.rel (%p162) target = $region16
      $region15: #{up_block_forward.6} parent=11 // pred_region
        _
      $region16: #{up_block_forward.6} parent=11 // pred_fallthru
        _
      // Predicated region
      $region17: #{up_block_forward.6} parent=11 // pred_check
        %p165 = pneg %p91
      $region18: #{up_block_forward.6} parent=11 // pred_check_branch
        %167 = sbr.rel (%p165) target = $region20
      $region19: #{up_block_forward.6} parent=11 // pred_region
        _
      $region20: #{up_block_forward.6} parent=11 // pred_fallthru
        _
    $region12: #{up_block_forward.6} parent=5 // pred_fallthru
      _
    %p168 = scmp.lt.s32.totalorder %s11, 4
    // Predicated region
    $region21: #{up_block_forward.6} parent=5 // pred_check
      %p169 = pneg %p168
    $region22: #{up_block_forward.6} parent=5 // pred_check_branch
      %171 = sbr.rel (%p169) target = $region24
    $region23: #{up_block_forward.6} parent=5 // pred_region
      // Predicated region
      $region25: #{up_block_forward.6} parent=23 // pred_check
        %p172 = pneg %p43
      $region26: #{up_block_forward.6} parent=23 // pred_check_branch
        %174 = sbr.rel (%p172) target = $region28
      $region27: #{up_block_forward.6} parent=23 // pred_region
        %p175 = scmp.lt.s32.totalorder %s18, 1
        %s176 = scalar_select %p175, %s18, 1
        %s177 = smul.addr %s176, 170
        %s178 = smul.addr %s177, 8
        %s179 = scalar_lea.vmem %s0, %s178
      $region28: #{up_block_forward.6} parent=23 // pred_fallthru
        _
    $region24: #{up_block_forward.6} parent=5 // pred_fallthru
      _
    %p180 = scmp.le.s32.totalorder 1, %s11
    %p181 = scmp.lt.s32.totalorder %s11, 5
    %p182 = pnand %p180, %p181
    %p183 = pneg %p182
    // Predicated region
    $region29: #{up_block_forward.6} parent=5 // pred_check
      _
    $region30: #{up_block_forward.6} parent=5 // pred_check_branch
      %185 = sbr.rel (%p182) target = $region32
    $region31: #{up_block_forward.6} parent=5 // pred_region
      %s186 = ssub.s32 %s11, 1
      %p187 = scmp.lt.s32.totalorder %s20, 1
      %s188 = scalar_select %p187, %s20, 1
      %s189 = smul.addr %s188, 170
      %s190 = smul.addr %s189, 8
      %s191 = scalar_lea.vmem %s0, %s190
      %p192 = pneg %p49
      %p193 = pneg %p46
      %p194 = pneg %p70
      %p195 = pneg %p67
      %p196 = pneg %p91
      %p197 = pneg %p88
      %p198 = pneg %p119
      %p199 = pneg %p116
      %s200 = smul.u32 16, %s21
      %p201 = scmp.lt.s32.totalorder %s20, 1
      %s202 = scalar_select %p201, %s20, 1
      %p203 = scmp.lt.s32.totalorder %s200, 31
      %s204 = scalar_select %p203, %s200, 31
      %s205 = smul.addr %s204, 4
      %s206 = smul.addr %s202, 128
      %s207 = sadd.s32 %s205, %s206
      %s208 = smul.addr %s207, 8
      %s209 = scalar_lea.vmem %s3, %s208
      %p210 = pneg %p147
      %p211 = pneg %p144
      %p212 = scmp.lt.s32.totalorder %s20, 1
      %s213 = scalar_select %p212, %s20, 1
      %p214 = scmp.lt.s32.totalorder %s21, 1
      %s215 = scalar_select %p214, %s21, 1
      %s216 = smul.addr %s213, 2
      %s217 = sadd.s32 %s215, %s216
      %s218 = smul.addr %s217, 2
      %s219 = scalar_lea.vmem %s4, %s218
      %p220 = scmp.lt.s32.totalorder %s20, 1
      %s221 = scalar_select %p220, %s20, 1
      %s222 = smul.addr %s221, 170
      %s223 = smul.addr %s222, 8
      %s224 = scalar_lea.vmem %s0, %s223
      %s225 = smul.u32 16, %s21
      %p226 = scmp.lt.s32.totalorder %s20, 1
      %s227 = scalar_select %p226, %s20, 1
      %p228 = scmp.lt.s32.totalorder %s225, 31
      %s229 = scalar_select %p228, %s225, 31
      %s230 = smul.addr %s229, 4
      %s231 = smul.addr %s227, 128
      %s232 = sadd.s32 %s230, %s231
      %s233 = smul.addr %s232, 8
      %s234 = scalar_lea.vmem %s3, %s233
      %s235 = smul.u32 16, %s21
      %p236 = scmp.lt.s32.totalorder %s20, 1
      %s237 = scalar_select %p236, %s20, 1
      %p238 = scmp.lt.s32.totalorder %s21, 1
      %s239 = scalar_select %p238, %s21, 1
      %s240 = smul.addr %s237, 2
      %s241 = sadd.s32 %s239, %s240
      %s242 = smul.addr %s241, 2
      %s243 = scalar_lea.vmem %s4, %s242
      %s244 = smul.u32 %s21, 16
      %s245 = smul.u32 %s244, 40
      %s246 = scalar_lea.vmem %s224, %s245
      %v247 = vld [vmem:[%s246] sm:$0xff]
      %v248 = vld [vmem:[%s246 + $0x8] sm:$0xff]
      %v249 = vld [vmem:[%s246 + $0x10] sm:$0xff]
      %v250 = vld [vmem:[%s246 + $0x18] sm:$0xff]
      %v251 = vld [vmem:[%s246 + $0x20] sm:$0x3]
      %v252 = vld [vmem:[%s246 + $0x28] sm:$0xff]
      %v253 = vld [vmem:[%s246 + $0x30] sm:$0xff]
      %v254 = vld [vmem:[%s246 + $0x38] sm:$0xff]
      %v255 = vld [vmem:[%s246 + $0x40] sm:$0xff]
      %v256 = vld [vmem:[%s246 + $0x48] sm:$0x3]
      %v257 = vld [vmem:[%s246 + $0x50] sm:$0xff]
      %v258 = vld [vmem:[%s246 + $0x58] sm:$0xff]
      %v259 = vld [vmem:[%s246 + $0x60] sm:$0xff]
      %v260 = vld [vmem:[%s246 + $0x68] sm:$0xff]
      %v261 = vld [vmem:[%s246 + $0x70] sm:$0x3]
      %v262 = vld [vmem:[%s246 + $0x78] sm:$0xff]
      %v263 = vld [vmem:[%s246 + $0x80] sm:$0xff]
      %v264 = vld [vmem:[%s246 + $0x88] sm:$0xff]
      %v265 = vld [vmem:[%s246 + $0x90] sm:$0xff]
      %v266 = vld [vmem:[%s246 + $0x98] sm:$0x3]
      %v267 = vld [vmem:[%s246 + $0xa0] sm:$0xff]
      %v268 = vld [vmem:[%s246 + $0xa8] sm:$0xff]
      %v269 = vld [vmem:[%s246 + $0xb0] sm:$0xff]
      %v270 = vld [vmem:[%s246 + $0xb8] sm:$0xff]
      %v271 = vld [vmem:[%s246 + $0xc0] sm:$0x3]
      %v272 = vld [vmem:[%s246 + $0xc8] sm:$0xff]
      %v273 = vld [vmem:[%s246 + $0xd0] sm:$0xff]
      %v274 = vld [vmem:[%s246 + $0xd8] sm:$0xff]
      %v275 = vld [vmem:[%s246 + $0xe0] sm:$0xff]
      %v276 = vld [vmem:[%s246 + $0xe8] sm:$0x3]
      %v277 = vld [vmem:[%s246 + $0xf0] sm:$0xff]
      %v278 = vld [vmem:[%s246 + $0xf8] sm:$0xff]
      %v279 = vld [vmem:[%s246 + $0x100] sm:$0xff]
      %v280 = vld [vmem:[%s246 + $0x108] sm:$0xff]
      %v281 = vld [vmem:[%s246 + $0x110] sm:$0x3]
      %v282 = vld [vmem:[%s246 + $0x118] sm:$0xff]
      %v283 = vld [vmem:[%s246 + $0x120] sm:$0xff]
      %v284 = vld [vmem:[%s246 + $0x128] sm:$0xff]
      %v285 = vld [vmem:[%s246 + $0x130] sm:$0xff]
      %v286 = vld [vmem:[%s246 + $0x138] sm:$0x3]
      %v287 = vld [vmem:[%s246 + $0x140] sm:$0xff]
      %v288 = vld [vmem:[%s246 + $0x148] sm:$0xff]
      %v289 = vld [vmem:[%s246 + $0x150] sm:$0xff]
      %v290 = vld [vmem:[%s246 + $0x158] sm:$0xff]
      %v291 = vld [vmem:[%s246 + $0x160] sm:$0x3]
      %v292 = vld [vmem:[%s246 + $0x168] sm:$0xff]
      %v293 = vld [vmem:[%s246 + $0x170] sm:$0xff]
      %v294 = vld [vmem:[%s246 + $0x178] sm:$0xff]
      %v295 = vld [vmem:[%s246 + $0x180] sm:$0xff]
      %v296 = vld [vmem:[%s246 + $0x188] sm:$0x3]
      %v297 = vld [vmem:[%s246 + $0x190] sm:$0xff]
      %v298 = vld [vmem:[%s246 + $0x198] sm:$0xff]
      %v299 = vld [vmem:[%s246 + $0x1a0] sm:$0xff]
      %v300 = vld [vmem:[%s246 + $0x1a8] sm:$0xff]
      %v301 = vld [vmem:[%s246 + $0x1b0] sm:$0x3]
      %v302 = vld [vmem:[%s246 + $0x1b8] sm:$0xff]
      %v303 = vld [vmem:[%s246 + $0x1c0] sm:$0xff]
      %v304 = vld [vmem:[%s246 + $0x1c8] sm:$0xff]
      %v305 = vld [vmem:[%s246 + $0x1d0] sm:$0xff]
      %v306 = vld [vmem:[%s246 + $0x1d8] sm:$0x3]
      %v307 = vld [vmem:[%s246 + $0x1e0] sm:$0xff]
      %v308 = vld [vmem:[%s246 + $0x1e8] sm:$0xff]
      %v309 = vld [vmem:[%s246 + $0x1f0] sm:$0xff]
      %v310 = vld [vmem:[%s246 + $0x1f8] sm:$0xff]
      %v311 = vld [vmem:[%s246 + $0x200] sm:$0x3]
      %v312 = vld [vmem:[%s246 + $0x208] sm:$0xff]
      %v313 = vld [vmem:[%s246 + $0x210] sm:$0xff]
      %v314 = vld [vmem:[%s246 + $0x218] sm:$0xff]
      %v315 = vld [vmem:[%s246 + $0x220] sm:$0xff]
      %v316 = vld [vmem:[%s246 + $0x228] sm:$0x3]
      %v317 = vld [vmem:[%s246 + $0x230] sm:$0xff]
      %v318 = vld [vmem:[%s246 + $0x238] sm:$0xff]
      %v319 = vld [vmem:[%s246 + $0x240] sm:$0xff]
      %v320 = vld [vmem:[%s246 + $0x248] sm:$0xff]
      %v321 = vld [vmem:[%s246 + $0x250] sm:$0x3]
      %v322 = vld [vmem:[%s246 + $0x258] sm:$0xff]
      %v323 = vld [vmem:[%s246 + $0x260] sm:$0xff]
      %v324 = vld [vmem:[%s246 + $0x268] sm:$0xff]
      %v325 = vld [vmem:[%s246 + $0x270] sm:$0xff]
      %v326 = vld [vmem:[%s246 + $0x278] sm:$0x3]
      %v327 = vld [vmem:[%s246 + $0x280] sm:$0xff]
      %v328 = vld [vmem:[%s246 + $0x288] sm:$0xff]
      %v329 = vld [vmem:[%s246 + $0x290] sm:$0xff]
      %v330 = vld [vmem:[%s246 + $0x298] sm:$0xff]
      %v331 = vld [vmem:[%s246 + $0x2a0] sm:$0x3]
      %v332 = vld [vmem:[%s246 + $0x2a8] sm:$0xff]
      %v333 = vld [vmem:[%s246 + $0x2b0] sm:$0xff]
      %v334 = vld [vmem:[%s246 + $0x2b8] sm:$0xff]
      %v335 = vld [vmem:[%s246 + $0x2c0] sm:$0xff]
      %v336 = vld [vmem:[%s246 + $0x2c8] sm:$0x3]
      %vm417 = vcmask 1046528
      %v418 = vrot.slane %v247, 1
      %v419 = vrot.slane %v248, 1
      %v420 = vsel %vm417, %v418, %v419
      %v421 = vrot.slane %v249, 1
      %v422 = vsel %vm417, %v419, %v421
      %v423 = vrot.slane %v250, 1
      %v424 = vsel %vm417, %v421, %v423
      %v425 = vrot.slane %v251, 1
      %v426 = vsel %vm417, %v423, %v425
      %v427 = vrot.slane %v252, 1
      %v428 = vrot.slane %v253, 1
      %v429 = vsel %vm417, %v427, %v428
      %v430 = vrot.slane %v254, 1
      %v431 = vsel %vm417, %v428, %v430
      %v432 = vrot.slane %v255, 1
      %v433 = vsel %vm417, %v430, %v432
      %v434 = vrot.slane %v256, 1
      %v435 = vsel %vm417, %v432, %v434
      %v436 = vrot.slane %v257, 1
      %v437 = vrot.slane %v258, 1
      %v438 = vsel %vm417, %v436, %v437
      %v439 = vrot.slane %v259, 1
      %v440 = vsel %vm417, %v437, %v439
      %v441 = vrot.slane %v260, 1
      %v442 = vsel %vm417, %v439, %v441
      %v443 = vrot.slane %v261, 1
      %v444 = vsel %vm417, %v441, %v443
      %v445 = vrot.slane %v262, 1
      %v446 = vrot.slane %v263, 1
      %v447 = vsel %vm417, %v445, %v446
      %v448 = vrot.slane %v264, 1
      %v449 = vsel %vm417, %v446, %v448
      %v450 = vrot.slane %v265, 1
      %v451 = vsel %vm417, %v448, %v450
      %v452 = vrot.slane %v266, 1
      %v453 = vsel %vm417, %v450, %v452
      %v454 = vrot.slane %v267, 1
      %v455 = vrot.slane %v268, 1
      %v456 = vsel %vm417, %v454, %v455
      %v457 = vrot.slane %v269, 1
      %v458 = vsel %vm417, %v455, %v457
      %v459 = vrot.slane %v270, 1
      %v460 = vsel %vm417, %v457, %v459
      %v461 = vrot.slane %v271, 1
      %v462 = vsel %vm417, %v459, %v461
      %v463 = vrot.slane %v272, 1
      %v464 = vrot.slane %v273, 1
      %v465 = vsel %vm417, %v463, %v464
      %v466 = vrot.slane %v274, 1
      %v467 = vsel %vm417, %v464, %v466
      %v468 = vrot.slane %v275, 1
      %v469 = vsel %vm417, %v466, %v468
      %v470 = vrot.slane %v276, 1
      %v471 = vsel %vm417, %v468, %v470
      %v472 = vrot.slane %v277, 1
      %v473 = vrot.slane %v278, 1
      %v474 = vsel %vm417, %v472, %v473
      %v475 = vrot.slane %v279, 1
      %v476 = vsel %vm417, %v473, %v475
      %v477 = vrot.slane %v280, 1
      %v478 = vsel %vm417, %v475, %v477
      %v479 = vrot.slane %v281, 1
      %v480 = vsel %vm417, %v477, %v479
      %v481 = vrot.slane %v282, 1
      %v482 = vrot.slane %v283, 1
      %v483 = vsel %vm417, %v481, %v482
      %v484 = vrot.slane %v284, 1
      %v485 = vsel %vm417, %v482, %v484
      %v486 = vrot.slane %v285, 1
      %v487 = vsel %vm417, %v484, %v486
      %v488 = vrot.slane %v286, 1
      %v489 = vsel %vm417, %v486, %v488
      %v490 = vrot.slane %v287, 1
      %v491 = vrot.slane %v288, 1
      %v492 = vsel %vm417, %v490, %v491
      %v493 = vrot.slane %v289, 1
      %v494 = vsel %vm417, %v491, %v493
      %v495 = vrot.slane %v290, 1
      %v496 = vsel %vm417, %v493, %v495
      %v497 = vrot.slane %v291, 1
      %v498 = vsel %vm417, %v495, %v497
      %v499 = vrot.slane %v292, 1
      %v500 = vrot.slane %v293, 1
      %v501 = vsel %vm417, %v499, %v500
      %v502 = vrot.slane %v294, 1
      %v503 = vsel %vm417, %v500, %v502
      %v504 = vrot.slane %v295, 1
      %v505 = vsel %vm417, %v502, %v504
      %v506 = vrot.slane %v296, 1
      %v507 = vsel %vm417, %v504, %v506
      %v508 = vrot.slane %v297, 1
      %v509 = vrot.slane %v298, 1
      %v510 = vsel %vm417, %v508, %v509
      %v511 = vrot.slane %v299, 1
      %v512 = vsel %vm417, %v509, %v511
      %v513 = vrot.slane %v300, 1
      %v514 = vsel %vm417, %v511, %v513
      %v515 = vrot.slane %v301, 1
      %v516 = vsel %vm417, %v513, %v515
      %v517 = vrot.slane %v302, 1
      %v518 = vrot.slane %v303, 1
      %v519 = vsel %vm417, %v517, %v518
      %v520 = vrot.slane %v304, 1
      %v521 = vsel %vm417, %v518, %v520
      %v522 = vrot.slane %v305, 1
      %v523 = vsel %vm417, %v520, %v522
      %v524 = vrot.slane %v306, 1
      %v525 = vsel %vm417, %v522, %v524
      %v526 = vrot.slane %v307, 1
      %v527 = vrot.slane %v308, 1
      %v528 = vsel %vm417, %v526, %v527
      %v529 = vrot.slane %v309, 1
      %v530 = vsel %vm417, %v527, %v529
      %v531 = vrot.slane %v310, 1
      %v532 = vsel %vm417, %v529, %v531
      %v533 = vrot.slane %v311, 1
      %v534 = vsel %vm417, %v531, %v533
      %v535 = vrot.slane %v312, 1
      %v536 = vrot.slane %v313, 1
      %v537 = vsel %vm417, %v535, %v536
      %v538 = vrot.slane %v314, 1
      %v539 = vsel %vm417, %v536, %v538
      %v540 = vrot.slane %v315, 1
      %v541 = vsel %vm417, %v538, %v540
      %v542 = vrot.slane %v316, 1
      %v543 = vsel %vm417, %v540, %v542
      %v544 = vrot.slane %v317, 1
      %v545 = vrot.slane %v318, 1
      %v546 = vsel %vm417, %v544, %v545
      %v547 = vrot.slane %v319, 1
      %v548 = vsel %vm417, %v545, %v547
      %v549 = vrot.slane %v320, 1
      %v550 = vsel %vm417, %v547, %v549
      %v551 = vrot.slane %v321, 1
      %v552 = vsel %vm417, %v549, %v551
      %v553 = vrot.slane %v322, 1
      %v554 = vrot.slane %v323, 1
      %v555 = vsel %vm417, %v553, %v554
      %v556 = vrot.slane %v324, 1
      %v557 = vsel %vm417, %v554, %v556
      %v558 = vrot.slane %v325, 1
      %v559 = vsel %vm417, %v556, %v558
      %v560 = vrot.slane %v326, 1
      %v561 = vsel %vm417, %v558, %v560
      %562 = vrot.lane.b32.xlu0 %v420, 8
      %v563 = vpop.permute.xlu0 %562
      %564 = vrot.lane.b32.xlu0 %v422, 8
      %v565 = vpop.permute.xlu0 %564
      %566 = vrot.lane.b32.xlu0 %v424, 8
      %v567 = vpop.permute.xlu0 %566
      %568 = vrot.lane.b32.xlu0 %v426, 8
      %v569 = vpop.permute.xlu0 %568
      %570 = vrot.lane.b32.xlu0 %v429, 8
      %v571 = vpop.permute.xlu0 %570
      %572 = vrot.lane.b32.xlu0 %v431, 8
      %v573 = vpop.permute.xlu0 %572
      %574 = vrot.lane.b32.xlu0 %v433, 8
      %v575 = vpop.permute.xlu0 %574
      %576 = vrot.lane.b32.xlu0 %v435, 8
      %v577 = vpop.permute.xlu0 %576
      %578 = vrot.lane.b32.xlu0 %v438, 8
      %v579 = vpop.permute.xlu0 %578
      %580 = vrot.lane.b32.xlu0 %v440, 8
      %v581 = vpop.permute.xlu0 %580
      %582 = vrot.lane.b32.xlu0 %v442, 8
      %v583 = vpop.permute.xlu0 %582
      %584 = vrot.lane.b32.xlu0 %v444, 8
      %v585 = vpop.permute.xlu0 %584
      %586 = vrot.lane.b32.xlu0 %v447, 8
      %v587 = vpop.permute.xlu0 %586
      %588 = vrot.lane.b32.xlu0 %v449, 8
      %v589 = vpop.permute.xlu0 %588
      %590 = vrot.lane.b32.xlu0 %v451, 8
      %v591 = vpop.permute.xlu0 %590
      %592 = vrot.lane.b32.xlu0 %v453, 8
      %v593 = vpop.permute.xlu0 %592
      %594 = vrot.lane.b32.xlu0 %v456, 8
      %v595 = vpop.permute.xlu0 %594
      %596 = vrot.lane.b32.xlu0 %v458, 8
      %v597 = vpop.permute.xlu0 %596
      %598 = vrot.lane.b32.xlu0 %v460, 8
      %v599 = vpop.permute.xlu0 %598
      %600 = vrot.lane.b32.xlu0 %v462, 8
      %v601 = vpop.permute.xlu0 %600
      %602 = vrot.lane.b32.xlu0 %v465, 8
      %v603 = vpop.permute.xlu0 %602
      %604 = vrot.lane.b32.xlu0 %v467, 8
      %v605 = vpop.permute.xlu0 %604
      %606 = vrot.lane.b32.xlu0 %v469, 8
      %v607 = vpop.permute.xlu0 %606
      %608 = vrot.lane.b32.xlu0 %v471, 8
      %v609 = vpop.permute.xlu0 %608
      %610 = vrot.lane.b32.xlu0 %v474, 8
      %v611 = vpop.permute.xlu0 %610
      %612 = vrot.lane.b32.xlu0 %v476, 8
      %v613 = vpop.permute.xlu0 %612
      %614 = vrot.lane.b32.xlu0 %v478, 8
      %v615 = vpop.permute.xlu0 %614
      %616 = vrot.lane.b32.xlu0 %v480, 8
      %v617 = vpop.permute.xlu0 %616
      %618 = vrot.lane.b32.xlu0 %v483, 8
      %v619 = vpop.permute.xlu0 %618
      %620 = vrot.lane.b32.xlu0 %v485, 8
      %v621 = vpop.permute.xlu0 %620
      %622 = vrot.lane.b32.xlu0 %v487, 8
      %v623 = vpop.permute.xlu0 %622
      %624 = vrot.lane.b32.xlu0 %v489, 8
      %v625 = vpop.permute.xlu0 %624
      %626 = vrot.lane.b32.xlu0 %v492, 8
      %v627 = vpop.permute.xlu0 %626
      %628 = vrot.lane.b32.xlu0 %v494, 8
      %v629 = vpop.permute.xlu0 %628
      %630 = vrot.lane.b32.xlu0 %v496, 8
      %v631 = vpop.permute.xlu0 %630
      %632 = vrot.lane.b32.xlu0 %v498, 8
      %v633 = vpop.permute.xlu0 %632
      %634 = vrot.lane.b32.xlu0 %v501, 8
      %v635 = vpop.permute.xlu0 %634
      %636 = vrot.lane.b32.xlu0 %v503, 8
      %v637 = vpop.permute.xlu0 %636
      %638 = vrot.lane.b32.xlu0 %v505, 8
      %v639 = vpop.permute.xlu0 %638
      %640 = vrot.lane.b32.xlu0 %v507, 8
      %v641 = vpop.permute.xlu0 %640
      %642 = vrot.lane.b32.xlu0 %v510, 8
      %v643 = vpop.permute.xlu0 %642
      %644 = vrot.lane.b32.xlu0 %v512, 8
      %v645 = vpop.permute.xlu0 %644
      %646 = vrot.lane.b32.xlu0 %v514, 8
      %v647 = vpop.permute.xlu0 %646
      %648 = vrot.lane.b32.xlu0 %v516, 8
      %v649 = vpop.permute.xlu0 %648
      %650 = vrot.lane.b32.xlu0 %v519, 8
      %v651 = vpop.permute.xlu0 %650
      %652 = vrot.lane.b32.xlu0 %v521, 8
      %v653 = vpop.permute.xlu0 %652
      %654 = vrot.lane.b32.xlu0 %v523, 8
      %v655 = vpop.permute.xlu0 %654
      %656 = vrot.lane.b32.xlu0 %v525, 8
      %v657 = vpop.permute.xlu0 %656
      %658 = vrot.lane.b32.xlu0 %v528, 8
      %v659 = vpop.permute.xlu0 %658
      %660 = vrot.lane.b32.xlu0 %v530, 8
      %v661 = vpop.permute.xlu0 %660
      %662 = vrot.lane.b32.xlu0 %v532, 8
      %v663 = vpop.permute.xlu0 %662
      %664 = vrot.lane.b32.xlu0 %v534, 8
      %v665 = vpop.permute.xlu0 %664
      %666 = vrot.lane.b32.xlu0 %v537, 8
      %v667 = vpop.permute.xlu0 %666
      %668 = vrot.lane.b32.xlu0 %v539, 8
      %v669 = vpop.permute.xlu0 %668
      %670 = vrot.lane.b32.xlu0 %v541, 8
      %v671 = vpop.permute.xlu0 %670
      %672 = vrot.lane.b32.xlu0 %v543, 8
      %v673 = vpop.permute.xlu0 %672
      %674 = vrot.lane.b32.xlu0 %v546, 8
      %v675 = vpop.permute.xlu0 %674
      %676 = vrot.lane.b32.xlu0 %v548, 8
      %v677 = vpop.permute.xlu0 %676
      %678 = vrot.lane.b32.xlu0 %v550, 8
      %v679 = vpop.permute.xlu0 %678
      %680 = vrot.lane.b32.xlu0 %v552, 8
      %v681 = vpop.permute.xlu0 %680
      %682 = vrot.lane.b32.xlu0 %v555, 8
      %v683 = vpop.permute.xlu0 %682
      %684 = vrot.lane.b32.xlu0 %v557, 8
      %v685 = vpop.permute.xlu0 %684
      %686 = vrot.lane.b32.xlu0 %v559, 8
      %v687 = vpop.permute.xlu0 %686
      %688 = vrot.lane.b32.xlu0 %v561, 8
      %v689 = vpop.permute.xlu0 %688
      %vm754 = vcmask 1045504
      %v755 = vrot.slane %v247, 2
      %v756 = vrot.slane %v248, 2
      %v757 = vsel %vm754, %v755, %v756
      %v758 = vrot.slane %v249, 2
      %v759 = vsel %vm754, %v756, %v758
      %v760 = vrot.slane %v250, 2
      %v761 = vsel %vm754, %v758, %v760
      %v762 = vrot.slane %v251, 2
      %v763 = vsel %vm754, %v760, %v762
      %v764 = vrot.slane %v252, 2
      %v765 = vrot.slane %v253, 2
      %v766 = vsel %vm754, %v764, %v765
      %v767 = vrot.slane %v254, 2
      %v768 = vsel %vm754, %v765, %v767
      %v769 = vrot.slane %v255, 2
      %v770 = vsel %vm754, %v767, %v769
      %v771 = vrot.slane %v256, 2
      %v772 = vsel %vm754, %v769, %v771
      %v773 = vrot.slane %v257, 2
      %v774 = vrot.slane %v258, 2
      %v775 = vsel %vm754, %v773, %v774
      %v776 = vrot.slane %v259, 2
      %v777 = vsel %vm754, %v774, %v776
      %v778 = vrot.slane %v260, 2
      %v779 = vsel %vm754, %v776, %v778
      %v780 = vrot.slane %v261, 2
      %v781 = vsel %vm754, %v778, %v780
      %v782 = vrot.slane %v262, 2
      %v783 = vrot.slane %v263, 2
      %v784 = vsel %vm754, %v782, %v783
      %v785 = vrot.slane %v264, 2
      %v786 = vsel %vm754, %v783, %v785
      %v787 = vrot.slane %v265, 2
      %v788 = vsel %vm754, %v785, %v787
      %v789 = vrot.slane %v266, 2
      %v790 = vsel %vm754, %v787, %v789
      %v791 = vrot.slane %v267, 2
      %v792 = vrot.slane %v268, 2
      %v793 = vsel %vm754, %v791, %v792
      %v794 = vrot.slane %v269, 2
      %v795 = vsel %vm754, %v792, %v794
      %v796 = vrot.slane %v270, 2
      %v797 = vsel %vm754, %v794, %v796
      %v798 = vrot.slane %v271, 2
      %v799 = vsel %vm754, %v796, %v798
      %v800 = vrot.slane %v272, 2
      %v801 = vrot.slane %v273, 2
      %v802 = vsel %vm754, %v800, %v801
      %v803 = vrot.slane %v274, 2
      %v804 = vsel %vm754, %v801, %v803
      %v805 = vrot.slane %v275, 2
      %v806 = vsel %vm754, %v803, %v805
      %v807 = vrot.slane %v276, 2
      %v808 = vsel %vm754, %v805, %v807
      %v809 = vrot.slane %v277, 2
      %v810 = vrot.slane %v278, 2
      %v811 = vsel %vm754, %v809, %v810
      %v812 = vrot.slane %v279, 2
      %v813 = vsel %vm754, %v810, %v812
      %v814 = vrot.slane %v280, 2
      %v815 = vsel %vm754, %v812, %v814
      %v816 = vrot.slane %v281, 2
      %v817 = vsel %vm754, %v814, %v816
      %v818 = vrot.slane %v282, 2
      %v819 = vrot.slane %v283, 2
      %v820 = vsel %vm754, %v818, %v819
      %v821 = vrot.slane %v284, 2
      %v822 = vsel %vm754, %v819, %v821
      %v823 = vrot.slane %v285, 2
      %v824 = vsel %vm754, %v821, %v823
      %v825 = vrot.slane %v286, 2
      %v826 = vsel %vm754, %v823, %v825
      %v827 = vrot.slane %v287, 2
      %v828 = vrot.slane %v288, 2
      %v829 = vsel %vm754, %v827, %v828
      %v830 = vrot.slane %v289, 2
      %v831 = vsel %vm754, %v828, %v830
      %v832 = vrot.slane %v290, 2
      %v833 = vsel %vm754, %v830, %v832
      %v834 = vrot.slane %v291, 2
      %v835 = vsel %vm754, %v832, %v834
      %v836 = vrot.slane %v292, 2
      %v837 = vrot.slane %v293, 2
      %v838 = vsel %vm754, %v836, %v837
      %v839 = vrot.slane %v294, 2
      %v840 = vsel %vm754, %v837, %v839
      %v841 = vrot.slane %v295, 2
      %v842 = vsel %vm754, %v839, %v841
      %v843 = vrot.slane %v296, 2
      %v844 = vsel %vm754, %v841, %v843
      %v845 = vrot.slane %v297, 2
      %v846 = vrot.slane %v298, 2
      %v847 = vsel %vm754, %v845, %v846
      %v848 = vrot.slane %v299, 2
      %v849 = vsel %vm754, %v846, %v848
      %v850 = vrot.slane %v300, 2
      %v851 = vsel %vm754, %v848, %v850
      %v852 = vrot.slane %v301, 2
      %v853 = vsel %vm754, %v850, %v852
      %v854 = vrot.slane %v302, 2
      %v855 = vrot.slane %v303, 2
      %v856 = vsel %vm754, %v854, %v855
      %v857 = vrot.slane %v304, 2
      %v858 = vsel %vm754, %v855, %v857
      %v859 = vrot.slane %v305, 2
      %v860 = vsel %vm754, %v857, %v859
      %v861 = vrot.slane %v306, 2
      %v862 = vsel %vm754, %v859, %v861
      %v863 = vrot.slane %v307, 2
      %v864 = vrot.slane %v308, 2
      %v865 = vsel %vm754, %v863, %v864
      %v866 = vrot.slane %v309, 2
      %v867 = vsel %vm754, %v864, %v866
      %v868 = vrot.slane %v310, 2
      %v869 = vsel %vm754, %v866, %v868
      %v870 = vrot.slane %v311, 2
      %v871 = vsel %vm754, %v868, %v870
      %v872 = vrot.slane %v312, 2
      %v873 = vrot.slane %v313, 2
      %v874 = vsel %vm754, %v872, %v873
      %v875 = vrot.slane %v314, 2
      %v876 = vsel %vm754, %v873, %v875
      %v877 = vrot.slane %v315, 2
      %v878 = vsel %vm754, %v875, %v877
      %v879 = vrot.slane %v316, 2
      %v880 = vsel %vm754, %v877, %v879
      %v881 = vrot.slane %v317, 2
      %v882 = vrot.slane %v318, 2
      %v883 = vsel %vm754, %v881, %v882
      %v884 = vrot.slane %v319, 2
      %v885 = vsel %vm754, %v882, %v884
      %v886 = vrot.slane %v320, 2
      %v887 = vsel %vm754, %v884, %v886
      %v888 = vrot.slane %v321, 2
      %v889 = vsel %vm754, %v886, %v888
      %v890 = vrot.slane %v322, 2
      %v891 = vrot.slane %v323, 2
      %v892 = vsel %vm754, %v890, %v891
      %v893 = vrot.slane %v324, 2
      %v894 = vsel %vm754, %v891, %v893
      %v895 = vrot.slane %v325, 2
      %v896 = vsel %vm754, %v893, %v895
      %v897 = vrot.slane %v326, 2
      %v898 = vsel %vm754, %v895, %v897
      %899 = vrot.lane.b32.xlu0 %v757, 16
      %v900 = vpop.permute.xlu0 %899
      %901 = vrot.lane.b32.xlu0 %v759, 16
      %v902 = vpop.permute.xlu0 %901
      %903 = vrot.lane.b32.xlu0 %v761, 16
      %v904 = vpop.permute.xlu0 %903
      %905 = vrot.lane.b32.xlu0 %v763, 16
      %v906 = vpop.permute.xlu0 %905
      %907 = vrot.lane.b32.xlu0 %v766, 16
      %v908 = vpop.permute.xlu0 %907
      %909 = vrot.lane.b32.xlu0 %v768, 16
      %v910 = vpop.permute.xlu0 %909
      %911 = vrot.lane.b32.xlu0 %v770, 16
      %v912 = vpop.permute.xlu0 %911
      %913 = vrot.lane.b32.xlu0 %v772, 16
      %v914 = vpop.permute.xlu0 %913
      %915 = vrot.lane.b32.xlu0 %v775, 16
      %v916 = vpop.permute.xlu0 %915
      %917 = vrot.lane.b32.xlu0 %v777, 16
      %v918 = vpop.permute.xlu0 %917
      %919 = vrot.lane.b32.xlu0 %v779, 16
      %v920 = vpop.permute.xlu0 %919
      %921 = vrot.lane.b32.xlu0 %v781, 16
      %v922 = vpop.permute.xlu0 %921
      %923 = vrot.lane.b32.xlu0 %v784, 16
      %v924 = vpop.permute.xlu0 %923
      %925 = vrot.lane.b32.xlu0 %v786, 16
      %v926 = vpop.permute.xlu0 %925
      %927 = vrot.lane.b32.xlu0 %v788, 16
      %v928 = vpop.permute.xlu0 %927
      %929 = vrot.lane.b32.xlu0 %v790, 16
      %v930 = vpop.permute.xlu0 %929
      %931 = vrot.lane.b32.xlu0 %v793, 16
      %v932 = vpop.permute.xlu0 %931
      %933 = vrot.lane.b32.xlu0 %v795, 16
      %v934 = vpop.permute.xlu0 %933
      %935 = vrot.lane.b32.xlu0 %v797, 16
      %v936 = vpop.permute.xlu0 %935
      %937 = vrot.lane.b32.xlu0 %v799, 16
      %v938 = vpop.permute.xlu0 %937
      %939 = vrot.lane.b32.xlu0 %v802, 16
      %v940 = vpop.permute.xlu0 %939
      %941 = vrot.lane.b32.xlu0 %v804, 16
      %v942 = vpop.permute.xlu0 %941
      %943 = vrot.lane.b32.xlu0 %v806, 16
      %v944 = vpop.permute.xlu0 %943
      %945 = vrot.lane.b32.xlu0 %v808, 16
      %v946 = vpop.permute.xlu0 %945
      %947 = vrot.lane.b32.xlu0 %v811, 16
      %v948 = vpop.permute.xlu0 %947
      %949 = vrot.lane.b32.xlu0 %v813, 16
      %v950 = vpop.permute.xlu0 %949
      %951 = vrot.lane.b32.xlu0 %v815, 16
      %v952 = vpop.permute.xlu0 %951
      %953 = vrot.lane.b32.xlu0 %v817, 16
      %v954 = vpop.permute.xlu0 %953
      %955 = vrot.lane.b32.xlu0 %v820, 16
      %v956 = vpop.permute.xlu0 %955
      %957 = vrot.lane.b32.xlu0 %v822, 16
      %v958 = vpop.permute.xlu0 %957
      %959 = vrot.lane.b32.xlu0 %v824, 16
      %v960 = vpop.permute.xlu0 %959
      %961 = vrot.lane.b32.xlu0 %v826, 16
      %v962 = vpop.permute.xlu0 %961
      %963 = vrot.lane.b32.xlu0 %v829, 16
      %v964 = vpop.permute.xlu0 %963
      %965 = vrot.lane.b32.xlu0 %v831, 16
      %v966 = vpop.permute.xlu0 %965
      %967 = vrot.lane.b32.xlu0 %v833, 16
      %v968 = vpop.permute.xlu0 %967
      %969 = vrot.lane.b32.xlu0 %v835, 16
      %v970 = vpop.permute.xlu0 %969
      %971 = vrot.lane.b32.xlu0 %v838, 16
      %v972 = vpop.permute.xlu0 %971
      %973 = vrot.lane.b32.xlu0 %v840, 16
      %v974 = vpop.permute.xlu0 %973
      %975 = vrot.lane.b32.xlu0 %v842, 16
      %v976 = vpop.permute.xlu0 %975
      %977 = vrot.lane.b32.xlu0 %v844, 16
      %v978 = vpop.permute.xlu0 %977
      %979 = vrot.lane.b32.xlu0 %v847, 16
      %v980 = vpop.permute.xlu0 %979
      %981 = vrot.lane.b32.xlu0 %v849, 16
      %v982 = vpop.permute.xlu0 %981
      %983 = vrot.lane.b32.xlu0 %v851, 16
      %v984 = vpop.permute.xlu0 %983
      %985 = vrot.lane.b32.xlu0 %v853, 16
      %v986 = vpop.permute.xlu0 %985
      %987 = vrot.lane.b32.xlu0 %v856, 16
      %v988 = vpop.permute.xlu0 %987
      %989 = vrot.lane.b32.xlu0 %v858, 16
      %v990 = vpop.permute.xlu0 %989
      %991 = vrot.lane.b32.xlu0 %v860, 16
      %v992 = vpop.permute.xlu0 %991
      %993 = vrot.lane.b32.xlu0 %v862, 16
      %v994 = vpop.permute.xlu0 %993
      %995 = vrot.lane.b32.xlu0 %v865, 16
      %v996 = vpop.permute.xlu0 %995
      %997 = vrot.lane.b32.xlu0 %v867, 16
      %v998 = vpop.permute.xlu0 %997
      %999 = vrot.lane.b32.xlu0 %v869, 16
      %v1000 = vpop.permute.xlu0 %999
      %1001 = vrot.lane.b32.xlu0 %v871, 16
      %v1002 = vpop.permute.xlu0 %1001
      %1003 = vrot.lane.b32.xlu0 %v874, 16
      %v1004 = vpop.permute.xlu0 %1003
      %1005 = vrot.lane.b32.xlu0 %v876, 16
      %v1006 = vpop.permute.xlu0 %1005
      %1007 = vrot.lane.b32.xlu0 %v878, 16
      %v1008 = vpop.permute.xlu0 %1007
      %1009 = vrot.lane.b32.xlu0 %v880, 16
      %v1010 = vpop.permute.xlu0 %1009
      %1011 = vrot.lane.b32.xlu0 %v883, 16
      %v1012 = vpop.permute.xlu0 %1011
      %1013 = vrot.lane.b32.xlu0 %v885, 16
      %v1014 = vpop.permute.xlu0 %1013
      %1015 = vrot.lane.b32.xlu0 %v887, 16
      %v1016 = vpop.permute.xlu0 %1015
      %1017 = vrot.lane.b32.xlu0 %v889, 16
      %v1018 = vpop.permute.xlu0 %1017
      %1019 = vrot.lane.b32.xlu0 %v892, 16
      %v1020 = vpop.permute.xlu0 %1019
      %1021 = vrot.lane.b32.xlu0 %v894, 16
      %v1022 = vpop.permute.xlu0 %1021
      %1023 = vrot.lane.b32.xlu0 %v896, 16
      %v1024 = vpop.permute.xlu0 %1023
      %1025 = vrot.lane.b32.xlu0 %v898, 16
      %v1026 = vpop.permute.xlu0 %1025
      %1095 = vrot.lane.b32.xlu0 %v252, 24
      %v1096 = vpop.permute.xlu0 %1095
      %1097 = vrot.lane.b32.xlu0 %v253, 24
      %v1098 = vpop.permute.xlu0 %1097
      %1099 = vrot.lane.b32.xlu0 %v254, 24
      %v1100 = vpop.permute.xlu0 %1099
      %1101 = vrot.lane.b32.xlu0 %v255, 24
      %v1102 = vpop.permute.xlu0 %1101
      %1103 = vrot.lane.b32.xlu0 %v257, 24
      %v1104 = vpop.permute.xlu0 %1103
      %1105 = vrot.lane.b32.xlu0 %v258, 24
      %v1106 = vpop.permute.xlu0 %1105
      %1107 = vrot.lane.b32.xlu0 %v259, 24
      %v1108 = vpop.permute.xlu0 %1107
      %1109 = vrot.lane.b32.xlu0 %v260, 24
      %v1110 = vpop.permute.xlu0 %1109
      %1111 = vrot.lane.b32.xlu0 %v262, 24
      %v1112 = vpop.permute.xlu0 %1111
      %1113 = vrot.lane.b32.xlu0 %v263, 24
      %v1114 = vpop.permute.xlu0 %1113
      %1115 = vrot.lane.b32.xlu0 %v264, 24
      %v1116 = vpop.permute.xlu0 %1115
      %1117 = vrot.lane.b32.xlu0 %v265, 24
      %v1118 = vpop.permute.xlu0 %1117
      %1119 = vrot.lane.b32.xlu0 %v267, 24
      %v1120 = vpop.permute.xlu0 %1119
      %1121 = vrot.lane.b32.xlu0 %v268, 24
      %v1122 = vpop.permute.xlu0 %1121
      %1123 = vrot.lane.b32.xlu0 %v269, 24
      %v1124 = vpop.permute.xlu0 %1123
      %1125 = vrot.lane.b32.xlu0 %v270, 24
      %v1126 = vpop.permute.xlu0 %1125
      %1127 = vrot.lane.b32.xlu0 %v272, 24
      %v1128 = vpop.permute.xlu0 %1127
      %1129 = vrot.lane.b32.xlu0 %v273, 24
      %v1130 = vpop.permute.xlu0 %1129
      %1131 = vrot.lane.b32.xlu0 %v274, 24
      %v1132 = vpop.permute.xlu0 %1131
      %1133 = vrot.lane.b32.xlu0 %v275, 24
      %v1134 = vpop.permute.xlu0 %1133
      %1135 = vrot.lane.b32.xlu0 %v277, 24
      %v1136 = vpop.permute.xlu0 %1135
      %1137 = vrot.lane.b32.xlu0 %v278, 24
      %v1138 = vpop.permute.xlu0 %1137
      %1139 = vrot.lane.b32.xlu0 %v279, 24
      %v1140 = vpop.permute.xlu0 %1139
      %1141 = vrot.lane.b32.xlu0 %v280, 24
      %v1142 = vpop.permute.xlu0 %1141
      %1143 = vrot.lane.b32.xlu0 %v282, 24
      %v1144 = vpop.permute.xlu0 %1143
      %1145 = vrot.lane.b32.xlu0 %v283, 24
      %v1146 = vpop.permute.xlu0 %1145
      %1147 = vrot.lane.b32.xlu0 %v284, 24
      %v1148 = vpop.permute.xlu0 %1147
      %1149 = vrot.lane.b32.xlu0 %v285, 24
      %v1150 = vpop.permute.xlu0 %1149
      %1151 = vrot.lane.b32.xlu0 %v287, 24
      %v1152 = vpop.permute.xlu0 %1151
      %1153 = vrot.lane.b32.xlu0 %v288, 24
      %v1154 = vpop.permute.xlu0 %1153
      %1155 = vrot.lane.b32.xlu0 %v289, 24
      %v1156 = vpop.permute.xlu0 %1155
      %1157 = vrot.lane.b32.xlu0 %v290, 24
      %v1158 = vpop.permute.xlu0 %1157
      %1159 = vrot.lane.b32.xlu0 %v292, 24
      %v1160 = vpop.permute.xlu0 %1159
      %1161 = vrot.lane.b32.xlu0 %v293, 24
      %v1162 = vpop.permute.xlu0 %1161
      %1163 = vrot.lane.b32.xlu0 %v294, 24
      %v1164 = vpop.permute.xlu0 %1163
      %1165 = vrot.lane.b32.xlu0 %v295, 24
      %v1166 = vpop.permute.xlu0 %1165
      %1167 = vrot.lane.b32.xlu0 %v297, 24
      %v1168 = vpop.permute.xlu0 %1167
      %1169 = vrot.lane.b32.xlu0 %v298, 24
      %v1170 = vpop.permute.xlu0 %1169
      %1171 = vrot.lane.b32.xlu0 %v299, 24
      %v1172 = vpop.permute.xlu0 %1171
      %1173 = vrot.lane.b32.xlu0 %v300, 24
      %v1174 = vpop.permute.xlu0 %1173
      %1175 = vrot.lane.b32.xlu0 %v302, 24
      %v1176 = vpop.permute.xlu0 %1175
      %1177 = vrot.lane.b32.xlu0 %v303, 24
      %v1178 = vpop.permute.xlu0 %1177
      %1179 = vrot.lane.b32.xlu0 %v304, 24
      %v1180 = vpop.permute.xlu0 %1179
      %1181 = vrot.lane.b32.xlu0 %v305, 24
      %v1182 = vpop.permute.xlu0 %1181
      %1183 = vrot.lane.b32.xlu0 %v307, 24
      %v1184 = vpop.permute.xlu0 %1183
      %1185 = vrot.lane.b32.xlu0 %v308, 24
      %v1186 = vpop.permute.xlu0 %1185
      %1187 = vrot.lane.b32.xlu0 %v309, 24
      %v1188 = vpop.permute.xlu0 %1187
      %1189 = vrot.lane.b32.xlu0 %v310, 24
      %v1190 = vpop.permute.xlu0 %1189
      %1191 = vrot.lane.b32.xlu0 %v312, 24
      %v1192 = vpop.permute.xlu0 %1191
      %1193 = vrot.lane.b32.xlu0 %v313, 24
      %v1194 = vpop.permute.xlu0 %1193
      %1195 = vrot.lane.b32.xlu0 %v314, 24
      %v1196 = vpop.permute.xlu0 %1195
      %1197 = vrot.lane.b32.xlu0 %v315, 24
      %v1198 = vpop.permute.xlu0 %1197
      %1199 = vrot.lane.b32.xlu0 %v317, 24
      %v1200 = vpop.permute.xlu0 %1199
      %1201 = vrot.lane.b32.xlu0 %v318, 24
      %v1202 = vpop.permute.xlu0 %1201
      %1203 = vrot.lane.b32.xlu0 %v319, 24
      %v1204 = vpop.permute.xlu0 %1203
      %1205 = vrot.lane.b32.xlu0 %v320, 24
      %v1206 = vpop.permute.xlu0 %1205
      %1207 = vrot.lane.b32.xlu0 %v322, 24
      %v1208 = vpop.permute.xlu0 %1207
      %1209 = vrot.lane.b32.xlu0 %v323, 24
      %v1210 = vpop.permute.xlu0 %1209
      %1211 = vrot.lane.b32.xlu0 %v324, 24
      %v1212 = vpop.permute.xlu0 %1211
      %1213 = vrot.lane.b32.xlu0 %v325, 24
      %v1214 = vpop.permute.xlu0 %1213
      %1215 = vrot.lane.b32.xlu0 %v327, 24
      %v1216 = vpop.permute.xlu0 %1215
      %1217 = vrot.lane.b32.xlu0 %v328, 24
      %v1218 = vpop.permute.xlu0 %1217
      %1219 = vrot.lane.b32.xlu0 %v329, 24
      %v1220 = vpop.permute.xlu0 %1219
      %1221 = vrot.lane.b32.xlu0 %v330, 24
      %v1222 = vpop.permute.xlu0 %1221
      %v1288 = vrot.slane %v327, 1
      %v1289 = vrot.slane %v328, 1
      %v1290 = vsel %vm417, %v1288, %v1289
      %v1291 = vrot.slane %v329, 1
      %v1292 = vsel %vm417, %v1289, %v1291
      %v1293 = vrot.slane %v330, 1
      %v1294 = vsel %vm417, %v1291, %v1293
      %v1295 = vrot.slane %v331, 1
      %v1296 = vsel %vm417, %v1293, %v1295
      %1297 = vrot.lane.b32.xlu0 %v429, 32
      %v1298 = vpop.permute.xlu0 %1297
      %1299 = vrot.lane.b32.xlu0 %v431, 32
      %v1300 = vpop.permute.xlu0 %1299
      %1301 = vrot.lane.b32.xlu0 %v433, 32
      %v1302 = vpop.permute.xlu0 %1301
      %1303 = vrot.lane.b32.xlu0 %v435, 32
      %v1304 = vpop.permute.xlu0 %1303
      %1305 = vrot.lane.b32.xlu0 %v438, 32
      %v1306 = vpop.permute.xlu0 %1305
      %1307 = vrot.lane.b32.xlu0 %v440, 32
      %v1308 = vpop.permute.xlu0 %1307
      %1309 = vrot.lane.b32.xlu0 %v442, 32
      %v1310 = vpop.permute.xlu0 %1309
      %1311 = vrot.lane.b32.xlu0 %v444, 32
      %v1312 = vpop.permute.xlu0 %1311
      %1313 = vrot.lane.b32.xlu0 %v447, 32
      %v1314 = vpop.permute.xlu0 %1313
      %1315 = vrot.lane.b32.xlu0 %v449, 32
      %v1316 = vpop.permute.xlu0 %1315
      %1317 = vrot.lane.b32.xlu0 %v451, 32
      %v1318 = vpop.permute.xlu0 %1317
      %1319 = vrot.lane.b32.xlu0 %v453, 32
      %v1320 = vpop.permute.xlu0 %1319
      %1321 = vrot.lane.b32.xlu0 %v456, 32
      %v1322 = vpop.permute.xlu0 %1321
      %1323 = vrot.lane.b32.xlu0 %v458, 32
      %v1324 = vpop.permute.xlu0 %1323
      %1325 = vrot.lane.b32.xlu0 %v460, 32
      %v1326 = vpop.permute.xlu0 %1325
      %1327 = vrot.lane.b32.xlu0 %v462, 32
      %v1328 = vpop.permute.xlu0 %1327
      %1329 = vrot.lane.b32.xlu0 %v465, 32
      %v1330 = vpop.permute.xlu0 %1329
      %1331 = vrot.lane.b32.xlu0 %v467, 32
      %v1332 = vpop.permute.xlu0 %1331
      %1333 = vrot.lane.b32.xlu0 %v469, 32
      %v1334 = vpop.permute.xlu0 %1333
      %1335 = vrot.lane.b32.xlu0 %v471, 32
      %v1336 = vpop.permute.xlu0 %1335
      %1337 = vrot.lane.b32.xlu0 %v474, 32
      %v1338 = vpop.permute.xlu0 %1337
      %1339 = vrot.lane.b32.xlu0 %v476, 32
      %v1340 = vpop.permute.xlu0 %1339
      %1341 = vrot.lane.b32.xlu0 %v478, 32
      %v1342 = vpop.permute.xlu0 %1341
      %1343 = vrot.lane.b32.xlu0 %v480, 32
      %v1344 = vpop.permute.xlu0 %1343
      %1345 = vrot.lane.b32.xlu0 %v483, 32
      %v1346 = vpop.permute.xlu0 %1345
      %1347 = vrot.lane.b32.xlu0 %v485, 32
      %v1348 = vpop.permute.xlu0 %1347
      %1349 = vrot.lane.b32.xlu0 %v487, 32
      %v1350 = vpop.permute.xlu0 %1349
      %1351 = vrot.lane.b32.xlu0 %v489, 32
      %v1352 = vpop.permute.xlu0 %1351
      %1353 = vrot.lane.b32.xlu0 %v492, 32
      %v1354 = vpop.permute.xlu0 %1353
      %1355 = vrot.lane.b32.xlu0 %v494, 32
      %v1356 = vpop.permute.xlu0 %1355
      %1357 = vrot.lane.b32.xlu0 %v496, 32
      %v1358 = vpop.permute.xlu0 %1357
      %1359 = vrot.lane.b32.xlu0 %v498, 32
      %v1360 = vpop.permute.xlu0 %1359
      %1361 = vrot.lane.b32.xlu0 %v501, 32
      %v1362 = vpop.permute.xlu0 %1361
      %1363 = vrot.lane.b32.xlu0 %v503, 32
      %v1364 = vpop.permute.xlu0 %1363
      %1365 = vrot.lane.b32.xlu0 %v505, 32
      %v1366 = vpop.permute.xlu0 %1365
      %1367 = vrot.lane.b32.xlu0 %v507, 32
      %v1368 = vpop.permute.xlu0 %1367
      %1369 = vrot.lane.b32.xlu0 %v510, 32
      %v1370 = vpop.permute.xlu0 %1369
      %1371 = vrot.lane.b32.xlu0 %v512, 32
      %v1372 = vpop.permute.xlu0 %1371
      %1373 = vrot.lane.b32.xlu0 %v514, 32
      %v1374 = vpop.permute.xlu0 %1373
      %1375 = vrot.lane.b32.xlu0 %v516, 32
      %v1376 = vpop.permute.xlu0 %1375
      %1377 = vrot.lane.b32.xlu0 %v519, 32
      %v1378 = vpop.permute.xlu0 %1377
      %1379 = vrot.lane.b32.xlu0 %v521, 32
      %v1380 = vpop.permute.xlu0 %1379
      %1381 = vrot.lane.b32.xlu0 %v523, 32
      %v1382 = vpop.permute.xlu0 %1381
      %1383 = vrot.lane.b32.xlu0 %v525, 32
      %v1384 = vpop.permute.xlu0 %1383
      %1385 = vrot.lane.b32.xlu0 %v528, 32
      %v1386 = vpop.permute.xlu0 %1385
      %1387 = vrot.lane.b32.xlu0 %v530, 32
      %v1388 = vpop.permute.xlu0 %1387
      %1389 = vrot.lane.b32.xlu0 %v532, 32
      %v1390 = vpop.permute.xlu0 %1389
      %1391 = vrot.lane.b32.xlu0 %v534, 32
      %v1392 = vpop.permute.xlu0 %1391
      %1393 = vrot.lane.b32.xlu0 %v537, 32
      %v1394 = vpop.permute.xlu0 %1393
      %1395 = vrot.lane.b32.xlu0 %v539, 32
      %v1396 = vpop.permute.xlu0 %1395
      %1397 = vrot.lane.b32.xlu0 %v541, 32
      %v1398 = vpop.permute.xlu0 %1397
      %1399 = vrot.lane.b32.xlu0 %v543, 32
      %v1400 = vpop.permute.xlu0 %1399
      %1401 = vrot.lane.b32.xlu0 %v546, 32
      %v1402 = vpop.permute.xlu0 %1401
      %1403 = vrot.lane.b32.xlu0 %v548, 32
      %v1404 = vpop.permute.xlu0 %1403
      %1405 = vrot.lane.b32.xlu0 %v550, 32
      %v1406 = vpop.permute.xlu0 %1405
      %1407 = vrot.lane.b32.xlu0 %v552, 32
      %v1408 = vpop.permute.xlu0 %1407
      %1409 = vrot.lane.b32.xlu0 %v555, 32
      %v1410 = vpop.permute.xlu0 %1409
      %1411 = vrot.lane.b32.xlu0 %v557, 32
      %v1412 = vpop.permute.xlu0 %1411
      %1413 = vrot.lane.b32.xlu0 %v559, 32
      %v1414 = vpop.permute.xlu0 %1413
      %1415 = vrot.lane.b32.xlu0 %v561, 32
      %v1416 = vpop.permute.xlu0 %1415
      %1417 = vrot.lane.b32.xlu0 %v1290, 32
      %v1418 = vpop.permute.xlu0 %1417
      %1419 = vrot.lane.b32.xlu0 %v1292, 32
      %v1420 = vpop.permute.xlu0 %1419
      %1421 = vrot.lane.b32.xlu0 %v1294, 32
      %v1422 = vpop.permute.xlu0 %1421
      %1423 = vrot.lane.b32.xlu0 %v1296, 32
      %v1424 = vpop.permute.xlu0 %1423
      %v1489 = vrot.slane %v327, 2
      %v1490 = vrot.slane %v328, 2
      %v1491 = vsel %vm754, %v1489, %v1490
      %v1492 = vrot.slane %v329, 2
      %v1493 = vsel %vm754, %v1490, %v1492
      %v1494 = vrot.slane %v330, 2
      %v1495 = vsel %vm754, %v1492, %v1494
      %v1496 = vrot.slane %v331, 2
      %v1497 = vsel %vm754, %v1494, %v1496
      %1498 = vrot.lane.b32.xlu0 %v766, 40
      %v1499 = vpop.permute.xlu0 %1498
      %1500 = vrot.lane.b32.xlu0 %v768, 40
      %v1501 = vpop.permute.xlu0 %1500
      %1502 = vrot.lane.b32.xlu0 %v770, 40
      %v1503 = vpop.permute.xlu0 %1502
      %1504 = vrot.lane.b32.xlu0 %v772, 40
      %v1505 = vpop.permute.xlu0 %1504
      %1506 = vrot.lane.b32.xlu0 %v775, 40
      %v1507 = vpop.permute.xlu0 %1506
      %1508 = vrot.lane.b32.xlu0 %v777, 40
      %v1509 = vpop.permute.xlu0 %1508
      %1510 = vrot.lane.b32.xlu0 %v779, 40
      %v1511 = vpop.permute.xlu0 %1510
      %1512 = vrot.lane.b32.xlu0 %v781, 40
      %v1513 = vpop.permute.xlu0 %1512
      %1514 = vrot.lane.b32.xlu0 %v784, 40
      %v1515 = vpop.permute.xlu0 %1514
      %1516 = vrot.lane.b32.xlu0 %v786, 40
      %v1517 = vpop.permute.xlu0 %1516
      %1518 = vrot.lane.b32.xlu0 %v788, 40
      %v1519 = vpop.permute.xlu0 %1518
      %1520 = vrot.lane.b32.xlu0 %v790, 40
      %v1521 = vpop.permute.xlu0 %1520
      %1522 = vrot.lane.b32.xlu0 %v793, 40
      %v1523 = vpop.permute.xlu0 %1522
      %1524 = vrot.lane.b32.xlu0 %v795, 40
      %v1525 = vpop.permute.xlu0 %1524
      %1526 = vrot.lane.b32.xlu0 %v797, 40
      %v1527 = vpop.permute.xlu0 %1526
      %1528 = vrot.lane.b32.xlu0 %v799, 40
      %v1529 = vpop.permute.xlu0 %1528
      %1530 = vrot.lane.b32.xlu0 %v802, 40
      %v1531 = vpop.permute.xlu0 %1530
      %1532 = vrot.lane.b32.xlu0 %v804, 40
      %v1533 = vpop.permute.xlu0 %1532
      %1534 = vrot.lane.b32.xlu0 %v806, 40
      %v1535 = vpop.permute.xlu0 %1534
      %1536 = vrot.lane.b32.xlu0 %v808, 40
      %v1537 = vpop.permute.xlu0 %1536
      %1538 = vrot.lane.b32.xlu0 %v811, 40
      %v1539 = vpop.permute.xlu0 %1538
      %1540 = vrot.lane.b32.xlu0 %v813, 40
      %v1541 = vpop.permute.xlu0 %1540
      %1542 = vrot.lane.b32.xlu0 %v815, 40
      %v1543 = vpop.permute.xlu0 %1542
      %1544 = vrot.lane.b32.xlu0 %v817, 40
      %v1545 = vpop.permute.xlu0 %1544
      %1546 = vrot.lane.b32.xlu0 %v820, 40
      %v1547 = vpop.permute.xlu0 %1546
      %1548 = vrot.lane.b32.xlu0 %v822, 40
      %v1549 = vpop.permute.xlu0 %1548
      %1550 = vrot.lane.b32.xlu0 %v824, 40
      %v1551 = vpop.permute.xlu0 %1550
      %1552 = vrot.lane.b32.xlu0 %v826, 40
      %v1553 = vpop.permute.xlu0 %1552
      %1554 = vrot.lane.b32.xlu0 %v829, 40
      %v1555 = vpop.permute.xlu0 %1554
      %1556 = vrot.lane.b32.xlu0 %v831, 40
      %v1557 = vpop.permute.xlu0 %1556
      %1558 = vrot.lane.b32.xlu0 %v833, 40
      %v1559 = vpop.permute.xlu0 %1558
      %1560 = vrot.lane.b32.xlu0 %v835, 40
      %v1561 = vpop.permute.xlu0 %1560
      %1562 = vrot.lane.b32.xlu0 %v838, 40
      %v1563 = vpop.permute.xlu0 %1562
      %1564 = vrot.lane.b32.xlu0 %v840, 40
      %v1565 = vpop.permute.xlu0 %1564
      %1566 = vrot.lane.b32.xlu0 %v842, 40
      %v1567 = vpop.permute.xlu0 %1566
      %1568 = vrot.lane.b32.xlu0 %v844, 40
      %v1569 = vpop.permute.xlu0 %1568
      %1570 = vrot.lane.b32.xlu0 %v847, 40
      %v1571 = vpop.permute.xlu0 %1570
      %1572 = vrot.lane.b32.xlu0 %v849, 40
      %v1573 = vpop.permute.xlu0 %1572
      %1574 = vrot.lane.b32.xlu0 %v851, 40
      %v1575 = vpop.permute.xlu0 %1574
      %1576 = vrot.lane.b32.xlu0 %v853, 40
      %v1577 = vpop.permute.xlu0 %1576
      %1578 = vrot.lane.b32.xlu0 %v856, 40
      %v1579 = vpop.permute.xlu0 %1578
      %1580 = vrot.lane.b32.xlu0 %v858, 40
      %v1581 = vpop.permute.xlu0 %1580
      %1582 = vrot.lane.b32.xlu0 %v860, 40
      %v1583 = vpop.permute.xlu0 %1582
      %1584 = vrot.lane.b32.xlu0 %v862, 40
      %v1585 = vpop.permute.xlu0 %1584
      %1586 = vrot.lane.b32.xlu0 %v865, 40
      %v1587 = vpop.permute.xlu0 %1586
      %1588 = vrot.lane.b32.xlu0 %v867, 40
      %v1589 = vpop.permute.xlu0 %1588
      %1590 = vrot.lane.b32.xlu0 %v869, 40
      %v1591 = vpop.permute.xlu0 %1590
      %1592 = vrot.lane.b32.xlu0 %v871, 40
      %v1593 = vpop.permute.xlu0 %1592
      %1594 = vrot.lane.b32.xlu0 %v874, 40
      %v1595 = vpop.permute.xlu0 %1594
      %1596 = vrot.lane.b32.xlu0 %v876, 40
      %v1597 = vpop.permute.xlu0 %1596
      %1598 = vrot.lane.b32.xlu0 %v878, 40
      %v1599 = vpop.permute.xlu0 %1598
      %1600 = vrot.lane.b32.xlu0 %v880, 40
      %v1601 = vpop.permute.xlu0 %1600
      %1602 = vrot.lane.b32.xlu0 %v883, 40
      %v1603 = vpop.permute.xlu0 %1602
      %1604 = vrot.lane.b32.xlu0 %v885, 40
      %v1605 = vpop.permute.xlu0 %1604
      %1606 = vrot.lane.b32.xlu0 %v887, 40
      %v1607 = vpop.permute.xlu0 %1606
      %1608 = vrot.lane.b32.xlu0 %v889, 40
      %v1609 = vpop.permute.xlu0 %1608
      %1610 = vrot.lane.b32.xlu0 %v892, 40
      %v1611 = vpop.permute.xlu0 %1610
      %1612 = vrot.lane.b32.xlu0 %v894, 40
      %v1613 = vpop.permute.xlu0 %1612
      %1614 = vrot.lane.b32.xlu0 %v896, 40
      %v1615 = vpop.permute.xlu0 %1614
      %1616 = vrot.lane.b32.xlu0 %v898, 40
      %v1617 = vpop.permute.xlu0 %1616
      %1618 = vrot.lane.b32.xlu0 %v1491, 40
      %v1619 = vpop.permute.xlu0 %1618
      %1620 = vrot.lane.b32.xlu0 %v1493, 40
      %v1621 = vpop.permute.xlu0 %1620
      %1622 = vrot.lane.b32.xlu0 %v1495, 40
      %v1623 = vpop.permute.xlu0 %1622
      %1624 = vrot.lane.b32.xlu0 %v1497, 40
      %v1625 = vpop.permute.xlu0 %1624
      %1694 = vrot.lane.b32.xlu0 %v257, 48
      %v1695 = vpop.permute.xlu0 %1694
      %1696 = vrot.lane.b32.xlu0 %v258, 48
      %v1697 = vpop.permute.xlu0 %1696
      %1698 = vrot.lane.b32.xlu0 %v259, 48
      %v1699 = vpop.permute.xlu0 %1698
      %1700 = vrot.lane.b32.xlu0 %v260, 48
      %v1701 = vpop.permute.xlu0 %1700
      %1702 = vrot.lane.b32.xlu0 %v262, 48
      %v1703 = vpop.permute.xlu0 %1702
      %1704 = vrot.lane.b32.xlu0 %v263, 48
      %v1705 = vpop.permute.xlu0 %1704
      %1706 = vrot.lane.b32.xlu0 %v264, 48
      %v1707 = vpop.permute.xlu0 %1706
      %1708 = vrot.lane.b32.xlu0 %v265, 48
      %v1709 = vpop.permute.xlu0 %1708
      %1710 = vrot.lane.b32.xlu0 %v267, 48
      %v1711 = vpop.permute.xlu0 %1710
      %1712 = vrot.lane.b32.xlu0 %v268, 48
      %v1713 = vpop.permute.xlu0 %1712
      %1714 = vrot.lane.b32.xlu0 %v269, 48
      %v1715 = vpop.permute.xlu0 %1714
      %1716 = vrot.lane.b32.xlu0 %v270, 48
      %v1717 = vpop.permute.xlu0 %1716
      %1718 = vrot.lane.b32.xlu0 %v272, 48
      %v1719 = vpop.permute.xlu0 %1718
      %1720 = vrot.lane.b32.xlu0 %v273, 48
      %v1721 = vpop.permute.xlu0 %1720
      %1722 = vrot.lane.b32.xlu0 %v274, 48
      %v1723 = vpop.permute.xlu0 %1722
      %1724 = vrot.lane.b32.xlu0 %v275, 48
      %v1725 = vpop.permute.xlu0 %1724
      %1726 = vrot.lane.b32.xlu0 %v277, 48
      %v1727 = vpop.permute.xlu0 %1726
      %1728 = vrot.lane.b32.xlu0 %v278, 48
      %v1729 = vpop.permute.xlu0 %1728
      %1730 = vrot.lane.b32.xlu0 %v279, 48
      %v1731 = vpop.permute.xlu0 %1730
      %1732 = vrot.lane.b32.xlu0 %v280, 48
      %v1733 = vpop.permute.xlu0 %1732
      %1734 = vrot.lane.b32.xlu0 %v282, 48
      %v1735 = vpop.permute.xlu0 %1734
      %1736 = vrot.lane.b32.xlu0 %v283, 48
      %v1737 = vpop.permute.xlu0 %1736
      %1738 = vrot.lane.b32.xlu0 %v284, 48
      %v1739 = vpop.permute.xlu0 %1738
      %1740 = vrot.lane.b32.xlu0 %v285, 48
      %v1741 = vpop.permute.xlu0 %1740
      %1742 = vrot.lane.b32.xlu0 %v287, 48
      %v1743 = vpop.permute.xlu0 %1742
      %1744 = vrot.lane.b32.xlu0 %v288, 48
      %v1745 = vpop.permute.xlu0 %1744
      %1746 = vrot.lane.b32.xlu0 %v289, 48
      %v1747 = vpop.permute.xlu0 %1746
      %1748 = vrot.lane.b32.xlu0 %v290, 48
      %v1749 = vpop.permute.xlu0 %1748
      %1750 = vrot.lane.b32.xlu0 %v292, 48
      %v1751 = vpop.permute.xlu0 %1750
      %1752 = vrot.lane.b32.xlu0 %v293, 48
      %v1753 = vpop.permute.xlu0 %1752
      %1754 = vrot.lane.b32.xlu0 %v294, 48
      %v1755 = vpop.permute.xlu0 %1754
      %1756 = vrot.lane.b32.xlu0 %v295, 48
      %v1757 = vpop.permute.xlu0 %1756
      %1758 = vrot.lane.b32.xlu0 %v297, 48
      %v1759 = vpop.permute.xlu0 %1758
      %1760 = vrot.lane.b32.xlu0 %v298, 48
      %v1761 = vpop.permute.xlu0 %1760
      %1762 = vrot.lane.b32.xlu0 %v299, 48
      %v1763 = vpop.permute.xlu0 %1762
      %1764 = vrot.lane.b32.xlu0 %v300, 48
      %v1765 = vpop.permute.xlu0 %1764
      %1766 = vrot.lane.b32.xlu0 %v302, 48
      %v1767 = vpop.permute.xlu0 %1766
      %1768 = vrot.lane.b32.xlu0 %v303, 48
      %v1769 = vpop.permute.xlu0 %1768
      %1770 = vrot.lane.b32.xlu0 %v304, 48
      %v1771 = vpop.permute.xlu0 %1770
      %1772 = vrot.lane.b32.xlu0 %v305, 48
      %v1773 = vpop.permute.xlu0 %1772
      %1774 = vrot.lane.b32.xlu0 %v307, 48
      %v1775 = vpop.permute.xlu0 %1774
      %1776 = vrot.lane.b32.xlu0 %v308, 48
      %v1777 = vpop.permute.xlu0 %1776
      %1778 = vrot.lane.b32.xlu0 %v309, 48
      %v1779 = vpop.permute.xlu0 %1778
      %1780 = vrot.lane.b32.xlu0 %v310, 48
      %v1781 = vpop.permute.xlu0 %1780
      %1782 = vrot.lane.b32.xlu0 %v312, 48
      %v1783 = vpop.permute.xlu0 %1782
      %1784 = vrot.lane.b32.xlu0 %v313, 48
      %v1785 = vpop.permute.xlu0 %1784
      %1786 = vrot.lane.b32.xlu0 %v314, 48
      %v1787 = vpop.permute.xlu0 %1786
      %1788 = vrot.lane.b32.xlu0 %v315, 48
      %v1789 = vpop.permute.xlu0 %1788
      %1790 = vrot.lane.b32.xlu0 %v317, 48
      %v1791 = vpop.permute.xlu0 %1790
      %1792 = vrot.lane.b32.xlu0 %v318, 48
      %v1793 = vpop.permute.xlu0 %1792
      %1794 = vrot.lane.b32.xlu0 %v319, 48
      %v1795 = vpop.permute.xlu0 %1794
      %1796 = vrot.lane.b32.xlu0 %v320, 48
      %v1797 = vpop.permute.xlu0 %1796
      %1798 = vrot.lane.b32.xlu0 %v322, 48
      %v1799 = vpop.permute.xlu0 %1798
      %1800 = vrot.lane.b32.xlu0 %v323, 48
      %v1801 = vpop.permute.xlu0 %1800
      %1802 = vrot.lane.b32.xlu0 %v324, 48
      %v1803 = vpop.permute.xlu0 %1802
      %1804 = vrot.lane.b32.xlu0 %v325, 48
      %v1805 = vpop.permute.xlu0 %1804
      %1806 = vrot.lane.b32.xlu0 %v327, 48
      %v1807 = vpop.permute.xlu0 %1806
      %1808 = vrot.lane.b32.xlu0 %v328, 48
      %v1809 = vpop.permute.xlu0 %1808
      %1810 = vrot.lane.b32.xlu0 %v329, 48
      %v1811 = vpop.permute.xlu0 %1810
      %1812 = vrot.lane.b32.xlu0 %v330, 48
      %v1813 = vpop.permute.xlu0 %1812
      %1814 = vrot.lane.b32.xlu0 %v332, 48
      %v1815 = vpop.permute.xlu0 %1814
      %1816 = vrot.lane.b32.xlu0 %v333, 48
      %v1817 = vpop.permute.xlu0 %1816
      %1818 = vrot.lane.b32.xlu0 %v334, 48
      %v1819 = vpop.permute.xlu0 %1818
      %1820 = vrot.lane.b32.xlu0 %v335, 48
      %v1821 = vpop.permute.xlu0 %1820
      %v1887 = vrot.slane %v332, 1
      %v1888 = vrot.slane %v333, 1
      %v1889 = vsel %vm417, %v1887, %v1888
      %v1890 = vrot.slane %v334, 1
      %v1891 = vsel %vm417, %v1888, %v1890
      %v1892 = vrot.slane %v335, 1
      %v1893 = vsel %vm417, %v1890, %v1892
      %v1894 = vrot.slane %v336, 1
      %v1895 = vsel %vm417, %v1892, %v1894
      %1896 = vrot.lane.b32.xlu0 %v438, 56
      %v1897 = vpop.permute.xlu0 %1896
      %1898 = vrot.lane.b32.xlu0 %v440, 56
      %v1899 = vpop.permute.xlu0 %1898
      %1900 = vrot.lane.b32.xlu0 %v442, 56
      %v1901 = vpop.permute.xlu0 %1900
      %1902 = vrot.lane.b32.xlu0 %v444, 56
      %v1903 = vpop.permute.xlu0 %1902
      %1904 = vrot.lane.b32.xlu0 %v447, 56
      %v1905 = vpop.permute.xlu0 %1904
      %1906 = vrot.lane.b32.xlu0 %v449, 56
      %v1907 = vpop.permute.xlu0 %1906
      %1908 = vrot.lane.b32.xlu0 %v451, 56
      %v1909 = vpop.permute.xlu0 %1908
      %1910 = vrot.lane.b32.xlu0 %v453, 56
      %v1911 = vpop.permute.xlu0 %1910
      %1912 = vrot.lane.b32.xlu0 %v456, 56
      %v1913 = vpop.permute.xlu0 %1912
      %1914 = vrot.lane.b32.xlu0 %v458, 56
      %v1915 = vpop.permute.xlu0 %1914
      %1916 = vrot.lane.b32.xlu0 %v460, 56
      %v1917 = vpop.permute.xlu0 %1916
      %1918 = vrot.lane.b32.xlu0 %v462, 56
      %v1919 = vpop.permute.xlu0 %1918
      %1920 = vrot.lane.b32.xlu0 %v465, 56
      %v1921 = vpop.permute.xlu0 %1920
      %1922 = vrot.lane.b32.xlu0 %v467, 56
      %v1923 = vpop.permute.xlu0 %1922
      %1924 = vrot.lane.b32.xlu0 %v469, 56
      %v1925 = vpop.permute.xlu0 %1924
      %1926 = vrot.lane.b32.xlu0 %v471, 56
      %v1927 = vpop.permute.xlu0 %1926
      %1928 = vrot.lane.b32.xlu0 %v474, 56
      %v1929 = vpop.permute.xlu0 %1928
      %1930 = vrot.lane.b32.xlu0 %v476, 56
      %v1931 = vpop.permute.xlu0 %1930
      %1932 = vrot.lane.b32.xlu0 %v478, 56
      %v1933 = vpop.permute.xlu0 %1932
      %1934 = vrot.lane.b32.xlu0 %v480, 56
      %v1935 = vpop.permute.xlu0 %1934
      %1936 = vrot.lane.b32.xlu0 %v483, 56
      %v1937 = vpop.permute.xlu0 %1936
      %1938 = vrot.lane.b32.xlu0 %v485, 56
      %v1939 = vpop.permute.xlu0 %1938
      %1940 = vrot.lane.b32.xlu0 %v487, 56
      %v1941 = vpop.permute.xlu0 %1940
      %1942 = vrot.lane.b32.xlu0 %v489, 56
      %v1943 = vpop.permute.xlu0 %1942
      %1944 = vrot.lane.b32.xlu0 %v492, 56
      %v1945 = vpop.permute.xlu0 %1944
      %1946 = vrot.lane.b32.xlu0 %v494, 56
      %v1947 = vpop.permute.xlu0 %1946
      %1948 = vrot.lane.b32.xlu0 %v496, 56
      %v1949 = vpop.permute.xlu0 %1948
      %1950 = vrot.lane.b32.xlu0 %v498, 56
      %v1951 = vpop.permute.xlu0 %1950
      %1952 = vrot.lane.b32.xlu0 %v501, 56
      %v1953 = vpop.permute.xlu0 %1952
      %1954 = vrot.lane.b32.xlu0 %v503, 56
      %v1955 = vpop.permute.xlu0 %1954
      %1956 = vrot.lane.b32.xlu0 %v505, 56
      %v1957 = vpop.permute.xlu0 %1956
      %1958 = vrot.lane.b32.xlu0 %v507, 56
      %v1959 = vpop.permute.xlu0 %1958
      %1960 = vrot.lane.b32.xlu0 %v510, 56
      %v1961 = vpop.permute.xlu0 %1960
      %1962 = vrot.lane.b32.xlu0 %v512, 56
      %v1963 = vpop.permute.xlu0 %1962
      %1964 = vrot.lane.b32.xlu0 %v514, 56
      %v1965 = vpop.permute.xlu0 %1964
      %1966 = vrot.lane.b32.xlu0 %v516, 56
      %v1967 = vpop.permute.xlu0 %1966
      %1968 = vrot.lane.b32.xlu0 %v519, 56
      %v1969 = vpop.permute.xlu0 %1968
      %1970 = vrot.lane.b32.xlu0 %v521, 56
      %v1971 = vpop.permute.xlu0 %1970
      %1972 = vrot.lane.b32.xlu0 %v523, 56
      %v1973 = vpop.permute.xlu0 %1972
      %1974 = vrot.lane.b32.xlu0 %v525, 56
      %v1975 = vpop.permute.xlu0 %1974
      %1976 = vrot.lane.b32.xlu0 %v528, 56
      %v1977 = vpop.permute.xlu0 %1976
      %1978 = vrot.lane.b32.xlu0 %v530, 56
      %v1979 = vpop.permute.xlu0 %1978
      %1980 = vrot.lane.b32.xlu0 %v532, 56
      %v1981 = vpop.permute.xlu0 %1980
      %1982 = vrot.lane.b32.xlu0 %v534, 56
      %v1983 = vpop.permute.xlu0 %1982
      %1984 = vrot.lane.b32.xlu0 %v537, 56
      %v1985 = vpop.permute.xlu0 %1984
      %1986 = vrot.lane.b32.xlu0 %v539, 56
      %v1987 = vpop.permute.xlu0 %1986
      %1988 = vrot.lane.b32.xlu0 %v541, 56
      %v1989 = vpop.permute.xlu0 %1988
      %1990 = vrot.lane.b32.xlu0 %v543, 56
      %v1991 = vpop.permute.xlu0 %1990
      %1992 = vrot.lane.b32.xlu0 %v546, 56
      %v1993 = vpop.permute.xlu0 %1992
      %1994 = vrot.lane.b32.xlu0 %v548, 56
      %v1995 = vpop.permute.xlu0 %1994
      %1996 = vrot.lane.b32.xlu0 %v550, 56
      %v1997 = vpop.permute.xlu0 %1996
      %1998 = vrot.lane.b32.xlu0 %v552, 56
      %v1999 = vpop.permute.xlu0 %1998
      %2000 = vrot.lane.b32.xlu0 %v555, 56
      %v2001 = vpop.permute.xlu0 %2000
      %2002 = vrot.lane.b32.xlu0 %v557, 56
      %v2003 = vpop.permute.xlu0 %2002
      %2004 = vrot.lane.b32.xlu0 %v559, 56
      %v2005 = vpop.permute.xlu0 %2004
      %2006 = vrot.lane.b32.xlu0 %v561, 56
      %v2007 = vpop.permute.xlu0 %2006
      %2008 = vrot.lane.b32.xlu0 %v1290, 56
      %v2009 = vpop.permute.xlu0 %2008
      %2010 = vrot.lane.b32.xlu0 %v1292, 56
      %v2011 = vpop.permute.xlu0 %2010
      %2012 = vrot.lane.b32.xlu0 %v1294, 56
      %v2013 = vpop.permute.xlu0 %2012
      %2014 = vrot.lane.b32.xlu0 %v1296, 56
      %v2015 = vpop.permute.xlu0 %2014
      %2016 = vrot.lane.b32.xlu0 %v1889, 56
      %v2017 = vpop.permute.xlu0 %2016
      %2018 = vrot.lane.b32.xlu0 %v1891, 56
      %v2019 = vpop.permute.xlu0 %2018
      %2020 = vrot.lane.b32.xlu0 %v1893, 56
      %v2021 = vpop.permute.xlu0 %2020
      %2022 = vrot.lane.b32.xlu0 %v1895, 56
      %v2023 = vpop.permute.xlu0 %2022
      %v2088 = vrot.slane %v332, 2
      %v2089 = vrot.slane %v333, 2
      %v2090 = vsel %vm754, %v2088, %v2089
      %v2091 = vrot.slane %v334, 2
      %v2092 = vsel %vm754, %v2089, %v2091
      %v2093 = vrot.slane %v335, 2
      %v2094 = vsel %vm754, %v2091, %v2093
      %v2095 = vrot.slane %v336, 2
      %v2096 = vsel %vm754, %v2093, %v2095
      %2097 = vrot.lane.b32.xlu0 %v775, 64
      %v2098 = vpop.permute.xlu0 %2097
      %2099 = vrot.lane.b32.xlu0 %v777, 64
      %v2100 = vpop.permute.xlu0 %2099
      %2101 = vrot.lane.b32.xlu0 %v779, 64
      %v2102 = vpop.permute.xlu0 %2101
      %2103 = vrot.lane.b32.xlu0 %v781, 64
      %v2104 = vpop.permute.xlu0 %2103
      %2105 = vrot.lane.b32.xlu0 %v784, 64
      %v2106 = vpop.permute.xlu0 %2105
      %2107 = vrot.lane.b32.xlu0 %v786, 64
      %v2108 = vpop.permute.xlu0 %2107
      %2109 = vrot.lane.b32.xlu0 %v788, 64
      %v2110 = vpop.permute.xlu0 %2109
      %2111 = vrot.lane.b32.xlu0 %v790, 64
      %v2112 = vpop.permute.xlu0 %2111
      %2113 = vrot.lane.b32.xlu0 %v793, 64
      %v2114 = vpop.permute.xlu0 %2113
      %2115 = vrot.lane.b32.xlu0 %v795, 64
      %v2116 = vpop.permute.xlu0 %2115
      %2117 = vrot.lane.b32.xlu0 %v797, 64
      %v2118 = vpop.permute.xlu0 %2117
      %2119 = vrot.lane.b32.xlu0 %v799, 64
      %v2120 = vpop.permute.xlu0 %2119
      %2121 = vrot.lane.b32.xlu0 %v802, 64
      %v2122 = vpop.permute.xlu0 %2121
      %2123 = vrot.lane.b32.xlu0 %v804, 64
      %v2124 = vpop.permute.xlu0 %2123
      %2125 = vrot.lane.b32.xlu0 %v806, 64
      %v2126 = vpop.permute.xlu0 %2125
      %2127 = vrot.lane.b32.xlu0 %v808, 64
      %v2128 = vpop.permute.xlu0 %2127
      %2129 = vrot.lane.b32.xlu0 %v811, 64
      %v2130 = vpop.permute.xlu0 %2129
      %2131 = vrot.lane.b32.xlu0 %v813, 64
      %v2132 = vpop.permute.xlu0 %2131
      %2133 = vrot.lane.b32.xlu0 %v815, 64
      %v2134 = vpop.permute.xlu0 %2133
      %2135 = vrot.lane.b32.xlu0 %v817, 64
      %v2136 = vpop.permute.xlu0 %2135
      %2137 = vrot.lane.b32.xlu0 %v820, 64
      %v2138 = vpop.permute.xlu0 %2137
      %2139 = vrot.lane.b32.xlu0 %v822, 64
      %v2140 = vpop.permute.xlu0 %2139
      %2141 = vrot.lane.b32.xlu0 %v824, 64
      %v2142 = vpop.permute.xlu0 %2141
      %2143 = vrot.lane.b32.xlu0 %v826, 64
      %v2144 = vpop.permute.xlu0 %2143
      %2145 = vrot.lane.b32.xlu0 %v829, 64
      %v2146 = vpop.permute.xlu0 %2145
      %2147 = vrot.lane.b32.xlu0 %v831, 64
      %v2148 = vpop.permute.xlu0 %2147
      %2149 = vrot.lane.b32.xlu0 %v833, 64
      %v2150 = vpop.permute.xlu0 %2149
      %2151 = vrot.lane.b32.xlu0 %v835, 64
      %v2152 = vpop.permute.xlu0 %2151
      %2153 = vrot.lane.b32.xlu0 %v838, 64
      %v2154 = vpop.permute.xlu0 %2153
      %2155 = vrot.lane.b32.xlu0 %v840, 64
      %v2156 = vpop.permute.xlu0 %2155
      %2157 = vrot.lane.b32.xlu0 %v842, 64
      %v2158 = vpop.permute.xlu0 %2157
      %2159 = vrot.lane.b32.xlu0 %v844, 64
      %v2160 = vpop.permute.xlu0 %2159
      %2161 = vrot.lane.b32.xlu0 %v847, 64
      %v2162 = vpop.permute.xlu0 %2161
      %2163 = vrot.lane.b32.xlu0 %v849, 64
      %v2164 = vpop.permute.xlu0 %2163
      %2165 = vrot.lane.b32.xlu0 %v851, 64
      %v2166 = vpop.permute.xlu0 %2165
      %2167 = vrot.lane.b32.xlu0 %v853, 64
      %v2168 = vpop.permute.xlu0 %2167
      %2169 = vrot.lane.b32.xlu0 %v856, 64
      %v2170 = vpop.permute.xlu0 %2169
      %2171 = vrot.lane.b32.xlu0 %v858, 64
      %v2172 = vpop.permute.xlu0 %2171
      %2173 = vrot.lane.b32.xlu0 %v860, 64
      %v2174 = vpop.permute.xlu0 %2173
      %2175 = vrot.lane.b32.xlu0 %v862, 64
      %v2176 = vpop.permute.xlu0 %2175
      %2177 = vrot.lane.b32.xlu0 %v865, 64
      %v2178 = vpop.permute.xlu0 %2177
      %2179 = vrot.lane.b32.xlu0 %v867, 64
      %v2180 = vpop.permute.xlu0 %2179
      %2181 = vrot.lane.b32.xlu0 %v869, 64
      %v2182 = vpop.permute.xlu0 %2181
      %2183 = vrot.lane.b32.xlu0 %v871, 64
      %v2184 = vpop.permute.xlu0 %2183
      %2185 = vrot.lane.b32.xlu0 %v874, 64
      %v2186 = vpop.permute.xlu0 %2185
      %2187 = vrot.lane.b32.xlu0 %v876, 64
      %v2188 = vpop.permute.xlu0 %2187
      %2189 = vrot.lane.b32.xlu0 %v878, 64
      %v2190 = vpop.permute.xlu0 %2189
      %2191 = vrot.lane.b32.xlu0 %v880, 64
      %v2192 = vpop.permute.xlu0 %2191
      %2193 = vrot.lane.b32.xlu0 %v883, 64
      %v2194 = vpop.permute.xlu0 %2193
      %2195 = vrot.lane.b32.xlu0 %v885, 64
      %v2196 = vpop.permute.xlu0 %2195
      %2197 = vrot.lane.b32.xlu0 %v887, 64
      %v2198 = vpop.permute.xlu0 %2197
      %2199 = vrot.lane.b32.xlu0 %v889, 64
      %v2200 = vpop.permute.xlu0 %2199
      %2201 = vrot.lane.b32.xlu0 %v892, 64
      %v2202 = vpop.permute.xlu0 %2201
      %2203 = vrot.lane.b32.xlu0 %v894, 64
      %v2204 = vpop.permute.xlu0 %2203
      %2205 = vrot.lane.b32.xlu0 %v896, 64
      %v2206 = vpop.permute.xlu0 %2205
      %2207 = vrot.lane.b32.xlu0 %v898, 64
      %v2208 = vpop.permute.xlu0 %2207
      %2209 = vrot.lane.b32.xlu0 %v1491, 64
      %v2210 = vpop.permute.xlu0 %2209
      %2211 = vrot.lane.b32.xlu0 %v1493, 64
      %v2212 = vpop.permute.xlu0 %2211
      %2213 = vrot.lane.b32.xlu0 %v1495, 64
      %v2214 = vpop.permute.xlu0 %2213
      %2215 = vrot.lane.b32.xlu0 %v1497, 64
      %v2216 = vpop.permute.xlu0 %2215
      %2217 = vrot.lane.b32.xlu0 %v2090, 64
      %v2218 = vpop.permute.xlu0 %2217
      %2219 = vrot.lane.b32.xlu0 %v2092, 64
      %v2220 = vpop.permute.xlu0 %2219
      %2221 = vrot.lane.b32.xlu0 %v2094, 64
      %v2222 = vpop.permute.xlu0 %2221
      %2223 = vrot.lane.b32.xlu0 %v2096, 64
      %v2224 = vpop.permute.xlu0 %2223
      %vm2289 = vcmask 64512
      %v2290 = vsel %vm2289, %v247, %v563
      %v2291 = vsel %vm2289, %v248, %v565
      %v2292 = vsel %vm2289, %v249, %v567
      %v2293 = vsel %vm2289, %v250, %v569
      %v2294 = vsel %vm2289, %v252, %v571
      %v2295 = vsel %vm2289, %v253, %v573
      %v2296 = vsel %vm2289, %v254, %v575
      %v2297 = vsel %vm2289, %v255, %v577
      %v2298 = vsel %vm2289, %v257, %v579
      %v2299 = vsel %vm2289, %v258, %v581
      %v2300 = vsel %vm2289, %v259, %v583
      %v2301 = vsel %vm2289, %v260, %v585
      %v2302 = vsel %vm2289, %v262, %v587
      %v2303 = vsel %vm2289, %v263, %v589
      %v2304 = vsel %vm2289, %v264, %v591
      %v2305 = vsel %vm2289, %v265, %v593
      %v2306 = vsel %vm2289, %v267, %v595
      %v2307 = vsel %vm2289, %v268, %v597
      %v2308 = vsel %vm2289, %v269, %v599
      %v2309 = vsel %vm2289, %v270, %v601
      %v2310 = vsel %vm2289, %v272, %v603
      %v2311 = vsel %vm2289, %v273, %v605
      %v2312 = vsel %vm2289, %v274, %v607
      %v2313 = vsel %vm2289, %v275, %v609
      %v2314 = vsel %vm2289, %v277, %v611
      %v2315 = vsel %vm2289, %v278, %v613
      %v2316 = vsel %vm2289, %v279, %v615
      %v2317 = vsel %vm2289, %v280, %v617
      %v2318 = vsel %vm2289, %v282, %v619
      %v2319 = vsel %vm2289, %v283, %v621
      %v2320 = vsel %vm2289, %v284, %v623
      %v2321 = vsel %vm2289, %v285, %v625
      %v2322 = vsel %vm2289, %v287, %v627
      %v2323 = vsel %vm2289, %v288, %v629
      %v2324 = vsel %vm2289, %v289, %v631
      %v2325 = vsel %vm2289, %v290, %v633
      %v2326 = vsel %vm2289, %v292, %v635
      %v2327 = vsel %vm2289, %v293, %v637
      %v2328 = vsel %vm2289, %v294, %v639
      %v2329 = vsel %vm2289, %v295, %v641
      %v2330 = vsel %vm2289, %v297, %v643
      %v2331 = vsel %vm2289, %v298, %v645
      %v2332 = vsel %vm2289, %v299, %v647
      %v2333 = vsel %vm2289, %v300, %v649
      %v2334 = vsel %vm2289, %v302, %v651
      %v2335 = vsel %vm2289, %v303, %v653
      %v2336 = vsel %vm2289, %v304, %v655
      %v2337 = vsel %vm2289, %v305, %v657
      %v2338 = vsel %vm2289, %v307, %v659
      %v2339 = vsel %vm2289, %v308, %v661
      %v2340 = vsel %vm2289, %v309, %v663
      %v2341 = vsel %vm2289, %v310, %v665
      %v2342 = vsel %vm2289, %v312, %v667
      %v2343 = vsel %vm2289, %v313, %v669
      %v2344 = vsel %vm2289, %v314, %v671
      %v2345 = vsel %vm2289, %v315, %v673
      %v2346 = vsel %vm2289, %v317, %v675
      %v2347 = vsel %vm2289, %v318, %v677
      %v2348 = vsel %vm2289, %v319, %v679
      %v2349 = vsel %vm2289, %v320, %v681
      %v2350 = vsel %vm2289, %v322, %v683
      %v2351 = vsel %vm2289, %v323, %v685
      %v2352 = vsel %vm2289, %v324, %v687
      %v2353 = vsel %vm2289, %v325, %v689
      %vm2354 = vcmask 130048
      %v2355 = vsel %vm2354, %v2290, %v900
      %v2356 = vsel %vm2354, %v2291, %v902
      %v2357 = vsel %vm2354, %v2292, %v904
      %v2358 = vsel %vm2354, %v2293, %v906
      %v2359 = vsel %vm2354, %v2294, %v908
      %v2360 = vsel %vm2354, %v2295, %v910
      %v2361 = vsel %vm2354, %v2296, %v912
      %v2362 = vsel %vm2354, %v2297, %v914
      %v2363 = vsel %vm2354, %v2298, %v916
      %v2364 = vsel %vm2354, %v2299, %v918
      %v2365 = vsel %vm2354, %v2300, %v920
      %v2366 = vsel %vm2354, %v2301, %v922
      %v2367 = vsel %vm2354, %v2302, %v924
      %v2368 = vsel %vm2354, %v2303, %v926
      %v2369 = vsel %vm2354, %v2304, %v928
      %v2370 = vsel %vm2354, %v2305, %v930
      %v2371 = vsel %vm2354, %v2306, %v932
      %v2372 = vsel %vm2354, %v2307, %v934
      %v2373 = vsel %vm2354, %v2308, %v936
      %v2374 = vsel %vm2354, %v2309, %v938
      %v2375 = vsel %vm2354, %v2310, %v940
      %v2376 = vsel %vm2354, %v2311, %v942
      %v2377 = vsel %vm2354, %v2312, %v944
      %v2378 = vsel %vm2354, %v2313, %v946
      %v2379 = vsel %vm2354, %v2314, %v948
      %v2380 = vsel %vm2354, %v2315, %v950
      %v2381 = vsel %vm2354, %v2316, %v952
      %v2382 = vsel %vm2354, %v2317, %v954
      %v2383 = vsel %vm2354, %v2318, %v956
      %v2384 = vsel %vm2354, %v2319, %v958
      %v2385 = vsel %vm2354, %v2320, %v960
      %v2386 = vsel %vm2354, %v2321, %v962
      %v2387 = vsel %vm2354, %v2322, %v964
      %v2388 = vsel %vm2354, %v2323, %v966
      %v2389 = vsel %vm2354, %v2324, %v968
      %v2390 = vsel %vm2354, %v2325, %v970
      %v2391 = vsel %vm2354, %v2326, %v972
      %v2392 = vsel %vm2354, %v2327, %v974
      %v2393 = vsel %vm2354, %v2328, %v976
      %v2394 = vsel %vm2354, %v2329, %v978
      %v2395 = vsel %vm2354, %v2330, %v980
      %v2396 = vsel %vm2354, %v2331, %v982
      %v2397 = vsel %vm2354, %v2332, %v984
      %v2398 = vsel %vm2354, %v2333, %v986
      %v2399 = vsel %vm2354, %v2334, %v988
      %v2400 = vsel %vm2354, %v2335, %v990
      %v2401 = vsel %vm2354, %v2336, %v992
      %v2402 = vsel %vm2354, %v2337, %v994
      %v2403 = vsel %vm2354, %v2338, %v996
      %v2404 = vsel %vm2354, %v2339, %v998
      %v2405 = vsel %vm2354, %v2340, %v1000
      %v2406 = vsel %vm2354, %v2341, %v1002
      %v2407 = vsel %vm2354, %v2342, %v1004
      %v2408 = vsel %vm2354, %v2343, %v1006
      %v2409 = vsel %vm2354, %v2344, %v1008
      %v2410 = vsel %vm2354, %v2345, %v1010
      %v2411 = vsel %vm2354, %v2346, %v1012
      %v2412 = vsel %vm2354, %v2347, %v1014
      %v2413 = vsel %vm2354, %v2348, %v1016
      %v2414 = vsel %vm2354, %v2349, %v1018
      %v2415 = vsel %vm2354, %v2350, %v1020
      %v2416 = vsel %vm2354, %v2351, %v1022
      %v2417 = vsel %vm2354, %v2352, %v1024
      %v2418 = vsel %vm2354, %v2353, %v1026
      %vm2419 = vcmask 195584
      %v2420 = vsel %vm2419, %v2355, %v1096
      %v2421 = vsel %vm2419, %v2356, %v1098
      %v2422 = vsel %vm2419, %v2357, %v1100
      %v2423 = vsel %vm2419, %v2358, %v1102
      %v2424 = vsel %vm2419, %v2359, %v1104
      %v2425 = vsel %vm2419, %v2360, %v1106
      %v2426 = vsel %vm2419, %v2361, %v1108
      %v2427 = vsel %vm2419, %v2362, %v1110
      %v2428 = vsel %vm2419, %v2363, %v1112
      %v2429 = vsel %vm2419, %v2364, %v1114
      %v2430 = vsel %vm2419, %v2365, %v1116
      %v2431 = vsel %vm2419, %v2366, %v1118
      %v2432 = vsel %vm2419, %v2367, %v1120
      %v2433 = vsel %vm2419, %v2368, %v1122
      %v2434 = vsel %vm2419, %v2369, %v1124
      %v2435 = vsel %vm2419, %v2370, %v1126
      %v2436 = vsel %vm2419, %v2371, %v1128
      %v2437 = vsel %vm2419, %v2372, %v1130
      %v2438 = vsel %vm2419, %v2373, %v1132
      %v2439 = vsel %vm2419, %v2374, %v1134
      %v2440 = vsel %vm2419, %v2375, %v1136
      %v2441 = vsel %vm2419, %v2376, %v1138
      %v2442 = vsel %vm2419, %v2377, %v1140
      %v2443 = vsel %vm2419, %v2378, %v1142
      %v2444 = vsel %vm2419, %v2379, %v1144
      %v2445 = vsel %vm2419, %v2380, %v1146
      %v2446 = vsel %vm2419, %v2381, %v1148
      %v2447 = vsel %vm2419, %v2382, %v1150
      %v2448 = vsel %vm2419, %v2383, %v1152
      %v2449 = vsel %vm2419, %v2384, %v1154
      %v2450 = vsel %vm2419, %v2385, %v1156
      %v2451 = vsel %vm2419, %v2386, %v1158
      %v2452 = vsel %vm2419, %v2387, %v1160
      %v2453 = vsel %vm2419, %v2388, %v1162
      %v2454 = vsel %vm2419, %v2389, %v1164
      %v2455 = vsel %vm2419, %v2390, %v1166
      %v2456 = vsel %vm2419, %v2391, %v1168
      %v2457 = vsel %vm2419, %v2392, %v1170
      %v2458 = vsel %vm2419, %v2393, %v1172
      %v2459 = vsel %vm2419, %v2394, %v1174
      %v2460 = vsel %vm2419, %v2395, %v1176
      %v2461 = vsel %vm2419, %v2396, %v1178
      %v2462 = vsel %vm2419, %v2397, %v1180
      %v2463 = vsel %vm2419, %v2398, %v1182
      %v2464 = vsel %vm2419, %v2399, %v1184
      %v2465 = vsel %vm2419, %v2400, %v1186
      %v2466 = vsel %vm2419, %v2401, %v1188
      %v2467 = vsel %vm2419, %v2402, %v1190
      %v2468 = vsel %vm2419, %v2403, %v1192
      %v2469 = vsel %vm2419, %v2404, %v1194
      %v2470 = vsel %vm2419, %v2405, %v1196
      %v2471 = vsel %vm2419, %v2406, %v1198
      %v2472 = vsel %vm2419, %v2407, %v1200
      %v2473 = vsel %vm2419, %v2408, %v1202
      %v2474 = vsel %vm2419, %v2409, %v1204
      %v2475 = vsel %vm2419, %v2410, %v1206
      %v2476 = vsel %vm2419, %v2411, %v1208
      %v2477 = vsel %vm2419, %v2412, %v1210
      %v2478 = vsel %vm2419, %v2413, %v1212
      %v2479 = vsel %vm2419, %v2414, %v1214
      %v2480 = vsel %vm2419, %v2415, %v1216
      %v2481 = vsel %vm2419, %v2416, %v1218
      %v2482 = vsel %vm2419, %v2417, %v1220
      %v2483 = vsel %vm2419, %v2418, %v1222
      %vm2484 = vcmask 261120
      %v2485 = vsel %vm2484, %v2420, %v1298
      %v2486 = vsel %vm2484, %v2421, %v1300
      %v2487 = vsel %vm2484, %v2422, %v1302
      %v2488 = vsel %vm2484, %v2423, %v1304
      %v2489 = vsel %vm2484, %v2424, %v1306
      %v2490 = vsel %vm2484, %v2425, %v1308
      %v2491 = vsel %vm2484, %v2426, %v1310
      %v2492 = vsel %vm2484, %v2427, %v1312
      %v2493 = vsel %vm2484, %v2428, %v1314
      %v2494 = vsel %vm2484, %v2429, %v1316
      %v2495 = vsel %vm2484, %v2430, %v1318
      %v2496 = vsel %vm2484, %v2431, %v1320
      %v2497 = vsel %vm2484, %v2432, %v1322
      %v2498 = vsel %vm2484, %v2433, %v1324
      %v2499 = vsel %vm2484, %v2434, %v1326
      %v2500 = vsel %vm2484, %v2435, %v1328
      %v2501 = vsel %vm2484, %v2436, %v1330
      %v2502 = vsel %vm2484, %v2437, %v1332
      %v2503 = vsel %vm2484, %v2438, %v1334
      %v2504 = vsel %vm2484, %v2439, %v1336
      %v2505 = vsel %vm2484, %v2440, %v1338
      %v2506 = vsel %vm2484, %v2441, %v1340
      %v2507 = vsel %vm2484, %v2442, %v1342
      %v2508 = vsel %vm2484, %v2443, %v1344
      %v2509 = vsel %vm2484, %v2444, %v1346
      %v2510 = vsel %vm2484, %v2445, %v1348
      %v2511 = vsel %vm2484, %v2446, %v1350
      %v2512 = vsel %vm2484, %v2447, %v1352
      %v2513 = vsel %vm2484, %v2448, %v1354
      %v2514 = vsel %vm2484, %v2449, %v1356
      %v2515 = vsel %vm2484, %v2450, %v1358
      %v2516 = vsel %vm2484, %v2451, %v1360
      %v2517 = vsel %vm2484, %v2452, %v1362
      %v2518 = vsel %vm2484, %v2453, %v1364
      %v2519 = vsel %vm2484, %v2454, %v1366
      %v2520 = vsel %vm2484, %v2455, %v1368
      %v2521 = vsel %vm2484, %v2456, %v1370
      %v2522 = vsel %vm2484, %v2457, %v1372
      %v2523 = vsel %vm2484, %v2458, %v1374
      %v2524 = vsel %vm2484, %v2459, %v1376
      %v2525 = vsel %vm2484, %v2460, %v1378
      %v2526 = vsel %vm2484, %v2461, %v1380
      %v2527 = vsel %vm2484, %v2462, %v1382
      %v2528 = vsel %vm2484, %v2463, %v1384
      %v2529 = vsel %vm2484, %v2464, %v1386
      %v2530 = vsel %vm2484, %v2465, %v1388
      %v2531 = vsel %vm2484, %v2466, %v1390
      %v2532 = vsel %vm2484, %v2467, %v1392
      %v2533 = vsel %vm2484, %v2468, %v1394
      %v2534 = vsel %vm2484, %v2469, %v1396
      %v2535 = vsel %vm2484, %v2470, %v1398
      %v2536 = vsel %vm2484, %v2471, %v1400
      %v2537 = vsel %vm2484, %v2472, %v1402
      %v2538 = vsel %vm2484, %v2473, %v1404
      %v2539 = vsel %vm2484, %v2474, %v1406
      %v2540 = vsel %vm2484, %v2475, %v1408
      %v2541 = vsel %vm2484, %v2476, %v1410
      %v2542 = vsel %vm2484, %v2477, %v1412
      %v2543 = vsel %vm2484, %v2478, %v1414
      %v2544 = vsel %vm2484, %v2479, %v1416
      %v2545 = vsel %vm2484, %v2480, %v1418
      %v2546 = vsel %vm2484, %v2481, %v1420
      %v2547 = vsel %vm2484, %v2482, %v1422
      %v2548 = vsel %vm2484, %v2483, %v1424
      %vm2549 = vcmask 326656
      %v2550 = vsel %vm2549, %v2485, %v1499
      %v2551 = vsel %vm2549, %v2486, %v1501
      %v2552 = vsel %vm2549, %v2487, %v1503
      %v2553 = vsel %vm2549, %v2488, %v1505
      %v2554 = vsel %vm2549, %v2489, %v1507
      %v2555 = vsel %vm2549, %v2490, %v1509
      %v2556 = vsel %vm2549, %v2491, %v1511
      %v2557 = vsel %vm2549, %v2492, %v1513
      %v2558 = vsel %vm2549, %v2493, %v1515
      %v2559 = vsel %vm2549, %v2494, %v1517
      %v2560 = vsel %vm2549, %v2495, %v1519
      %v2561 = vsel %vm2549, %v2496, %v1521
      %v2562 = vsel %vm2549, %v2497, %v1523
      %v2563 = vsel %vm2549, %v2498, %v1525
      %v2564 = vsel %vm2549, %v2499, %v1527
      %v2565 = vsel %vm2549, %v2500, %v1529
      %v2566 = vsel %vm2549, %v2501, %v1531
      %v2567 = vsel %vm2549, %v2502, %v1533
      %v2568 = vsel %vm2549, %v2503, %v1535
      %v2569 = vsel %vm2549, %v2504, %v1537
      %v2570 = vsel %vm2549, %v2505, %v1539
      %v2571 = vsel %vm2549, %v2506, %v1541
      %v2572 = vsel %vm2549, %v2507, %v1543
      %v2573 = vsel %vm2549, %v2508, %v1545
      %v2574 = vsel %vm2549, %v2509, %v1547
      %v2575 = vsel %vm2549, %v2510, %v1549
      %v2576 = vsel %vm2549, %v2511, %v1551
      %v2577 = vsel %vm2549, %v2512, %v1553
      %v2578 = vsel %vm2549, %v2513, %v1555
      %v2579 = vsel %vm2549, %v2514, %v1557
      %v2580 = vsel %vm2549, %v2515, %v1559
      %v2581 = vsel %vm2549, %v2516, %v1561
      %v2582 = vsel %vm2549, %v2517, %v1563
      %v2583 = vsel %vm2549, %v2518, %v1565
      %v2584 = vsel %vm2549, %v2519, %v1567
      %v2585 = vsel %vm2549, %v2520, %v1569
      %v2586 = vsel %vm2549, %v2521, %v1571
      %v2587 = vsel %vm2549, %v2522, %v1573
      %v2588 = vsel %vm2549, %v2523, %v1575
      %v2589 = vsel %vm2549, %v2524, %v1577
      %v2590 = vsel %vm2549, %v2525, %v1579
      %v2591 = vsel %vm2549, %v2526, %v1581
      %v2592 = vsel %vm2549, %v2527, %v1583
      %v2593 = vsel %vm2549, %v2528, %v1585
      %v2594 = vsel %vm2549, %v2529, %v1587
      %v2595 = vsel %vm2549, %v2530, %v1589
      %v2596 = vsel %vm2549, %v2531, %v1591
      %v2597 = vsel %vm2549, %v2532, %v1593
      %v2598 = vsel %vm2549, %v2533, %v1595
      %v2599 = vsel %vm2549, %v2534, %v1597
      %v2600 = vsel %vm2549, %v2535, %v1599
      %v2601 = vsel %vm2549, %v2536, %v1601
      %v2602 = vsel %vm2549, %v2537, %v1603
      %v2603 = vsel %vm2549, %v2538, %v1605
      %v2604 = vsel %vm2549, %v2539, %v1607
      %v2605 = vsel %vm2549, %v2540, %v1609
      %v2606 = vsel %vm2549, %v2541, %v1611
      %v2607 = vsel %vm2549, %v2542, %v1613
      %v2608 = vsel %vm2549, %v2543, %v1615
      %v2609 = vsel %vm2549, %v2544, %v1617
      %v2610 = vsel %vm2549, %v2545, %v1619
      %v2611 = vsel %vm2549, %v2546, %v1621
      %v2612 = vsel %vm2549, %v2547, %v1623
      %v2613 = vsel %vm2549, %v2548, %v1625
      %vm2614 = vcmask 392192
      %v2615 = vsel %vm2614, %v2550, %v1695
      %v2616 = vsel %vm2614, %v2551, %v1697
      %v2617 = vsel %vm2614, %v2552, %v1699
      %v2618 = vsel %vm2614, %v2553, %v1701
      %v2619 = vsel %vm2614, %v2554, %v1703
      %v2620 = vsel %vm2614, %v2555, %v1705
      %v2621 = vsel %vm2614, %v2556, %v1707
      %v2622 = vsel %vm2614, %v2557, %v1709
      %v2623 = vsel %vm2614, %v2558, %v1711
      %v2624 = vsel %vm2614, %v2559, %v1713
      %v2625 = vsel %vm2614, %v2560, %v1715
      %v2626 = vsel %vm2614, %v2561, %v1717
      %v2627 = vsel %vm2614, %v2562, %v1719
      %v2628 = vsel %vm2614, %v2563, %v1721
      %v2629 = vsel %vm2614, %v2564, %v1723
      %v2630 = vsel %vm2614, %v2565, %v1725
      %v2631 = vsel %vm2614, %v2566, %v1727
      %v2632 = vsel %vm2614, %v2567, %v1729
      %v2633 = vsel %vm2614, %v2568, %v1731
      %v2634 = vsel %vm2614, %v2569, %v1733
      %v2635 = vsel %vm2614, %v2570, %v1735
      %v2636 = vsel %vm2614, %v2571, %v1737
      %v2637 = vsel %vm2614, %v2572, %v1739
      %v2638 = vsel %vm2614, %v2573, %v1741
      %v2639 = vsel %vm2614, %v2574, %v1743
      %v2640 = vsel %vm2614, %v2575, %v1745
      %v2641 = vsel %vm2614, %v2576, %v1747
      %v2642 = vsel %vm2614, %v2577, %v1749
      %v2643 = vsel %vm2614, %v2578, %v1751
      %v2644 = vsel %vm2614, %v2579, %v1753
      %v2645 = vsel %vm2614, %v2580, %v1755
      %v2646 = vsel %vm2614, %v2581, %v1757
      %v2647 = vsel %vm2614, %v2582, %v1759
      %v2648 = vsel %vm2614, %v2583, %v1761
      %v2649 = vsel %vm2614, %v2584, %v1763
      %v2650 = vsel %vm2614, %v2585, %v1765
      %v2651 = vsel %vm2614, %v2586, %v1767
      %v2652 = vsel %vm2614, %v2587, %v1769
      %v2653 = vsel %vm2614, %v2588, %v1771
      %v2654 = vsel %vm2614, %v2589, %v1773
      %v2655 = vsel %vm2614, %v2590, %v1775
      %v2656 = vsel %vm2614, %v2591, %v1777
      %v2657 = vsel %vm2614, %v2592, %v1779
      %v2658 = vsel %vm2614, %v2593, %v1781
      %v2659 = vsel %vm2614, %v2594, %v1783
      %v2660 = vsel %vm2614, %v2595, %v1785
      %v2661 = vsel %vm2614, %v2596, %v1787
      %v2662 = vsel %vm2614, %v2597, %v1789
      %v2663 = vsel %vm2614, %v2598, %v1791
      %v2664 = vsel %vm2614, %v2599, %v1793
      %v2665 = vsel %vm2614, %v2600, %v1795
      %v2666 = vsel %vm2614, %v2601, %v1797
      %v2667 = vsel %vm2614, %v2602, %v1799
      %v2668 = vsel %vm2614, %v2603, %v1801
      %v2669 = vsel %vm2614, %v2604, %v1803
      %v2670 = vsel %vm2614, %v2605, %v1805
      %v2671 = vsel %vm2614, %v2606, %v1807
      %v2672 = vsel %vm2614, %v2607, %v1809
      %v2673 = vsel %vm2614, %v2608, %v1811
      %v2674 = vsel %vm2614, %v2609, %v1813
      %v2675 = vsel %vm2614, %v2610, %v1815
      %v2676 = vsel %vm2614, %v2611, %v1817
      %v2677 = vsel %vm2614, %v2612, %v1819
      %v2678 = vsel %vm2614, %v2613, %v1821
      %vm2679 = vcmask 457728
      %v2680 = vsel %vm2679, %v2615, %v1897
      %v2681 = vsel %vm2679, %v2616, %v1899
      %v2682 = vsel %vm2679, %v2617, %v1901
      %v2683 = vsel %vm2679, %v2618, %v1903
      %v2684 = vsel %vm2679, %v2619, %v1905
      %v2685 = vsel %vm2679, %v2620, %v1907
      %v2686 = vsel %vm2679, %v2621, %v1909
      %v2687 = vsel %vm2679, %v2622, %v1911
      %v2688 = vsel %vm2679, %v2623, %v1913
      %v2689 = vsel %vm2679, %v2624, %v1915
      %v2690 = vsel %vm2679, %v2625, %v1917
      %v2691 = vsel %vm2679, %v2626, %v1919
      %v2692 = vsel %vm2679, %v2627, %v1921
      %v2693 = vsel %vm2679, %v2628, %v1923
      %v2694 = vsel %vm2679, %v2629, %v1925
      %v2695 = vsel %vm2679, %v2630, %v1927
      %v2696 = vsel %vm2679, %v2631, %v1929
      %v2697 = vsel %vm2679, %v2632, %v1931
      %v2698 = vsel %vm2679, %v2633, %v1933
      %v2699 = vsel %vm2679, %v2634, %v1935
      %v2700 = vsel %vm2679, %v2635, %v1937
      %v2701 = vsel %vm2679, %v2636, %v1939
      %v2702 = vsel %vm2679, %v2637, %v1941
      %v2703 = vsel %vm2679, %v2638, %v1943
      %v2704 = vsel %vm2679, %v2639, %v1945
      %v2705 = vsel %vm2679, %v2640, %v1947
      %v2706 = vsel %vm2679, %v2641, %v1949
      %v2707 = vsel %vm2679, %v2642, %v1951
      %v2708 = vsel %vm2679, %v2643, %v1953
      %v2709 = vsel %vm2679, %v2644, %v1955
      %v2710 = vsel %vm2679, %v2645, %v1957
      %v2711 = vsel %vm2679, %v2646, %v1959
      %v2712 = vsel %vm2679, %v2647, %v1961
      %v2713 = vsel %vm2679, %v2648, %v1963
      %v2714 = vsel %vm2679, %v2649, %v1965
      %v2715 = vsel %vm2679, %v2650, %v1967
      %v2716 = vsel %vm2679, %v2651, %v1969
      %v2717 = vsel %vm2679, %v2652, %v1971
      %v2718 = vsel %vm2679, %v2653, %v1973
      %v2719 = vsel %vm2679, %v2654, %v1975
      %v2720 = vsel %vm2679, %v2655, %v1977
      %v2721 = vsel %vm2679, %v2656, %v1979
      %v2722 = vsel %vm2679, %v2657, %v1981
      %v2723 = vsel %vm2679, %v2658, %v1983
      %v2724 = vsel %vm2679, %v2659, %v1985
      %v2725 = vsel %vm2679, %v2660, %v1987
      %v2726 = vsel %vm2679, %v2661, %v1989
      %v2727 = vsel %vm2679, %v2662, %v1991
      %v2728 = vsel %vm2679, %v2663, %v1993
      %v2729 = vsel %vm2679, %v2664, %v1995
      %v2730 = vsel %vm2679, %v2665, %v1997
      %v2731 = vsel %vm2679, %v2666, %v1999
      %v2732 = vsel %vm2679, %v2667, %v2001
      %v2733 = vsel %vm2679, %v2668, %v2003
      %v2734 = vsel %vm2679, %v2669, %v2005
      %v2735 = vsel %vm2679, %v2670, %v2007
      %v2736 = vsel %vm2679, %v2671, %v2009
      %v2737 = vsel %vm2679, %v2672, %v2011
      %v2738 = vsel %vm2679, %v2673, %v2013
      %v2739 = vsel %vm2679, %v2674, %v2015
      %v2740 = vsel %vm2679, %v2675, %v2017
      %v2741 = vsel %vm2679, %v2676, %v2019
      %v2742 = vsel %vm2679, %v2677, %v2021
      %v2743 = vsel %vm2679, %v2678, %v2023
      %vm2744 = vcmask 523264
      %v2745 = vsel %vm2744, %v2680, %v2098
      %v2746 = vsel %vm2744, %v2681, %v2100
      %v2747 = vsel %vm2744, %v2682, %v2102
      %v2748 = vsel %vm2744, %v2683, %v2104
      %v2749 = vsel %vm2744, %v2684, %v2106
      %v2750 = vsel %vm2744, %v2685, %v2108
      %v2751 = vsel %vm2744, %v2686, %v2110
      %v2752 = vsel %vm2744, %v2687, %v2112
      %v2753 = vsel %vm2744, %v2688, %v2114
      %v2754 = vsel %vm2744, %v2689, %v2116
      %v2755 = vsel %vm2744, %v2690, %v2118
      %v2756 = vsel %vm2744, %v2691, %v2120
      %v2757 = vsel %vm2744, %v2692, %v2122
      %v2758 = vsel %vm2744, %v2693, %v2124
      %v2759 = vsel %vm2744, %v2694, %v2126
      %v2760 = vsel %vm2744, %v2695, %v2128
      %v2761 = vsel %vm2744, %v2696, %v2130
      %v2762 = vsel %vm2744, %v2697, %v2132
      %v2763 = vsel %vm2744, %v2698, %v2134
      %v2764 = vsel %vm2744, %v2699, %v2136
      %v2765 = vsel %vm2744, %v2700, %v2138
      %v2766 = vsel %vm2744, %v2701, %v2140
      %v2767 = vsel %vm2744, %v2702, %v2142
      %v2768 = vsel %vm2744, %v2703, %v2144
      %v2769 = vsel %vm2744, %v2704, %v2146
      %v2770 = vsel %vm2744, %v2705, %v2148
      %v2771 = vsel %vm2744, %v2706, %v2150
      %v2772 = vsel %vm2744, %v2707, %v2152
      %v2773 = vsel %vm2744, %v2708, %v2154
      %v2774 = vsel %vm2744, %v2709, %v2156
      %v2775 = vsel %vm2744, %v2710, %v2158
      %v2776 = vsel %vm2744, %v2711, %v2160
      %v2777 = vsel %vm2744, %v2712, %v2162
      %v2778 = vsel %vm2744, %v2713, %v2164
      %v2779 = vsel %vm2744, %v2714, %v2166
      %v2780 = vsel %vm2744, %v2715, %v2168
      %v2781 = vsel %vm2744, %v2716, %v2170
      %v2782 = vsel %vm2744, %v2717, %v2172
      %v2783 = vsel %vm2744, %v2718, %v2174
      %v2784 = vsel %vm2744, %v2719, %v2176
      %v2785 = vsel %vm2744, %v2720, %v2178
      %v2786 = vsel %vm2744, %v2721, %v2180
      %v2787 = vsel %vm2744, %v2722, %v2182
      %v2788 = vsel %vm2744, %v2723, %v2184
      %v2789 = vsel %vm2744, %v2724, %v2186
      %v2790 = vsel %vm2744, %v2725, %v2188
      %v2791 = vsel %vm2744, %v2726, %v2190
      %v2792 = vsel %vm2744, %v2727, %v2192
      %v2793 = vsel %vm2744, %v2728, %v2194
      %v2794 = vsel %vm2744, %v2729, %v2196
      %v2795 = vsel %vm2744, %v2730, %v2198
      %v2796 = vsel %vm2744, %v2731, %v2200
      %v2797 = vsel %vm2744, %v2732, %v2202
      %v2798 = vsel %vm2744, %v2733, %v2204
      %v2799 = vsel %vm2744, %v2734, %v2206
      %v2800 = vsel %vm2744, %v2735, %v2208
      %v2801 = vsel %vm2744, %v2736, %v2210
      %v2802 = vsel %vm2744, %v2737, %v2212
      %v2803 = vsel %vm2744, %v2738, %v2214
      %v2804 = vsel %vm2744, %v2739, %v2216
      %v2805 = vsel %vm2744, %v2740, %v2218
      %v2806 = vsel %vm2744, %v2741, %v2220
      %v2807 = vsel %vm2744, %v2742, %v2222
      %v2808 = vsel %vm2744, %v2743, %v2224
      %v2809 = vld [vmem:[%s1] sm:$0xff]
      %v2810 = vld [vmem:[%s1 + $0x8] sm:$0xff]
      %v2811 = vld [vmem:[%s1 + $0x10] sm:$0xff]
      %v2812 = vld [vmem:[%s1 + $0x18] sm:$0xff]
      %v2813 = vld [vmem:[%s1 + $0x20] sm:$0xff]
      %v2814 = vld [vmem:[%s1 + $0x28] sm:$0xff]
      %v2815 = vld [vmem:[%s1 + $0x30] sm:$0xff]
      %v2816 = vld [vmem:[%s1 + $0x38] sm:$0xff]
      %v2817 = vld [vmem:[%s1 + $0x40] sm:$0xff]
      %v2818 = vld [vmem:[%s2] sm:$0x1]
      %v2820 = vperm.slane %v2818, 0
      %vm2822 = vcmask 588800
      %v2824 = vsel %vm2822, %v2745, 0
      %v2827 = vsel %vm2822, %v2746, 0
      %v2830 = vsel %vm2822, %v2747, 0
      %v2833 = vsel %vm2822, %v2748, 0
      %v2836 = vsel %vm2822, %v2749, 0
      %v2839 = vsel %vm2822, %v2750, 0
      %v2842 = vsel %vm2822, %v2751, 0
      %v2845 = vsel %vm2822, %v2752, 0
      %v2848 = vsel %vm2822, %v2753, 0
      %v2851 = vsel %vm2822, %v2754, 0
      %v2854 = vsel %vm2822, %v2755, 0
      %v2857 = vsel %vm2822, %v2756, 0
      %v2860 = vsel %vm2822, %v2757, 0
      %v2863 = vsel %vm2822, %v2758, 0
      %v2866 = vsel %vm2822, %v2759, 0
      %v2869 = vsel %vm2822, %v2760, 0
      %v2872 = vsel %vm2822, %v2761, 0
      %v2875 = vsel %vm2822, %v2762, 0
      %v2878 = vsel %vm2822, %v2763, 0
      %v2881 = vsel %vm2822, %v2764, 0
      %v2884 = vsel %vm2822, %v2765, 0
      %v2887 = vsel %vm2822, %v2766, 0
      %v2890 = vsel %vm2822, %v2767, 0
      %v2893 = vsel %vm2822, %v2768, 0
      %v2896 = vsel %vm2822, %v2769, 0
      %v2899 = vsel %vm2822, %v2770, 0
      %v2902 = vsel %vm2822, %v2771, 0
      %v2905 = vsel %vm2822, %v2772, 0
      %v2908 = vsel %vm2822, %v2773, 0
      %v2911 = vsel %vm2822, %v2774, 0
      %v2914 = vsel %vm2822, %v2775, 0
      %v2917 = vsel %vm2822, %v2776, 0
      %v2920 = vsel %vm2822, %v2777, 0
      %v2923 = vsel %vm2822, %v2778, 0
      %v2926 = vsel %vm2822, %v2779, 0
      %v2929 = vsel %vm2822, %v2780, 0
      %v2932 = vsel %vm2822, %v2781, 0
      %v2935 = vsel %vm2822, %v2782, 0
      %v2938 = vsel %vm2822, %v2783, 0
      %v2941 = vsel %vm2822, %v2784, 0
      %v2944 = vsel %vm2822, %v2785, 0
      %v2947 = vsel %vm2822, %v2786, 0
      %v2950 = vsel %vm2822, %v2787, 0
      %v2953 = vsel %vm2822, %v2788, 0
      %v2956 = vsel %vm2822, %v2789, 0
      %v2959 = vsel %vm2822, %v2790, 0
      %v2962 = vsel %vm2822, %v2791, 0
      %v2965 = vsel %vm2822, %v2792, 0
      %v2968 = vsel %vm2822, %v2793, 0
      %v2971 = vsel %vm2822, %v2794, 0
      %v2974 = vsel %vm2822, %v2795, 0
      %v2977 = vsel %vm2822, %v2796, 0
      %v2980 = vsel %vm2822, %v2797, 0
      %v2983 = vsel %vm2822, %v2798, 0
      %v2986 = vsel %vm2822, %v2799, 0
      %v2989 = vsel %vm2822, %v2800, 0
      %v2992 = vsel %vm2822, %v2801, 0
      %v2995 = vsel %vm2822, %v2802, 0
      %v2998 = vsel %vm2822, %v2803, 0
      %v3001 = vsel %vm2822, %v2804, 0
      %v3004 = vsel %vm2822, %v2805, 0
      %v3007 = vsel %vm2822, %v2806, 0
      %v3010 = vsel %vm2822, %v2807, 0
      %v3013 = vsel %vm2822, %v2808, 0
      %3015 = vmatpush.msra.mxu0 0.0
      %3016 = vmatpush.msra.mxu0 0.0
      %3017 = vmatpush.msra.mxu0 0.0
      %3018 = vmatpush.msra.mxu0 0.0
      %3019 = vmatpush.msra.mxu0 0.0
      %3020 = vmatpush.msra.mxu0 0.0
      %3021 = vmatpush.msra.mxu0 0.0
      %3022 = vmatpush.msra.mxu0 %v2817
      %3023 = vmatpush.msra.mxu0 %v2816
      %3024 = vmatpush.msra.mxu0 %v2815
      %3025 = vmatpush.msra.mxu0 %v2814
      %3026 = vmatpush.msra.mxu0 %v2813
      %3027 = vmatpush.msra.mxu0 %v2812
      %3028 = vmatpush.msra.mxu0 %v2811
      %3029 = vmatpush.msra.mxu0 %v2810
      %3030 = vmatpush.msra.mxu0 %v2809
      %3031 = vmatmul.f32.gmra.mxu0 %v2824
      %v3032 = vpop.f32.mrf.mxu0
      %v3033 = vadd.f32 %v2820, %v3032
      %3034 = vmatmul.f32.gmra.mxu0 %v2827
      %v3035 = vpop.f32.mrf.mxu0
      %v3036 = vadd.f32 %v2820, %v3035
      %3037 = vmatmul.f32.gmra.mxu0 %v2830
      %v3038 = vpop.f32.mrf.mxu0
      %v3039 = vadd.f32 %v2820, %v3038
      %3040 = vmatmul.f32.gmra.mxu0 %v2833
      %v3041 = vpop.f32.mrf.mxu0
      %v3042 = vadd.f32 %v2820, %v3041
      %3043 = vmatmul.f32.gmra.mxu0 %v2836
      %v3044 = vpop.f32.mrf.mxu0
      %v3045 = vadd.f32 %v2820, %v3044
      %3046 = vmatmul.f32.gmra.mxu0 %v2839
      %v3047 = vpop.f32.mrf.mxu0
      %v3048 = vadd.f32 %v2820, %v3047
      %3049 = vmatmul.f32.gmra.mxu0 %v2842
      %v3050 = vpop.f32.mrf.mxu0
      %v3051 = vadd.f32 %v2820, %v3050
      %3052 = vmatmul.f32.gmra.mxu0 %v2845
      %v3053 = vpop.f32.mrf.mxu0
      %v3054 = vadd.f32 %v2820, %v3053
      %3055 = vmatmul.f32.gmra.mxu0 %v2848
      %v3056 = vpop.f32.mrf.mxu0
      %v3057 = vadd.f32 %v2820, %v3056
      %3058 = vmatmul.f32.gmra.mxu0 %v2851
      %v3059 = vpop.f32.mrf.mxu0
      %v3060 = vadd.f32 %v2820, %v3059
      %3061 = vmatmul.f32.gmra.mxu0 %v2854
      %v3062 = vpop.f32.mrf.mxu0
      %v3063 = vadd.f32 %v2820, %v3062
      %3064 = vmatmul.f32.gmra.mxu0 %v2857
      %v3065 = vpop.f32.mrf.mxu0
      %v3066 = vadd.f32 %v2820, %v3065
      %3067 = vmatmul.f32.gmra.mxu0 %v2860
      %v3068 = vpop.f32.mrf.mxu0
      %v3069 = vadd.f32 %v2820, %v3068
      %3070 = vmatmul.f32.gmra.mxu0 %v2863
      %v3071 = vpop.f32.mrf.mxu0
      %v3072 = vadd.f32 %v2820, %v3071
      %3073 = vmatmul.f32.gmra.mxu0 %v2866
      %v3074 = vpop.f32.mrf.mxu0
      %v3075 = vadd.f32 %v2820, %v3074
      %3076 = vmatmul.f32.gmra.mxu0 %v2869
      %v3077 = vpop.f32.mrf.mxu0
      %v3078 = vadd.f32 %v2820, %v3077
      %3079 = vmatmul.f32.gmra.mxu0 %v2872
      %v3080 = vpop.f32.mrf.mxu0
      %v3081 = vadd.f32 %v2820, %v3080
      %3082 = vmatmul.f32.gmra.mxu0 %v2875
      %v3083 = vpop.f32.mrf.mxu0
      %v3084 = vadd.f32 %v2820, %v3083
      %3085 = vmatmul.f32.gmra.mxu0 %v2878
      %v3086 = vpop.f32.mrf.mxu0
      %v3087 = vadd.f32 %v2820, %v3086
      %3088 = vmatmul.f32.gmra.mxu0 %v2881
      %v3089 = vpop.f32.mrf.mxu0
      %v3090 = vadd.f32 %v2820, %v3089
      %3091 = vmatmul.f32.gmra.mxu0 %v2884
      %v3092 = vpop.f32.mrf.mxu0
      %v3093 = vadd.f32 %v2820, %v3092
      %3094 = vmatmul.f32.gmra.mxu0 %v2887
      %v3095 = vpop.f32.mrf.mxu0
      %v3096 = vadd.f32 %v2820, %v3095
      %3097 = vmatmul.f32.gmra.mxu0 %v2890
      %v3098 = vpop.f32.mrf.mxu0
      %v3099 = vadd.f32 %v2820, %v3098
      %3100 = vmatmul.f32.gmra.mxu0 %v2893
      %v3101 = vpop.f32.mrf.mxu0
      %v3102 = vadd.f32 %v2820, %v3101
      %3103 = vmatmul.f32.gmra.mxu0 %v2896
      %v3104 = vpop.f32.mrf.mxu0
      %v3105 = vadd.f32 %v2820, %v3104
      %3106 = vmatmul.f32.gmra.mxu0 %v2899
      %v3107 = vpop.f32.mrf.mxu0
      %v3108 = vadd.f32 %v2820, %v3107
      %3109 = vmatmul.f32.gmra.mxu0 %v2902
      %v3110 = vpop.f32.mrf.mxu0
      %v3111 = vadd.f32 %v2820, %v3110
      %3112 = vmatmul.f32.gmra.mxu0 %v2905
      %v3113 = vpop.f32.mrf.mxu0
      %v3114 = vadd.f32 %v2820, %v3113
      %3115 = vmatmul.f32.gmra.mxu0 %v2908
      %v3116 = vpop.f32.mrf.mxu0
      %v3117 = vadd.f32 %v2820, %v3116
      %3118 = vmatmul.f32.gmra.mxu0 %v2911
      %v3119 = vpop.f32.mrf.mxu0
      %v3120 = vadd.f32 %v2820, %v3119
      %3121 = vmatmul.f32.gmra.mxu0 %v2914
      %v3122 = vpop.f32.mrf.mxu0
      %v3123 = vadd.f32 %v2820, %v3122
      %3124 = vmatmul.f32.gmra.mxu0 %v2917
      %v3125 = vpop.f32.mrf.mxu0
      %v3126 = vadd.f32 %v2820, %v3125
      %3127 = vmatmul.f32.gmra.mxu0 %v2920
      %v3128 = vpop.f32.mrf.mxu0
      %v3129 = vadd.f32 %v2820, %v3128
      %3130 = vmatmul.f32.gmra.mxu0 %v2923
      %v3131 = vpop.f32.mrf.mxu0
      %v3132 = vadd.f32 %v2820, %v3131
      %3133 = vmatmul.f32.gmra.mxu0 %v2926
      %v3134 = vpop.f32.mrf.mxu0
      %v3135 = vadd.f32 %v2820, %v3134
      %3136 = vmatmul.f32.gmra.mxu0 %v2929
      %v3137 = vpop.f32.mrf.mxu0
      %v3138 = vadd.f32 %v2820, %v3137
      %3139 = vmatmul.f32.gmra.mxu0 %v2932
      %v3140 = vpop.f32.mrf.mxu0
      %v3141 = vadd.f32 %v2820, %v3140
      %3142 = vmatmul.f32.gmra.mxu0 %v2935
      %v3143 = vpop.f32.mrf.mxu0
      %v3144 = vadd.f32 %v2820, %v3143
      %3145 = vmatmul.f32.gmra.mxu0 %v2938
      %v3146 = vpop.f32.mrf.mxu0
      %v3147 = vadd.f32 %v2820, %v3146
      %3148 = vmatmul.f32.gmra.mxu0 %v2941
      %v3149 = vpop.f32.mrf.mxu0
      %v3150 = vadd.f32 %v2820, %v3149
      %3151 = vmatmul.f32.gmra.mxu0 %v2944
      %v3152 = vpop.f32.mrf.mxu0
      %v3153 = vadd.f32 %v2820, %v3152
      %3154 = vmatmul.f32.gmra.mxu0 %v2947
      %v3155 = vpop.f32.mrf.mxu0
      %v3156 = vadd.f32 %v2820, %v3155
      %3157 = vmatmul.f32.gmra.mxu0 %v2950
      %v3158 = vpop.f32.mrf.mxu0
      %v3159 = vadd.f32 %v2820, %v3158
      %3160 = vmatmul.f32.gmra.mxu0 %v2953
      %v3161 = vpop.f32.mrf.mxu0
      %v3162 = vadd.f32 %v2820, %v3161
      %3163 = vmatmul.f32.gmra.mxu0 %v2956
      %v3164 = vpop.f32.mrf.mxu0
      %v3165 = vadd.f32 %v2820, %v3164
      %3166 = vmatmul.f32.gmra.mxu0 %v2959
      %v3167 = vpop.f32.mrf.mxu0
      %v3168 = vadd.f32 %v2820, %v3167
      %3169 = vmatmul.f32.gmra.mxu0 %v2962
      %v3170 = vpop.f32.mrf.mxu0
      %v3171 = vadd.f32 %v2820, %v3170
      %3172 = vmatmul.f32.gmra.mxu0 %v2965
      %v3173 = vpop.f32.mrf.mxu0
      %v3174 = vadd.f32 %v2820, %v3173
      %3175 = vmatmul.f32.gmra.mxu0 %v2968
      %v3176 = vpop.f32.mrf.mxu0
      %v3177 = vadd.f32 %v2820, %v3176
      %3178 = vmatmul.f32.gmra.mxu0 %v2971
      %v3179 = vpop.f32.mrf.mxu0
      %v3180 = vadd.f32 %v2820, %v3179
      %3181 = vmatmul.f32.gmra.mxu0 %v2974
      %v3182 = vpop.f32.mrf.mxu0
      %v3183 = vadd.f32 %v2820, %v3182
      %3184 = vmatmul.f32.gmra.mxu0 %v2977
      %v3185 = vpop.f32.mrf.mxu0
      %v3186 = vadd.f32 %v2820, %v3185
      %3187 = vmatmul.f32.gmra.mxu0 %v2980
      %v3188 = vpop.f32.mrf.mxu0
      %v3189 = vadd.f32 %v2820, %v3188
      %3190 = vmatmul.f32.gmra.mxu0 %v2983
      %v3191 = vpop.f32.mrf.mxu0
      %v3192 = vadd.f32 %v2820, %v3191
      %3193 = vmatmul.f32.gmra.mxu0 %v2986
      %v3194 = vpop.f32.mrf.mxu0
      %v3195 = vadd.f32 %v2820, %v3194
      %3196 = vmatmul.f32.gmra.mxu0 %v2989
      %v3197 = vpop.f32.mrf.mxu0
      %v3198 = vadd.f32 %v2820, %v3197
      %3199 = vmatmul.f32.gmra.mxu0 %v2992
      %v3200 = vpop.f32.mrf.mxu0
      %v3201 = vadd.f32 %v2820, %v3200
      %3202 = vmatmul.f32.gmra.mxu0 %v2995
      %v3203 = vpop.f32.mrf.mxu0
      %v3204 = vadd.f32 %v2820, %v3203
      %3205 = vmatmul.f32.gmra.mxu0 %v2998
      %v3206 = vpop.f32.mrf.mxu0
      %v3207 = vadd.f32 %v2820, %v3206
      %3208 = vmatmul.f32.gmra.mxu0 %v3001
      %v3209 = vpop.f32.mrf.mxu0
      %v3210 = vadd.f32 %v2820, %v3209
      %3211 = vmatmul.f32.gmra.mxu0 %v3004
      %v3212 = vpop.f32.mrf.mxu0
      %v3213 = vadd.f32 %v2820, %v3212
      %3214 = vmatmul.f32.gmra.mxu0 %v3007
      %v3215 = vpop.f32.mrf.mxu0
      %v3216 = vadd.f32 %v2820, %v3215
      %3217 = vmatmul.f32.gmra.mxu0 %v3010
      %v3218 = vpop.f32.mrf.mxu0
      %v3219 = vadd.f32 %v2820, %v3218
      %3220 = vmatmul.f32.gmra.mxu0 %v3013
      %v3221 = vpop.f32.mrf.mxu0
      %v3222 = vadd.f32 %v2820, %v3221
      %3223 = vdwg.mxu0
      %vm3224 = vcmask 31744
      %3225 = vst.msk [vmem:[%s234] sm:$0xff] %vm3224, %v3033
      %3226 = vst.msk [vmem:[%s234 + $0x8] sm:$0xff] %vm3224, %v3036
      %3227 = vst.msk [vmem:[%s234 + $0x10] sm:$0xff] %vm3224, %v3039
      %3228 = vst.msk [vmem:[%s234 + $0x18] sm:$0xff] %vm3224, %v3042
      %3229 = vst.msk [vmem:[%s234 + $0x20] sm:$0xff] %vm3224, %v3045
      %3230 = vst.msk [vmem:[%s234 + $0x28] sm:$0xff] %vm3224, %v3048
      %3231 = vst.msk [vmem:[%s234 + $0x30] sm:$0xff] %vm3224, %v3051
      %3232 = vst.msk [vmem:[%s234 + $0x38] sm:$0xff] %vm3224, %v3054
      %3233 = vst.msk [vmem:[%s234 + $0x40] sm:$0xff] %vm3224, %v3057
      %3234 = vst.msk [vmem:[%s234 + $0x48] sm:$0xff] %vm3224, %v3060
      %3235 = vst.msk [vmem:[%s234 + $0x50] sm:$0xff] %vm3224, %v3063
      %3236 = vst.msk [vmem:[%s234 + $0x58] sm:$0xff] %vm3224, %v3066
      %3237 = vst.msk [vmem:[%s234 + $0x60] sm:$0xff] %vm3224, %v3069
      %3238 = vst.msk [vmem:[%s234 + $0x68] sm:$0xff] %vm3224, %v3072
      %3239 = vst.msk [vmem:[%s234 + $0x70] sm:$0xff] %vm3224, %v3075
      %3240 = vst.msk [vmem:[%s234 + $0x78] sm:$0xff] %vm3224, %v3078
      %3241 = vst.msk [vmem:[%s234 + $0x80] sm:$0xff] %vm3224, %v3081
      %3242 = vst.msk [vmem:[%s234 + $0x88] sm:$0xff] %vm3224, %v3084
      %3243 = vst.msk [vmem:[%s234 + $0x90] sm:$0xff] %vm3224, %v3087
      %3244 = vst.msk [vmem:[%s234 + $0x98] sm:$0xff] %vm3224, %v3090
      %3245 = vst.msk [vmem:[%s234 + $0xa0] sm:$0xff] %vm3224, %v3093
      %3246 = vst.msk [vmem:[%s234 + $0xa8] sm:$0xff] %vm3224, %v3096
      %3247 = vst.msk [vmem:[%s234 + $0xb0] sm:$0xff] %vm3224, %v3099
      %3248 = vst.msk [vmem:[%s234 + $0xb8] sm:$0xff] %vm3224, %v3102
      %3249 = vst.msk [vmem:[%s234 + $0xc0] sm:$0xff] %vm3224, %v3105
      %3250 = vst.msk [vmem:[%s234 + $0xc8] sm:$0xff] %vm3224, %v3108
      %3251 = vst.msk [vmem:[%s234 + $0xd0] sm:$0xff] %vm3224, %v3111
      %3252 = vst.msk [vmem:[%s234 + $0xd8] sm:$0xff] %vm3224, %v3114
      %3253 = vst.msk [vmem:[%s234 + $0xe0] sm:$0xff] %vm3224, %v3117
      %3254 = vst.msk [vmem:[%s234 + $0xe8] sm:$0xff] %vm3224, %v3120
      %3255 = vst.msk [vmem:[%s234 + $0xf0] sm:$0xff] %vm3224, %v3123
      %3256 = vst.msk [vmem:[%s234 + $0xf8] sm:$0xff] %vm3224, %v3126
      %3257 = vst.msk [vmem:[%s234 + $0x100] sm:$0xff] %vm3224, %v3129
      %3258 = vst.msk [vmem:[%s234 + $0x108] sm:$0xff] %vm3224, %v3132
      %3259 = vst.msk [vmem:[%s234 + $0x110] sm:$0xff] %vm3224, %v3135
      %3260 = vst.msk [vmem:[%s234 + $0x118] sm:$0xff] %vm3224, %v3138
      %3261 = vst.msk [vmem:[%s234 + $0x120] sm:$0xff] %vm3224, %v3141
      %3262 = vst.msk [vmem:[%s234 + $0x128] sm:$0xff] %vm3224, %v3144
      %3263 = vst.msk [vmem:[%s234 + $0x130] sm:$0xff] %vm3224, %v3147
      %3264 = vst.msk [vmem:[%s234 + $0x138] sm:$0xff] %vm3224, %v3150
      %3265 = vst.msk [vmem:[%s234 + $0x140] sm:$0xff] %vm3224, %v3153
      %3266 = vst.msk [vmem:[%s234 + $0x148] sm:$0xff] %vm3224, %v3156
      %3267 = vst.msk [vmem:[%s234 + $0x150] sm:$0xff] %vm3224, %v3159
      %3268 = vst.msk [vmem:[%s234 + $0x158] sm:$0xff] %vm3224, %v3162
      %3269 = vst.msk [vmem:[%s234 + $0x160] sm:$0xff] %vm3224, %v3165
      %3270 = vst.msk [vmem:[%s234 + $0x168] sm:$0xff] %vm3224, %v3168
      %3271 = vst.msk [vmem:[%s234 + $0x170] sm:$0xff] %vm3224, %v3171
      %3272 = vst.msk [vmem:[%s234 + $0x178] sm:$0xff] %vm3224, %v3174
      %3273 = vst.msk [vmem:[%s234 + $0x180] sm:$0xff] %vm3224, %v3177
      %3274 = vst.msk [vmem:[%s234 + $0x188] sm:$0xff] %vm3224, %v3180
      %3275 = vst.msk [vmem:[%s234 + $0x190] sm:$0xff] %vm3224, %v3183
      %3276 = vst.msk [vmem:[%s234 + $0x198] sm:$0xff] %vm3224, %v3186
      %3277 = vst.msk [vmem:[%s234 + $0x1a0] sm:$0xff] %vm3224, %v3189
      %3278 = vst.msk [vmem:[%s234 + $0x1a8] sm:$0xff] %vm3224, %v3192
      %3279 = vst.msk [vmem:[%s234 + $0x1b0] sm:$0xff] %vm3224, %v3195
      %3280 = vst.msk [vmem:[%s234 + $0x1b8] sm:$0xff] %vm3224, %v3198
      %3281 = vst.msk [vmem:[%s234 + $0x1c0] sm:$0xff] %vm3224, %v3201
      %3282 = vst.msk [vmem:[%s234 + $0x1c8] sm:$0xff] %vm3224, %v3204
      %3283 = vst.msk [vmem:[%s234 + $0x1d0] sm:$0xff] %vm3224, %v3207
      %3284 = vst.msk [vmem:[%s234 + $0x1d8] sm:$0xff] %vm3224, %v3210
      %3285 = vst.msk [vmem:[%s234 + $0x1e0] sm:$0xff] %vm3224, %v3213
      %3286 = vst.msk [vmem:[%s234 + $0x1e8] sm:$0xff] %vm3224, %v3216
      %3287 = vst.msk [vmem:[%s234 + $0x1f0] sm:$0xff] %vm3224, %v3219
      %3288 = vst.msk [vmem:[%s234 + $0x1f8] sm:$0xff] %vm3224, %v3222
      %v3289 = vsel %vm3224, %v3033, 0.0
      %v3290 = vsel %vm3224, %v3036, 0.0
      %v3291 = vadd.f32 %v3289, %v3290
      %v3292 = vsel %vm3224, %v3039, 0.0
      %v3293 = vadd.f32 %v3291, %v3292
      %v3294 = vsel %vm3224, %v3042, 0.0
      %v3295 = vadd.f32 %v3293, %v3294
      %v3296 = vsel %vm3224, %v3045, 0.0
      %v3297 = vadd.f32 %v3295, %v3296
      %v3298 = vsel %vm3224, %v3048, 0.0
      %v3299 = vadd.f32 %v3297, %v3298
      %v3300 = vsel %vm3224, %v3051, 0.0
      %v3301 = vadd.f32 %v3299, %v3300
      %v3302 = vsel %vm3224, %v3054, 0.0
      %v3303 = vadd.f32 %v3301, %v3302
      %v3304 = vsel %vm3224, %v3057, 0.0
      %v3305 = vadd.f32 %v3303, %v3304
      %v3306 = vsel %vm3224, %v3060, 0.0
      %v3307 = vadd.f32 %v3305, %v3306
      %v3308 = vsel %vm3224, %v3063, 0.0
      %v3309 = vadd.f32 %v3307, %v3308
      %v3310 = vsel %vm3224, %v3066, 0.0
      %v3311 = vadd.f32 %v3309, %v3310
      %v3312 = vsel %vm3224, %v3069, 0.0
      %v3313 = vadd.f32 %v3311, %v3312
      %v3314 = vsel %vm3224, %v3072, 0.0
      %v3315 = vadd.f32 %v3313, %v3314
      %v3316 = vsel %vm3224, %v3075, 0.0
      %v3317 = vadd.f32 %v3315, %v3316
      %v3318 = vsel %vm3224, %v3078, 0.0
      %v3319 = vadd.f32 %v3317, %v3318
      %v3320 = vsel %vm3224, %v3081, 0.0
      %v3321 = vadd.f32 %v3319, %v3320
      %v3322 = vsel %vm3224, %v3084, 0.0
      %v3323 = vadd.f32 %v3321, %v3322
      %v3324 = vsel %vm3224, %v3087, 0.0
      %v3325 = vadd.f32 %v3323, %v3324
      %v3326 = vsel %vm3224, %v3090, 0.0
      %v3327 = vadd.f32 %v3325, %v3326
      %v3328 = vsel %vm3224, %v3093, 0.0
      %v3329 = vadd.f32 %v3327, %v3328
      %v3330 = vsel %vm3224, %v3096, 0.0
      %v3331 = vadd.f32 %v3329, %v3330
      %v3332 = vsel %vm3224, %v3099, 0.0
      %v3333 = vadd.f32 %v3331, %v3332
      %v3334 = vsel %vm3224, %v3102, 0.0
      %v3335 = vadd.f32 %v3333, %v3334
      %v3336 = vsel %vm3224, %v3105, 0.0
      %v3337 = vadd.f32 %v3335, %v3336
      %v3338 = vsel %vm3224, %v3108, 0.0
      %v3339 = vadd.f32 %v3337, %v3338
      %v3340 = vsel %vm3224, %v3111, 0.0
      %v3341 = vadd.f32 %v3339, %v3340
      %v3342 = vsel %vm3224, %v3114, 0.0
      %v3343 = vadd.f32 %v3341, %v3342
      %v3344 = vsel %vm3224, %v3117, 0.0
      %v3345 = vadd.f32 %v3343, %v3344
      %v3346 = vsel %vm3224, %v3120, 0.0
      %v3347 = vadd.f32 %v3345, %v3346
      %v3348 = vsel %vm3224, %v3123, 0.0
      %v3349 = vadd.f32 %v3347, %v3348
      %v3350 = vsel %vm3224, %v3126, 0.0
      %v3351 = vadd.f32 %v3349, %v3350
      %v3352 = vsel %vm3224, %v3129, 0.0
      %v3353 = vadd.f32 %v3351, %v3352
      %v3354 = vsel %vm3224, %v3132, 0.0
      %v3355 = vadd.f32 %v3353, %v3354
      %v3356 = vsel %vm3224, %v3135, 0.0
      %v3357 = vadd.f32 %v3355, %v3356
      %v3358 = vsel %vm3224, %v3138, 0.0
      %v3359 = vadd.f32 %v3357, %v3358
      %v3360 = vsel %vm3224, %v3141, 0.0
      %v3361 = vadd.f32 %v3359, %v3360
      %v3362 = vsel %vm3224, %v3144, 0.0
      %v3363 = vadd.f32 %v3361, %v3362
      %v3364 = vsel %vm3224, %v3147, 0.0
      %v3365 = vadd.f32 %v3363, %v3364
      %v3366 = vsel %vm3224, %v3150, 0.0
      %v3367 = vadd.f32 %v3365, %v3366
      %v3368 = vsel %vm3224, %v3153, 0.0
      %v3369 = vadd.f32 %v3367, %v3368
      %v3370 = vsel %vm3224, %v3156, 0.0
      %v3371 = vadd.f32 %v3369, %v3370
      %v3372 = vsel %vm3224, %v3159, 0.0
      %v3373 = vadd.f32 %v3371, %v3372
      %v3374 = vsel %vm3224, %v3162, 0.0
      %v3375 = vadd.f32 %v3373, %v3374
      %v3376 = vsel %vm3224, %v3165, 0.0
      %v3377 = vadd.f32 %v3375, %v3376
      %v3378 = vsel %vm3224, %v3168, 0.0
      %v3379 = vadd.f32 %v3377, %v3378
      %v3380 = vsel %vm3224, %v3171, 0.0
      %v3381 = vadd.f32 %v3379, %v3380
      %v3382 = vsel %vm3224, %v3174, 0.0
      %v3383 = vadd.f32 %v3381, %v3382
      %v3384 = vsel %vm3224, %v3177, 0.0
      %v3385 = vadd.f32 %v3383, %v3384
      %v3386 = vsel %vm3224, %v3180, 0.0
      %v3387 = vadd.f32 %v3385, %v3386
      %v3388 = vsel %vm3224, %v3183, 0.0
      %v3389 = vadd.f32 %v3387, %v3388
      %v3390 = vsel %vm3224, %v3186, 0.0
      %v3391 = vadd.f32 %v3389, %v3390
      %v3392 = vsel %vm3224, %v3189, 0.0
      %v3393 = vadd.f32 %v3391, %v3392
      %v3394 = vsel %vm3224, %v3192, 0.0
      %v3395 = vadd.f32 %v3393, %v3394
      %v3396 = vsel %vm3224, %v3195, 0.0
      %v3397 = vadd.f32 %v3395, %v3396
      %v3398 = vsel %vm3224, %v3198, 0.0
      %v3399 = vadd.f32 %v3397, %v3398
      %v3400 = vsel %vm3224, %v3201, 0.0
      %v3401 = vadd.f32 %v3399, %v3400
      %v3402 = vsel %vm3224, %v3204, 0.0
      %v3403 = vadd.f32 %v3401, %v3402
      %v3404 = vsel %vm3224, %v3207, 0.0
      %v3405 = vadd.f32 %v3403, %v3404
      %v3406 = vsel %vm3224, %v3210, 0.0
      %v3407 = vadd.f32 %v3405, %v3406
      %v3408 = vsel %vm3224, %v3213, 0.0
      %v3409 = vadd.f32 %v3407, %v3408
      %v3410 = vsel %vm3224, %v3216, 0.0
      %v3411 = vadd.f32 %v3409, %v3410
      %v3412 = vsel %vm3224, %v3219, 0.0
      %v3413 = vadd.f32 %v3411, %v3412
      %v3414 = vsel %vm3224, %v3222, 0.0
      %v3415 = vadd.f32 %v3413, %v3414
      %v3416 = vrot.slane %v3415, 4
      %v3417 = vadd.f32 %v3415, %v3416
      %v3418 = vrot.slane %v3417, 2
      %v3419 = vadd.f32 %v3417, %v3418
      %v3420 = vrot.slane %v3419, 1
      %v3421 = vadd.f32 %v3419, %v3420
      %v3422 = vmul.f32 %v3033, %v3033
      %v3423 = vmul.f32 %v3036, %v3036
      %v3424 = vmul.f32 %v3039, %v3039
      %v3425 = vmul.f32 %v3042, %v3042
      %v3426 = vmul.f32 %v3045, %v3045
      %v3427 = vmul.f32 %v3048, %v3048
      %v3428 = vmul.f32 %v3051, %v3051
      %v3429 = vmul.f32 %v3054, %v3054
      %v3430 = vmul.f32 %v3057, %v3057
      %v3431 = vmul.f32 %v3060, %v3060
      %v3432 = vmul.f32 %v3063, %v3063
      %v3433 = vmul.f32 %v3066, %v3066
      %v3434 = vmul.f32 %v3069, %v3069
      %v3435 = vmul.f32 %v3072, %v3072
      %v3436 = vmul.f32 %v3075, %v3075
      %v3437 = vmul.f32 %v3078, %v3078
      %v3438 = vmul.f32 %v3081, %v3081
      %v3439 = vmul.f32 %v3084, %v3084
      %v3440 = vmul.f32 %v3087, %v3087
      %v3441 = vmul.f32 %v3090, %v3090
      %v3442 = vmul.f32 %v3093, %v3093
      %v3443 = vmul.f32 %v3096, %v3096
      %v3444 = vmul.f32 %v3099, %v3099
      %v3445 = vmul.f32 %v3102, %v3102
      %v3446 = vmul.f32 %v3105, %v3105
      %v3447 = vmul.f32 %v3108, %v3108
      %v3448 = vmul.f32 %v3111, %v3111
      %v3449 = vmul.f32 %v3114, %v3114
      %v3450 = vmul.f32 %v3117, %v3117
      %v3451 = vmul.f32 %v3120, %v3120
      %v3452 = vmul.f32 %v3123, %v3123
      %v3453 = vmul.f32 %v3126, %v3126
      %v3454 = vmul.f32 %v3129, %v3129
      %v3455 = vmul.f32 %v3132, %v3132
      %v3456 = vmul.f32 %v3135, %v3135
      %v3457 = vmul.f32 %v3138, %v3138
      %v3458 = vmul.f32 %v3141, %v3141
      %v3459 = vmul.f32 %v3144, %v3144
      %v3460 = vmul.f32 %v3147, %v3147
      %v3461 = vmul.f32 %v3150, %v3150
      %v3462 = vmul.f32 %v3153, %v3153
      %v3463 = vmul.f32 %v3156, %v3156
      %v3464 = vmul.f32 %v3159, %v3159
      %v3465 = vmul.f32 %v3162, %v3162
      %v3466 = vmul.f32 %v3165, %v3165
      %v3467 = vmul.f32 %v3168, %v3168
      %v3468 = vmul.f32 %v3171, %v3171
      %v3469 = vmul.f32 %v3174, %v3174
      %v3470 = vmul.f32 %v3177, %v3177
      %v3471 = vmul.f32 %v3180, %v3180
      %v3472 = vmul.f32 %v3183, %v3183
      %v3473 = vmul.f32 %v3186, %v3186
      %v3474 = vmul.f32 %v3189, %v3189
      %v3475 = vmul.f32 %v3192, %v3192
      %v3476 = vmul.f32 %v3195, %v3195
      %v3477 = vmul.f32 %v3198, %v3198
      %v3478 = vmul.f32 %v3201, %v3201
      %v3479 = vmul.f32 %v3204, %v3204
      %v3480 = vmul.f32 %v3207, %v3207
      %v3481 = vmul.f32 %v3210, %v3210
      %v3482 = vmul.f32 %v3213, %v3213
      %v3483 = vmul.f32 %v3216, %v3216
      %v3484 = vmul.f32 %v3219, %v3219
      %v3485 = vmul.f32 %v3222, %v3222
      %v3486 = vsel %vm3224, %v3422, 0.0
      %v3487 = vsel %vm3224, %v3423, 0.0
      %v3488 = vadd.f32 %v3486, %v3487
      %v3489 = vsel %vm3224, %v3424, 0.0
      %v3490 = vadd.f32 %v3488, %v3489
      %v3491 = vsel %vm3224, %v3425, 0.0
      %v3492 = vadd.f32 %v3490, %v3491
      %v3493 = vsel %vm3224, %v3426, 0.0
      %v3494 = vadd.f32 %v3492, %v3493
      %v3495 = vsel %vm3224, %v3427, 0.0
      %v3496 = vadd.f32 %v3494, %v3495
      %v3497 = vsel %vm3224, %v3428, 0.0
      %v3498 = vadd.f32 %v3496, %v3497
      %v3499 = vsel %vm3224, %v3429, 0.0
      %v3500 = vadd.f32 %v3498, %v3499
      %v3501 = vsel %vm3224, %v3430, 0.0
      %v3502 = vadd.f32 %v3500, %v3501
      %v3503 = vsel %vm3224, %v3431, 0.0
      %v3504 = vadd.f32 %v3502, %v3503
      %v3505 = vsel %vm3224, %v3432, 0.0
      %v3506 = vadd.f32 %v3504, %v3505
      %v3507 = vsel %vm3224, %v3433, 0.0
      %v3508 = vadd.f32 %v3506, %v3507
      %v3509 = vsel %vm3224, %v3434, 0.0
      %v3510 = vadd.f32 %v3508, %v3509
      %v3511 = vsel %vm3224, %v3435, 0.0
      %v3512 = vadd.f32 %v3510, %v3511
      %v3513 = vsel %vm3224, %v3436, 0.0
      %v3514 = vadd.f32 %v3512, %v3513
      %v3515 = vsel %vm3224, %v3437, 0.0
      %v3516 = vadd.f32 %v3514, %v3515
      %v3517 = vsel %vm3224, %v3438, 0.0
      %v3518 = vadd.f32 %v3516, %v3517
      %v3519 = vsel %vm3224, %v3439, 0.0
      %v3520 = vadd.f32 %v3518, %v3519
      %v3521 = vsel %vm3224, %v3440, 0.0
      %v3522 = vadd.f32 %v3520, %v3521
      %v3523 = vsel %vm3224, %v3441, 0.0
      %v3524 = vadd.f32 %v3522, %v3523
      %v3525 = vsel %vm3224, %v3442, 0.0
      %v3526 = vadd.f32 %v3524, %v3525
      %v3527 = vsel %vm3224, %v3443, 0.0
      %v3528 = vadd.f32 %v3526, %v3527
      %v3529 = vsel %vm3224, %v3444, 0.0
      %v3530 = vadd.f32 %v3528, %v3529
      %v3531 = vsel %vm3224, %v3445, 0.0
      %v3532 = vadd.f32 %v3530, %v3531
      %v3533 = vsel %vm3224, %v3446, 0.0
      %v3534 = vadd.f32 %v3532, %v3533
      %v3535 = vsel %vm3224, %v3447, 0.0
      %v3536 = vadd.f32 %v3534, %v3535
      %v3537 = vsel %vm3224, %v3448, 0.0
      %v3538 = vadd.f32 %v3536, %v3537
      %v3539 = vsel %vm3224, %v3449, 0.0
      %v3540 = vadd.f32 %v3538, %v3539
      %v3541 = vsel %vm3224, %v3450, 0.0
      %v3542 = vadd.f32 %v3540, %v3541
      %v3543 = vsel %vm3224, %v3451, 0.0
      %v3544 = vadd.f32 %v3542, %v3543
      %v3545 = vsel %vm3224, %v3452, 0.0
      %v3546 = vadd.f32 %v3544, %v3545
      %v3547 = vsel %vm3224, %v3453, 0.0
      %v3548 = vadd.f32 %v3546, %v3547
      %v3549 = vsel %vm3224, %v3454, 0.0
      %v3550 = vadd.f32 %v3548, %v3549
      %v3551 = vsel %vm3224, %v3455, 0.0
      %v3552 = vadd.f32 %v3550, %v3551
      %v3553 = vsel %vm3224, %v3456, 0.0
      %v3554 = vadd.f32 %v3552, %v3553
      %v3555 = vsel %vm3224, %v3457, 0.0
      %v3556 = vadd.f32 %v3554, %v3555
      %v3557 = vsel %vm3224, %v3458, 0.0
      %v3558 = vadd.f32 %v3556, %v3557
      %v3559 = vsel %vm3224, %v3459, 0.0
      %v3560 = vadd.f32 %v3558, %v3559
      %v3561 = vsel %vm3224, %v3460, 0.0
      %v3562 = vadd.f32 %v3560, %v3561
      %v3563 = vsel %vm3224, %v3461, 0.0
      %v3564 = vadd.f32 %v3562, %v3563
      %v3565 = vsel %vm3224, %v3462, 0.0
      %v3566 = vadd.f32 %v3564, %v3565
      %v3567 = vsel %vm3224, %v3463, 0.0
      %v3568 = vadd.f32 %v3566, %v3567
      %v3569 = vsel %vm3224, %v3464, 0.0
      %v3570 = vadd.f32 %v3568, %v3569
      %v3571 = vsel %vm3224, %v3465, 0.0
      %v3572 = vadd.f32 %v3570, %v3571
      %v3573 = vsel %vm3224, %v3466, 0.0
      %v3574 = vadd.f32 %v3572, %v3573
      %v3575 = vsel %vm3224, %v3467, 0.0
      %v3576 = vadd.f32 %v3574, %v3575
      %v3577 = vsel %vm3224, %v3468, 0.0
      %v3578 = vadd.f32 %v3576, %v3577
      %v3579 = vsel %vm3224, %v3469, 0.0
      %v3580 = vadd.f32 %v3578, %v3579
      %v3581 = vsel %vm3224, %v3470, 0.0
      %v3582 = vadd.f32 %v3580, %v3581
      %v3583 = vsel %vm3224, %v3471, 0.0
      %v3584 = vadd.f32 %v3582, %v3583
      %v3585 = vsel %vm3224, %v3472, 0.0
      %v3586 = vadd.f32 %v3584, %v3585
      %v3587 = vsel %vm3224, %v3473, 0.0
      %v3588 = vadd.f32 %v3586, %v3587
      %v3589 = vsel %vm3224, %v3474, 0.0
      %v3590 = vadd.f32 %v3588, %v3589
      %v3591 = vsel %vm3224, %v3475, 0.0
      %v3592 = vadd.f32 %v3590, %v3591
      %v3593 = vsel %vm3224, %v3476, 0.0
      %v3594 = vadd.f32 %v3592, %v3593
      %v3595 = vsel %vm3224, %v3477, 0.0
      %v3596 = vadd.f32 %v3594, %v3595
      %v3597 = vsel %vm3224, %v3478, 0.0
      %v3598 = vadd.f32 %v3596, %v3597
      %v3599 = vsel %vm3224, %v3479, 0.0
      %v3600 = vadd.f32 %v3598, %v3599
      %v3601 = vsel %vm3224, %v3480, 0.0
      %v3602 = vadd.f32 %v3600, %v3601
      %v3603 = vsel %vm3224, %v3481, 0.0
      %v3604 = vadd.f32 %v3602, %v3603
      %v3605 = vsel %vm3224, %v3482, 0.0
      %v3606 = vadd.f32 %v3604, %v3605
      %v3607 = vsel %vm3224, %v3483, 0.0
      %v3608 = vadd.f32 %v3606, %v3607
      %v3609 = vsel %vm3224, %v3484, 0.0
      %v3610 = vadd.f32 %v3608, %v3609
      %v3611 = vsel %vm3224, %v3485, 0.0
      %v3612 = vadd.f32 %v3610, %v3611
      %v3613 = vrot.slane %v3612, 4
      %v3614 = vadd.f32 %v3612, %v3613
      %v3615 = vrot.slane %v3614, 2
      %v3616 = vadd.f32 %v3614, %v3615
      %v3617 = vrot.slane %v3616, 1
      %v3618 = vadd.f32 %v3616, %v3617
      %vm3619 = vcmask 1040384
      %v3620 = vsel %vm3619, %v3421, %v3618
      %vm3621 = vcmask 25600
      %3622 = vst.msk [vmem:[%s243] sm:$0x3] %vm3621, %v3620
      %s3623 = smul.u32 16, %s21
      %p3624 = scmp.lt.s32.totalorder %s20, 1
      %s3625 = scalar_select %p3624, %s20, 1
      %p3626 = scmp.lt.s32.totalorder %s3623, 31
      %s3627 = scalar_select %p3626, %s3623, 31
      %s3628 = smul.addr %s3627, 4
      %s3629 = smul.addr %s3625, 128
      %s3630 = sadd.s32 %s3628, %s3629
      %s3631 = smul.addr %s3630, 8
      %s3632 = scalar_lea.vmem %s3, %s3631
      %p3633 = scmp.lt.s32.totalorder %s20, 1
      %s3634 = scalar_select %p3633, %s20, 1
      %p3635 = scmp.lt.s32.totalorder %s21, 1
      %s3636 = scalar_select %p3635, %s21, 1
      %s3637 = smul.addr %s3634, 2
      %s3638 = sadd.s32 %s3636, %s3637
      %s3639 = smul.addr %s3638, 2
      %s3640 = scalar_lea.vmem %s4, %s3639
      // Predicated region
      $region33: #{up_block_forward.6} parent=31 // pred_check
        %p3641 = pneg %p116
      $region34: #{up_block_forward.6} parent=31 // pred_check_branch
        %3643 = sbr.rel (%p3641) target = $region36
      $region35: #{up_block_forward.6} parent=31 // pred_region
        %s3644 = smul.u32 16, %s21
      $region36: #{up_block_forward.6} parent=31 // pred_fallthru
        _
      // Predicated region
      $region37: #{up_block_forward.6} parent=31 // pred_check
        %p3645 = pneg %p144
      $region38: #{up_block_forward.6} parent=31 // pred_check_branch
        %3647 = sbr.rel (%p3645) target = $region40
      $region39: #{up_block_forward.6} parent=31 // pred_region
        _
      $region40: #{up_block_forward.6} parent=31 // pred_fallthru
        _
    $region32: #{up_block_forward.6} parent=5 // pred_fallthru
      _
    %p3648 = scmp.le.s32.totalorder 2, %s11
    // Predicated region
    $region41: #{up_block_forward.6} parent=5 // pred_check
      %p3649 = pneg %p3648
    $region42: #{up_block_forward.6} parent=5 // pred_check_branch
      %3651 = sbr.rel (%p3649) target = $region44
    $region43: #{up_block_forward.6} parent=5 // pred_region
      %s3652 = ssub.s32 %s11, 2
      // Predicated region
      $region45: #{up_block_forward.6} parent=43 // pred_check
        %p3653 = pneg %p122
      $region46: #{up_block_forward.6} parent=43 // pred_check_branch
        %3655 = sbr.rel (%p3653) target = $region48
      $region47: #{up_block_forward.6} parent=43 // pred_region
        %s3656 = smul.u32 16, %s23
        %p3657 = scmp.lt.s32.totalorder %s22, 1
        %s3658 = scalar_select %p3657, %s22, 1
        %p3659 = scmp.lt.s32.totalorder %s3656, 31
        %s3660 = scalar_select %p3659, %s3656, 31
        %s3661 = smul.addr %s3660, 4
        %s3662 = smul.addr %s3658, 128
        %s3663 = sadd.s32 %s3661, %s3662
        %s3664 = smul.addr %s3663, 8
        %s3665 = scalar_lea.vmem %s3, %s3664
      $region48: #{up_block_forward.6} parent=43 // pred_fallthru
        _
      // Predicated region
      $region49: #{up_block_forward.6} parent=43 // pred_check
        %p3666 = pneg %p150
      $region50: #{up_block_forward.6} parent=43 // pred_check_branch
        %3668 = sbr.rel (%p3666) target = $region52
      $region51: #{up_block_forward.6} parent=43 // pred_region
        %p3669 = scmp.lt.s32.totalorder %s22, 1
        %s3670 = scalar_select %p3669, %s22, 1
        %p3671 = scmp.lt.s32.totalorder %s23, 1
        %s3672 = scalar_select %p3671, %s23, 1
        %s3673 = smul.addr %s3670, 2
        %s3674 = sadd.s32 %s3672, %s3673
        %s3675 = smul.addr %s3674, 2
        %s3676 = scalar_lea.vmem %s4, %s3675
      $region52: #{up_block_forward.6} parent=43 // pred_fallthru
        _
    $region44: #{up_block_forward.6} parent=5 // pred_fallthru
      _
  $region6: #{up_block_forward.6} parent=0 // loop_footer
    %s15 = sadd.s32 1, %s11
  $region7: #{up_block_forward.6} parent=0 // loop_footer_branch
    %10 = sbr.rel target = $region3
  $region8: #{up_block_forward.6} parent=0 // loop_exit
    _

// kernel: up_block_forward.7
$region0: #{up_block_forward.7}
  #allocation0 [shape = 'u32[]', space=smem, size = 0x4, offset = 0x4, fixed_abs, tag = 'smem constant byte address 0x4 - core index']
  #allocation1 [shape = 'u32[72,128]{1,0:T(1,128)}', space=vmem, size = 0x9000, scoped, tag = 'internal scratch']
  %s0 = inlined_call_operand.vmem [shape: f32[64,128], index: 0, kind: input, shape index: {}]
  %s1 = inlined_call_operand.vmem [shape: f32[1,128], index: 1, kind: input, shape index: {}]
  %s2 = inlined_call_operand.vmem [shape: f32[1,128], index: 2, kind: input, shape index: {}]
  %s3 = inlined_call_operand.vmem [shape: f32[64,128], index: 3, kind: input, shape index: {}]
  %s4 = inlined_call_operand.vmem [shape: f32[64,128], index: 4, kind: output, shape index: {}]
  %s5 = sld [smem:[#allocation0]]
  $region49: #{up_block_forward.7} parent=0
    _
  %s7 = ssub.s32 1, %s5
  %s8 = scalar_select 0, %s7, %s5
  loop: start=0, step=1, limit=4
  $region2: #{up_block_forward.7} parent=0 // loop_pre_header
    _
  $region3: #{up_block_forward.7} parent=0 // loop_header
    %s10 = sphi 0, %s14
    %p11 = scmp.ge.s32.totalorder %s10, 4
    %s20 = sphi 0, %s22
    %s23 = sphi 0, %s20
    %s24 = sphi 0, %s23
    %s40 = sphi 0, %s24
    %s44 = sphi 0, %s44
    %s46 = sphi 0, %s44
    %s47 = sphi 0, %s46
    %s61 = sphi 0, %s47
    %s65 = sphi 0, %s65
    %s67 = sphi 0, %s65
    %s68 = sphi 0, %s67
    %s82 = sphi 0, %s68
    %s88 = sphi 0, %s90
    %s91 = sphi 0, %s88
    %s92 = sphi 0, %s91
    %s108 = sphi 0, %s92
    %s114 = sphi 0, %s116
    %s117 = sphi 0, %s114
    %s118 = sphi 0, %s117
    %s134 = sphi 0, %s118
  $region4: #{up_block_forward.7} parent=0 // loop_header_branch
    %13 = sbr.rel (%p11) target = $region8
  $region5: #{up_block_forward.7} parent=0 // loop_body
    %s15 = ssub.s32 %s10, 1
    %s16 = ssub.s32 %s10, 2
    %s17 = sadd.s32 %s10, 1
    %s18 = ssub.s32 %s10, %s17
    %p19 = scmp.eq.s32.totalorder %s18, 0
    %s21 = sadd.s32 %s20, 1
    %s22 = scalar_select %p19, %s20, %s21
    %p25 = pneg %p19
    %p26 = scmp.eq.s32.totalorder %s10, 1
    %p27 = por %p25, %p26
    %p28 = scmp.ne.s32.totalorder %s20, %s23
    %p29 = scmp.eq.s32.totalorder %s10, 0
    %p30 = por %p28, %p29
    %p31 = scmp.ne.s32.totalorder %s20, %s23
    %p32 = scmp.eq.s32.totalorder %s15, 1
    %p33 = por %p31, %p32
    %p34 = scmp.ne.s32.totalorder %s23, %s24
    %p35 = scmp.eq.s32.totalorder %s15, 0
    %p36 = por %p34, %p35
    %p37 = scmp.ne.s32.totalorder %s23, %s24
    %p38 = scmp.eq.s32.totalorder %s16, 1
    %p39 = por %p37, %p38
    %p41 = scmp.ne.s32.totalorder %s24, %s40
    %p42 = scmp.eq.s32.totalorder %s16, 0
    %p43 = por %p41, %p42
    %s45 = sadd.s32 %s44, 1
    %p48 = scmp.eq.s32.totalorder %s10, 1
    %p49 = scmp.ne.s32.totalorder %s44, %s46
    %p50 = scmp.eq.s32.totalorder %s10, 0
    %p51 = por %p49, %p50
    %p52 = scmp.ne.s32.totalorder %s44, %s46
    %p53 = scmp.eq.s32.totalorder %s15, 1
    %p54 = por %p52, %p53
    %p55 = scmp.ne.s32.totalorder %s46, %s47
    %p56 = scmp.eq.s32.totalorder %s15, 0
    %p57 = por %p55, %p56
    %p58 = scmp.ne.s32.totalorder %s46, %s47
    %p59 = scmp.eq.s32.totalorder %s16, 1
    %p60 = por %p58, %p59
    %p62 = scmp.ne.s32.totalorder %s47, %s61
    %p63 = scmp.eq.s32.totalorder %s16, 0
    %p64 = por %p62, %p63
    %s66 = sadd.s32 %s65, 1
    %p69 = scmp.eq.s32.totalorder %s10, 1
    %p70 = scmp.ne.s32.totalorder %s65, %s67
    %p71 = scmp.eq.s32.totalorder %s10, 0
    %p72 = por %p70, %p71
    %p73 = scmp.ne.s32.totalorder %s65, %s67
    %p74 = scmp.eq.s32.totalorder %s15, 1
    %p75 = por %p73, %p74
    %p76 = scmp.ne.s32.totalorder %s67, %s68
    %p77 = scmp.eq.s32.totalorder %s15, 0
    %p78 = por %p76, %p77
    %p79 = scmp.ne.s32.totalorder %s67, %s68
    %p80 = scmp.eq.s32.totalorder %s16, 1
    %p81 = por %p79, %p80
    %p83 = scmp.ne.s32.totalorder %s68, %s82
    %p84 = scmp.eq.s32.totalorder %s16, 0
    %p85 = por %p83, %p84
    %s86 = ssub.s32 %s10, %s17
    %p87 = scmp.eq.s32.totalorder %s86, 0
    %s89 = sadd.s32 %s88, 1
    %s90 = scalar_select %p87, %s88, %s89
    %p93 = pneg %p87
    %p94 = scmp.eq.s32.totalorder %s10, 1
    %p95 = por %p93, %p94
    %p96 = scmp.ne.s32.totalorder %s88, %s91
    %p97 = scmp.eq.s32.totalorder %s10, 0
    %p98 = por %p96, %p97
    %p99 = scmp.ne.s32.totalorder %s88, %s91
    %p100 = scmp.eq.s32.totalorder %s15, 1
    %p101 = por %p99, %p100
    %p102 = scmp.ne.s32.totalorder %s91, %s92
    %p103 = scmp.eq.s32.totalorder %s15, 0
    %p104 = por %p102, %p103
    %p105 = scmp.ne.s32.totalorder %s91, %s92
    %p106 = scmp.eq.s32.totalorder %s16, 1
    %p107 = por %p105, %p106
    %p109 = scmp.ne.s32.totalorder %s92, %s108
    %p110 = scmp.eq.s32.totalorder %s16, 0
    %p111 = por %p109, %p110
    %s112 = ssub.s32 %s10, %s17
    %p113 = scmp.eq.s32.totalorder %s112, 0
    %s115 = sadd.s32 %s114, 1
    %s116 = scalar_select %p113, %s114, %s115
    %p119 = pneg %p113
    %p120 = scmp.eq.s32.totalorder %s10, 1
    %p121 = por %p119, %p120
    %p122 = scmp.ne.s32.totalorder %s114, %s117
    %p123 = scmp.eq.s32.totalorder %s10, 0
    %p124 = por %p122, %p123
    %p125 = scmp.ne.s32.totalorder %s114, %s117
    %p126 = scmp.eq.s32.totalorder %s15, 1
    %p127 = por %p125, %p126
    %p128 = scmp.ne.s32.totalorder %s117, %s118
    %p129 = scmp.eq.s32.totalorder %s15, 0
    %p130 = por %p128, %p129
    %p131 = scmp.ne.s32.totalorder %s117, %s118
    %p132 = scmp.eq.s32.totalorder %s16, 1
    %p133 = por %p131, %p132
    %p135 = scmp.ne.s32.totalorder %s118, %s134
    %p136 = scmp.eq.s32.totalorder %s16, 0
    %p137 = por %p135, %p136
    %p138 = scmp.le.s32.totalorder 1, %s10
    %p139 = scmp.lt.s32.totalorder %s10, 3
    %p140 = pnand %p138, %p139
    %p141 = pneg %p140
    // Predicated region
    $region9: #{up_block_forward.7} parent=5 // pred_check
      _
    $region10: #{up_block_forward.7} parent=5 // pred_check_branch
      %143 = sbr.rel (%p140) target = $region12
    $region11: #{up_block_forward.7} parent=5 // pred_region
      %s144 = ssub.s32 %s10, 1
      // Predicated region
      $region13: #{up_block_forward.7} parent=11 // pred_check
        %p145 = pneg %p57
      $region14: #{up_block_forward.7} parent=11 // pred_check_branch
        %147 = sbr.rel (%p145) target = $region16
      $region15: #{up_block_forward.7} parent=11 // pred_region
        _
      $region16: #{up_block_forward.7} parent=11 // pred_fallthru
        _
      // Predicated region
      $region17: #{up_block_forward.7} parent=11 // pred_check
        %p148 = pneg %p78
      $region18: #{up_block_forward.7} parent=11 // pred_check_branch
        %150 = sbr.rel (%p148) target = $region20
      $region19: #{up_block_forward.7} parent=11 // pred_region
        _
      $region20: #{up_block_forward.7} parent=11 // pred_fallthru
        _
    $region12: #{up_block_forward.7} parent=5 // pred_fallthru
      _
    %p151 = scmp.lt.s32.totalorder %s10, 2
    // Predicated region
    $region21: #{up_block_forward.7} parent=5 // pred_check
      %p152 = pneg %p151
    $region22: #{up_block_forward.7} parent=5 // pred_check_branch
      %154 = sbr.rel (%p152) target = $region24
    $region23: #{up_block_forward.7} parent=5 // pred_region
      // Predicated region
      $region25: #{up_block_forward.7} parent=23 // pred_check
        %p155 = pneg %p30
      $region26: #{up_block_forward.7} parent=23 // pred_check_branch
        %157 = sbr.rel (%p155) target = $region28
      $region27: #{up_block_forward.7} parent=23 // pred_region
        %s158 = smul.u32 4, %s10
        %p159 = scmp.lt.s32.totalorder %s158, 7
        %s160 = scalar_select %p159, %s158, 7
        %s161 = smul.addr %s160, 8
        %s162 = scalar_lea.vmem %s0, %s161
        %s163 = smul.u32 4, %s10
      $region28: #{up_block_forward.7} parent=23 // pred_fallthru
        _
      // Predicated region
      $region29: #{up_block_forward.7} parent=23 // pred_check
        %p164 = pneg %p98
      $region30: #{up_block_forward.7} parent=23 // pred_check_branch
        %166 = sbr.rel (%p164) target = $region32
      $region31: #{up_block_forward.7} parent=23 // pred_region
        %s167 = smul.u32 4, %s10
        %p168 = scmp.lt.s32.totalorder %s167, 7
        %s169 = scalar_select %p168, %s167, 7
        %s170 = smul.addr %s169, 8
        %s171 = scalar_lea.vmem %s3, %s170
        %s172 = smul.u32 4, %s10
      $region32: #{up_block_forward.7} parent=23 // pred_fallthru
        _
    $region24: #{up_block_forward.7} parent=5 // pred_fallthru
      _
    %p173 = scmp.le.s32.totalorder 1, %s10
    %p174 = scmp.lt.s32.totalorder %s10, 3
    %p175 = pnand %p173, %p174
    %p176 = pneg %p175
    // Predicated region
    $region33: #{up_block_forward.7} parent=5 // pred_check
      _
    $region34: #{up_block_forward.7} parent=5 // pred_check_branch
      %178 = sbr.rel (%p175) target = $region36
    $region35: #{up_block_forward.7} parent=5 // pred_region
      %s179 = ssub.s32 %s10, 1
      %s180 = smul.u32 4, %s15
      %p181 = scmp.lt.s32.totalorder %s180, 7
      %s182 = scalar_select %p181, %s180, 7
      %s183 = smul.addr %s182, 8
      %s184 = scalar_lea.vmem %s0, %s183
      %p185 = pneg %p36
      %p186 = pneg %p33
      %p187 = pneg %p57
      %p188 = pneg %p54
      %p189 = pneg %p78
      %p190 = pneg %p75
      %s191 = smul.u32 4, %s15
      %p192 = scmp.lt.s32.totalorder %s191, 7
      %s193 = scalar_select %p192, %s191, 7
      %s194 = smul.addr %s193, 8
      %s195 = scalar_lea.vmem %s3, %s194
      %p196 = pneg %p104
      %p197 = pneg %p101
      %p198 = pneg %p130
      %p199 = pneg %p127
      %s200 = smul.u32 4, %s15
      %p201 = scmp.lt.s32.totalorder %s200, 7
      %s202 = scalar_select %p201, %s200, 7
      %s203 = smul.addr %s202, 8
      %s204 = scalar_lea.vmem %s4, %s203
      %s205 = smul.u32 4, %s15
      %p206 = scmp.lt.s32.totalorder %s205, 7
      %s207 = scalar_select %p206, %s205, 7
      %s208 = smul.addr %s207, 8
      %s209 = scalar_lea.vmem %s0, %s208
      %s210 = smul.u32 4, %s15
      %s211 = smul.u32 4, %s15
      %p212 = scmp.lt.s32.totalorder %s211, 7
      %s213 = scalar_select %p212, %s211, 7
      %s214 = smul.addr %s213, 8
      %s215 = scalar_lea.vmem %s3, %s214
      %s216 = smul.u32 4, %s15
      %s217 = smul.u32 4, %s15
      %p218 = scmp.lt.s32.totalorder %s217, 7
      %s219 = scalar_select %p218, %s217, 7
      %s220 = smul.addr %s219, 8
      %s221 = scalar_lea.vmem %s4, %s220
      %s222 = smul.u32 4, %s15
      %v223 = vld [vmem:[%s209] sm:$0xff]
      %v224 = vld [vmem:[%s209 + $0x8] sm:$0xff]
      %v225 = vld [vmem:[%s209 + $0x10] sm:$0xff]
      %v226 = vld [vmem:[%s209 + $0x18] sm:$0xff]
      %v227 = vld [vmem:[%s1] sm:$0x1]
      %v229 = vperm.slane %v227, 0
      %v231 = vmul.f32 %v223, %v229
      %v232 = vmul.f32 %v224, %v229
      %v233 = vmul.f32 %v225, %v229
      %v234 = vmul.f32 %v226, %v229
      %v235 = vld [vmem:[%s2] sm:$0x1]
      %v237 = vperm.slane %v235, 0
      %v239 = vadd.f32 %v231, %v237
      %v240 = vadd.f32 %v232, %v237
      %v241 = vadd.f32 %v233, %v237
      %v242 = vadd.f32 %v234, %v237
      %v243 = vmin.f32 %v239, 0.0
      %v244 = vmin.f32 %v240, 0.0
      %v245 = vmin.f32 %v241, 0.0
      %v246 = vmin.f32 %v242, 0.0
      %v247 = vmul.f32 %v243, 1.442695
      %v248 = vpow.pop %v247
      %v249 = vmul.f32 %v244, 1.442695
      %v250 = vpow.pop %v249
      %v251 = vmul.f32 %v245, 1.442695
      %v252 = vpow.pop %v251
      %v253 = vmul.f32 %v246, 1.442695
      %v254 = vpow.pop %v253
      %v255 = vsub.f32 %v248, 1.0
      %v256 = vsub.f32 %v250, 1.0
      %v257 = vsub.f32 %v252, 1.0
      %v258 = vsub.f32 %v254, 1.0
      %vm259 = vcmp.gt.f32.partialorder %v239, 0.0
      %vm260 = vcmp.gt.f32.partialorder %v240, 0.0
      %vm261 = vcmp.gt.f32.partialorder %v241, 0.0
      %vm262 = vcmp.gt.f32.partialorder %v242, 0.0
      %v263 = vsel %vm259, %v239, %v255
      %v264 = vsel %vm260, %v240, %v256
      %v265 = vsel %vm261, %v241, %v257
      %v266 = vsel %vm262, %v242, %v258
      %v267 = vld [vmem:[%s215] sm:$0xff]
      %v268 = vld [vmem:[%s215 + $0x8] sm:$0xff]
      %v269 = vld [vmem:[%s215 + $0x10] sm:$0xff]
      %v270 = vld [vmem:[%s215 + $0x18] sm:$0xff]
      %v271 = vadd.f32 %v263, %v267
      %v272 = vadd.f32 %v264, %v268
      %v273 = vadd.f32 %v265, %v269
      %v274 = vadd.f32 %v266, %v270
      %275 = vst [vmem:[%s221] sm:$0xff] %v271
      %276 = vst [vmem:[%s221 + $0x8] sm:$0xff] %v272
      %277 = vst [vmem:[%s221 + $0x10] sm:$0xff] %v273
      %278 = vst [vmem:[%s221 + $0x18] sm:$0xff] %v274
      %s279 = smul.u32 4, %s15
      %p280 = scmp.lt.s32.totalorder %s279, 7
      %s281 = scalar_select %p280, %s279, 7
      %s282 = smul.addr %s281, 8
      %s283 = scalar_lea.vmem %s4, %s282
      // Predicated region
      $region37: #{up_block_forward.7} parent=35 // pred_check
        %p284 = pneg %p127
      $region38: #{up_block_forward.7} parent=35 // pred_check_branch
        %286 = sbr.rel (%p284) target = $region40
      $region39: #{up_block_forward.7} parent=35 // pred_region
        %s287 = smul.u32 4, %s15
      $region40: #{up_block_forward.7} parent=35 // pred_fallthru
        _
    $region36: #{up_block_forward.7} parent=5 // pred_fallthru
      _
    %p288 = scmp.le.s32.totalorder 2, %s10
    // Predicated region
    $region41: #{up_block_forward.7} parent=5 // pred_check
      %p289 = pneg %p288
    $region42: #{up_block_forward.7} parent=5 // pred_check_branch
      %291 = sbr.rel (%p289) target = $region44
    $region43: #{up_block_forward.7} parent=5 // pred_region
      %s292 = ssub.s32 %s10, 2
      // Predicated region
      $region45: #{up_block_forward.7} parent=43 // pred_check
        %p293 = pneg %p133
      $region46: #{up_block_forward.7} parent=43 // pred_check_branch
        %295 = sbr.rel (%p293) target = $region48
      $region47: #{up_block_forward.7} parent=43 // pred_region
        %s296 = smul.u32 4, %s16
        %p297 = scmp.lt.s32.totalorder %s296, 7
        %s298 = scalar_select %p297, %s296, 7
        %s299 = smul.addr %s298, 8
        %s300 = scalar_lea.vmem %s4, %s299
      $region48: #{up_block_forward.7} parent=43 // pred_fallthru
        _
    $region44: #{up_block_forward.7} parent=5 // pred_fallthru
      _
  $region6: #{up_block_forward.7} parent=0 // loop_footer
    %s14 = sadd.s32 1, %s10
  $region7: #{up_block_forward.7} parent=0 // loop_footer_branch
    %9 = sbr.rel target = $region3
  $region8: #{up_block_forward.7} parent=0 // loop_exit
    _

</llo_original>
